<compile_context>
chip_gen: v7x
topology: tpu7x:2x2x1
jax: 0.10.0
libtpu: 0.0.40
codegen_flags: <defaults>
</compile_context>

<pallas_src>
import functools

import numpy as np

import jax
import jax.numpy as jnp
from jax import lax
from jax.experimental import pallas as pl
from jax.experimental.pallas import tpu as pltpu

# ----------------------- configuration (small shapes) ------------------------
N_QUBITS = 3
N_WORDS = 8                 # context length (power of two)
DEGREE = 3                  # polynomial degree
N_ANSATZ_LAYERS = 1
VOCAB = 32
EMB_DIM = 16
BATCH = 2

DIM = 2 ** N_QUBITS                         # 8
TWO_D = 2 * DIM                             # 16 (real embedding width)
N_ROTS = 4 * N_QUBITS * N_ANSATZ_LAYERS     # 12 gates per word circuit
N_GATES = N_ROTS
N_MEAS = 3 * N_QUBITS                       # 9
LCU_W = N_WORDS * TWO_D                     # 128 block-diagonal width
MEAS_PAD = ((N_MEAS * TWO_D + 127) // 128) * 128   # 256 padded measurement lanes


# ----------------------------- circuit description ---------------------------
def sim14_gate_list(n_wires, layers=1):
    gates = []
    for _ in range(layers):
        for i in range(n_wires):
            gates.append(("ry", (i,)))
        for i in range(n_wires - 1, -1, -1):
            gates.append(("crx", (i, (i + 1) % n_wires)))
        for i in range(n_wires):
            gates.append(("ry", (i,)))
        for i in [n_wires - 1] + list(range(n_wires - 1)):
            gates.append(("crx", (i, (i - 1) % n_wires)))
    return gates


# -------------------- compile-time constants (pure numpy) --------------------
def _embed_1q_np(m2, wire, n):
    left = np.eye(2 ** wire, dtype=np.complex128)
    right = np.eye(2 ** (n - 1 - wire), dtype=np.complex128)
    return np.kron(left, np.kron(m2.astype(np.complex128), right))


def _gate_affine_basis_np(gate_list, n):
    """Each gate operator is affine in (cos(t/2), sin(t/2)): G = A0 + c*A1 + s*A2."""
    d = 2 ** n
    p0 = np.array([[1, 0], [0, 0]], np.complex128)
    p1 = np.array([[0, 0], [0, 1]], np.complex128)
    xm = np.array([[0, 1], [1, 0]], np.complex128)
    miy = np.array([[0, -1], [1, 0]], np.complex128)        # RY = c*I + s*(-iY)
    a0, a1, a2 = [], [], []
    for kind, wires in gate_list:
        if kind == "ry":
            a0.append(np.zeros((d, d), np.complex128))
            a1.append(np.eye(d, dtype=np.complex128))
            a2.append(_embed_1q_np(miy, wires[0], n))
        else:                                               # crx(control, target)
            ctrl, tgt = wires
            p1c = _embed_1q_np(p1, ctrl, n)
            a0.append(_embed_1q_np(p0, ctrl, n))
            a1.append(p1c)
            a2.append(-1j * (p1c @ _embed_1q_np(xm, tgt, n)))   # -i * P1_c X_t
    return np.stack(a0), np.stack(a1), np.stack(a2)


def _emb_real_np(mats):
    """Complex (..., D, D) -> real (..., 2D, 2D) so [Re(v),Im(v)] @ emb(A) == emb(v@A)."""
    re, im = mats.real, mats.imag
    top = np.concatenate([re, im], axis=-1)
    bot = np.concatenate([-im, re], axis=-1)
    return np.concatenate([top, bot], axis=-2)


def make_constants():
    gate_list = sim14_gate_list(N_QUBITS, N_ANSATZ_LAYERS)
    a0, a1, a2 = _gate_affine_basis_np(gate_list, N_QUBITS)   # (G, D, D) complex

    # Word-circuit basis: transposed (row-vector action), real-embedded, and
    # replicated block-diagonally over the W independent words.
    def block_diag_basis(a):
        bt = _emb_real_np(np.swapaxes(a, -1, -2))             # (G, 2D, 2D) real
        return np.stack([np.kron(np.eye(N_WORDS), bt[g])
                         for g in range(len(gate_list))]).astype(np.float32)

    bd0, bd1, bd2 = [block_diag_basis(a) for a in (a0, a1, a2)]       # (G,128,128)
    # Stacked RHS so one (rows,384)@(384,128) matmul per gate does
    # acc@bd0 + (acc*c)@bd1 + (acc*s)@bd2 with a batch-invariant constant RHS.
    bdstack = np.concatenate([bd0, bd1, bd2], axis=1)                  # (G,384,128)

    rsum = np.tile(np.eye(TWO_D), (N_WORDS, 1)).astype(np.float32)     # (128, 2D)

    stile = np.tile(np.eye(TWO_D), (1, N_MEAS)).astype(np.float32)     # (2D, 144)
    rsum9 = np.kron(np.eye(N_MEAS), np.ones((TWO_D, 1))).astype(np.float32)  # (144, 9)
    stile_pad = np.zeros((TWO_D, MEAS_PAD), np.float32)
    stile_pad[:, :N_MEAS * TWO_D] = stile
    rsum9_pad = np.zeros((MEAS_PAD, N_MEAS), np.float32)
    rsum9_pad[:N_MEAS * TWO_D, :] = rsum9

    xm = np.array([[0, 1], [1, 0]], np.complex128)
    ym = np.array([[0, -1j], [1j, 0]], np.complex128)
    zm = np.array([[1, 0], [0, -1]], np.complex128)
    paulis = np.stack([_embed_1q_np(p, q, N_QUBITS)
                       for p in (xm, ym, zm) for q in range(N_QUBITS)])  # (9, D, D)

    return {
        "bdstack": jnp.asarray(bdstack),
        "rsum": jnp.asarray(rsum),
        "stile": jnp.asarray(stile_pad),
        "rsum9": jnp.asarray(rsum9_pad),
        "a0c": jnp.asarray(a0.astype(np.complex64)),
        "a1c": jnp.asarray(a1.astype(np.complex64)),
        "a2c": jnp.asarray(a2.astype(np.complex64)),
        "pauli": jnp.asarray(paulis.astype(np.complex64)),
    }


# ------------------------------ the fused kernel ------------------------------
def _quixer_kernel(poly_ref,                        # SMEM (degree+1,), pre-scaled by 1/L1
                   embT_ref,                        # (1, E, bp*W)  transposed embeddings
                   e2rT_w_ref, e2rT_b_ref,          # (G, E), (G, 1)
                   expandB_ref,                     # (bp*W, bp*128)
                   cemb_rows_ref,                   # (rows, 128)  coeff block, tiled per batch
                   bdstack_ref,                     # (G, 384, 128) stacked gate bases
                   rsum_ref,                        # (128, 2D)
                   pcat_ref, stile_ref, rsum9_ref,  # (2D, 256), (2D, 256), (256, 9)
                   ff1_w_ref, ff1_b_ref,            # (9, E), (1, E)
                   ff2_w_ref, ff2_b_ref,            # (E, 128), (1, 128)  (zero-padded)
                   out_ref,                         # (bp, 128) merged logits+norm
                   *, n_gates, degree, bp, two_d, vocab):
    f32 = jnp.float32
    dotf = functools.partial(jnp.dot, preferred_element_type=f32)

    # ---- emb2rot fused in: angles (already transposed) -> lane-dense cos/sin ----
    ang = dotf(e2rT_w_ref[...], embT_ref[0]) + e2rT_b_ref[...]         # (G, bp*W)
    half = 0.5 * ang
    cos_lane = dotf(jnp.cos(half), expandB_ref[...])                   # (G, bp*128)
    sin_lane = dotf(jnp.sin(half), expandB_ref[...])                   # (G, bp*128)

    # ---- LCU build: stacked-batch accumulator, scaling on the LHS, const RHS ----
    acc = cemb_rows_ref[...]                                           # (rows, 128)
    lcu_w = acc.shape[1]
    for g in range(n_gates):                                           # unrolled, G = 12
        cs = jnp.concatenate(
            [jnp.broadcast_to(cos_lane[g:g + 1, b * lcu_w:(b + 1) * lcu_w],
                              (two_d, lcu_w)) for b in range(bp)], axis=0)
        sn = jnp.concatenate(
            [jnp.broadcast_to(sin_lane[g:g + 1, b * lcu_w:(b + 1) * lcu_w],
                              (two_d, lcu_w)) for b in range(bp)], axis=0)
        acc_ext = jnp.concatenate([acc, acc * cs, acc * sn], axis=1)   # (rows, 384)
        acc = dotf(acc_ext, bdstack_ref[g])                            # (rows, 128)

    m_all = dotf(acc, rsum_ref[...])                                   # (rows, 2D)

    # ---- per-batch polynomial of the LCU applied to |0..0> + postselection ----
    lane2d = lax.broadcasted_iota(jnp.int32, (1, two_d), 1)
    e0 = (lane2d == 0).astype(f32)                                     # (1, 2D)
    psi_list, nrm_list = [], []
    for b in range(bp):                                                # unrolled, bp small
        m_b = m_all[b * two_d:(b + 1) * two_d, :]                      # (2D, 2D)
        acc_s = poly_ref[0] * e0 + poly_ref[1] * m_b[0:1, :]
        m_pow = m_b
        for k in range(2, degree + 1):
            m_pow = dotf(m_pow, m_b)                                   # M^k
            acc_s = acc_s + poly_ref[k] * m_pow[0:1, :]                # e0 @ M^k
        nrm = jnp.sqrt(jnp.sum(acc_s * acc_s, keepdims=True))          # (1, 1)
        psi_list.append(acc_s * (1.0 / jnp.maximum(nrm, 1e-12)))
        nrm_list.append(nrm)
    psi = jnp.concatenate(psi_list, axis=0)                            # (bp, 2D)
    nrm_col = jnp.concatenate(nrm_list, axis=0)                        # (bp, 1)

    # ---- <psi| V^dag P_m V |psi> for all 9 Paulis, all batches at once ----
    t = dotf(psi, pcat_ref[...])                                       # (bp, 256)
    pt = dotf(psi, stile_ref[...])                                     # (bp, 256)
    exps = dotf(t * pt, rsum9_ref[...])                                # (bp, 9)

    # ---- output feed-forward epilogue, single lane-dense merged store ----
    h = jnp.maximum(dotf(exps, ff1_w_ref[...]) + ff1_b_ref[...], 0.0)
    op = dotf(h, ff2_w_ref[...]) + ff2_b_ref[...]                      # (bp, 128)
    out_lanes = op.shape[1]
    lane_out = lax.broadcasted_iota(jnp.int32, (1, out_lanes), 1)
    op = op + nrm_col * (lane_out == vocab).astype(f32)                # norm in lane VOCAB
    out_ref[...] = op


def quixer_quantum(poly_scaled, emb, e2r_w, e2r_b, cemb, bdstack, rsum,
                   pcat, stile, rsum9, ff1_w, ff1_b, ff2_w, ff2_b):
    bsz, n_words, emb_dim = emb.shape
    n_gates = bdstack.shape[0]
    two_d = cemb.shape[0]
    vocab = ff2_w.shape[1]
    degree = poly_scaled.shape[0] - 1

    # Rows per grid step: fill MXU rows.  For bsz > 8 the grid grows past one
    # step, which also shards across both TensorCores on v7x.
    bp = min(bsz, 8)
    steps = (bsz + bp - 1) // bp
    b_pad = steps * bp
    if b_pad != bsz:
        emb = jnp.concatenate(
            [emb, jnp.zeros((b_pad - bsz, n_words, emb_dim), emb.dtype)], axis=0)

    rows = bp * two_d
    out_lanes = max(128, ((vocab + 1 + 127) // 128) * 128)

    # Glue-side layout plumbing (all tiny / batch-invariant except embT).
    embT = jnp.transpose(emb, (2, 0, 1))                               # (E, B, W)
    embT = embT.reshape(emb_dim, steps, bp * n_words)
    embT = jnp.transpose(embT, (1, 0, 2)).astype(jnp.float32)          # (steps, E, bp*W)
    e2r_wT = jnp.transpose(e2r_w).astype(jnp.float32)                  # (G, E)
    e2r_bT = e2r_b.reshape(-1, 1).astype(jnp.float32)                  # (G, 1)
    cemb_rows = jnp.tile(cemb, (bp, 1))                                # (rows, 128)
    expand_t = np.kron(np.eye(n_words), np.ones((1, two_d))).astype(np.float32)  # (W,128)
    expandB = jnp.asarray(np.kron(np.eye(bp, dtype=np.float32), expand_t))  # (bp*W, bp*128)
    ff1_b2 = ff1_b.reshape(1, -1).astype(jnp.float32)
    ff2_w_pad = jnp.zeros((ff2_w.shape[0], out_lanes), jnp.float32).at[:, :vocab].set(ff2_w)
    ff2_b_pad = jnp.zeros((1, out_lanes), jnp.float32).at[0, :vocab].set(ff2_b.reshape(-1))

    def const_spec(a):
        zeros = (0,) * a.ndim
        return pl.BlockSpec(a.shape, lambda i, _z=zeros: _z)

    kernel = functools.partial(_quixer_kernel, n_gates=n_gates, degree=degree,
                               bp=bp, two_d=two_d, vocab=vocab)
    out = pl.pallas_call(
        kernel,
        grid=(steps,),
        in_specs=[
            pl.BlockSpec(memory_space=pltpu.MemorySpace.SMEM),              # poly scalars
            pl.BlockSpec((1, emb_dim, bp * n_words), lambda i: (i, 0, 0)),  # embT slab
            const_spec(e2r_wT), const_spec(e2r_bT), const_spec(expandB),
            const_spec(cemb_rows), const_spec(bdstack), const_spec(rsum),
            const_spec(pcat), const_spec(stile), const_spec(rsum9),
            const_spec(ff1_w), const_spec(ff1_b2),
            const_spec(ff2_w_pad), const_spec(ff2_b_pad),
        ],
        out_specs=pl.BlockSpec((bp, out_lanes), lambda i: (i, 0)),
        out_shape=jax.ShapeDtypeStruct((b_pad, out_lanes), jnp.float32),
        compiler_params=pltpu.CompilerParams(dimension_semantics=("parallel",)),
    )(poly_scaled, embT, e2r_wT, e2r_bT, expandB, cemb_rows, bdstack, rsum,
      pcat, stile, rsum9, ff1_w, ff1_b2, ff2_w_pad, ff2_b_pad)

    return out[:bsz, :vocab], out[:bsz, vocab]


# ------------------------------- glue / forward --------------------------------
def _qff_unitary(qff_params, consts):
    c = jnp.cos(0.5 * qff_params)
    s = jnp.sin(0.5 * qff_params)
    gates = (consts["a0c"] + c[:, None, None] * consts["a1c"]
             + s[:, None, None] * consts["a2c"])                     # (G, D, D) complex64
    v = jnp.eye(DIM, dtype=jnp.complex64)
    for g in range(N_GATES):                                         # application order
        v = gates[g] @ v
    return v


def quixer_forward(params, consts, x):
    bsz, n_words = x.shape

    # embedding lookup; dropout is identity (eval mode)
    # TODO(synk): dropout on embeddings is skipped (inference semantics).
    emb = jnp.take(params["emb_w"], x, axis=0)                       # (B, W, E)

    # L1-normalized complex mixing coefficients (identical for every batch row),
    # packed as the (2D, W*2D) real-embedded coefficient block row C.
    mr, mi = params["mix_re"], params["mix_im"]
    l1 = jnp.maximum(jnp.sum(jnp.sqrt(mr * mr + mi * mi)), 1e-12)
    cr, ci = mr / l1, mi / l1
    two = jnp.stack([jnp.stack([cr, ci], -1), jnp.stack([-ci, cr], -1)], -2)   # (W, 2, 2)
    blocks = jnp.einsum("wab,ij->waibj", two, jnp.eye(DIM, dtype=jnp.float32))
    cemb = jnp.moveaxis(blocks.reshape(n_words, TWO_D, TWO_D), 0, 1)
    cemb = cemb.reshape(TWO_D, n_words * TWO_D).astype(jnp.float32)            # (2D, 128)

    # polynomial coefficients pre-scaled by 1 / ||poly||_1
    poly = params["poly"]
    poly_scaled = (poly / jnp.sum(jnp.abs(poly))).astype(jnp.float32)

    # qff circuit hoisted out of the kernel: pre-rotate the Paulis once (P' = V^dag P V),
    # stored transposed + real-embedded + lane-concatenated (padded to 256 lanes).
    v = _qff_unitary(params["qff_params"][:N_GATES], consts)
    pp = jnp.einsum("ij,mjk,kl->mil", v.conj().T, consts["pauli"], v)
    ppt = jnp.swapaxes(pp, -1, -2)
    top = jnp.concatenate([jnp.real(ppt), jnp.imag(ppt)], axis=-1)
    bot = jnp.concatenate([-jnp.imag(ppt), jnp.real(ppt)], axis=-1)
    pemb = jnp.concatenate([top, bot], axis=-2).astype(jnp.float32)            # (9, 2D, 2D)
    pcat = jnp.moveaxis(pemb, 0, 1).reshape(TWO_D, N_MEAS * TWO_D)             # (2D, 144)
    pcat = jnp.concatenate(
        [pcat, jnp.zeros((TWO_D, MEAS_PAD - N_MEAS * TWO_D), jnp.float32)], axis=1)

    op, final_probs = quixer_quantum(
        poly_scaled, emb, params["e2r_w"], params["e2r_b"], cemb,
        consts["bdstack"], consts["rsum"], pcat, consts["stile"], consts["rsum9"],
        params["ff1_w"], params["ff1_b"], params["ff2_w"], params["ff2_b"])

    # TODO(synk): the torch module appends mean/std of final_probs to a text file;
    # that filesystem side effect is intentionally skipped.
    return op, jnp.mean(final_probs)


# ------------------- independent pure-JAX reference (complex) -------------------
def quixer_reference(params, consts, x):
    bsz = x.shape[0]
    emb = jnp.take(params["emb_w"], x, axis=0)
    ang = jnp.einsum("bwe,er->bwr", emb, params["e2r_w"]) + params["e2r_b"]
    c, s = jnp.cos(0.5 * ang), jnp.sin(0.5 * ang)
    gates = (consts["a0c"][None, None] + c[..., None, None] * consts["a1c"][None, None]
             + s[..., None, None] * consts["a2c"][None, None])       # (B, W, G, D, D)

    def chain(gw):
        u = jnp.eye(DIM, dtype=jnp.complex64)
        for g in range(N_GATES):
            u = gw[g] @ u
        return u

    u = jax.vmap(jax.vmap(chain))(gates)                             # (B, W, D, D)

    mix = lax.complex(params["mix_re"], params["mix_im"])
    mix = mix / jnp.maximum(jnp.sum(jnp.abs(mix)), 1e-12)
    m = jnp.einsum("w,bwij->bij", mix, u)                            # (B, D, D)

    poly = params["poly"]
    e0 = jnp.zeros((bsz, DIM), jnp.complex64).at[:, 0].set(1.0)
    acc = poly[0] * e0
    wk = e0
    for k in range(1, DEGREE + 1):
        wk = jnp.einsum("bij,bj->bi", m, wk)
        acc = acc + poly[k] * wk
    acc = acc / jnp.sum(jnp.abs(poly))

    probs = jnp.sqrt(jnp.sum(jnp.abs(acc) ** 2, axis=-1))
    psi = acc / jnp.maximum(probs, 1e-12)[:, None]

    v = _qff_unitary(params["qff_params"][:N_GATES], consts)
    phi = jnp.einsum("ij,bj->bi", v, psi)
    exps = jnp.real(jnp.einsum("bi,mij,bj->bm", jnp.conj(phi), consts["pauli"], phi))
    exps = exps.astype(jnp.float32)

    h = jnp.maximum(exps @ params["ff1_w"] + params["ff1_b"], 0.0)
    op = h @ params["ff2_w"] + params["ff2_b"]
    return op, jnp.mean(probs)


# ------------------------------------ main -------------------------------------
if __name__ == "__main__":
    key = jax.random.PRNGKey(0)
    ks = jax.random.split(key, 12)

    a = (6.0 / (VOCAB + EMB_DIM)) ** 0.5                       # xavier_uniform
    lim_e = 1.0 / (EMB_DIM ** 0.5)
    lim_m = 1.0 / (N_MEAS ** 0.5)
    params = {
        "emb_w":      jax.random.uniform(ks[0], (VOCAB, EMB_DIM), jnp.float32, -a, a),
        "e2r_w":      jax.random.uniform(ks[1], (EMB_DIM, N_ROTS), jnp.float32, -lim_e, lim_e),
        "e2r_b":      jax.random.uniform(ks[2], (N_ROTS,), jnp.float32, -lim_e, lim_e),
        "poly":       jax.random.uniform(ks[3], (DEGREE + 1,), jnp.float32),
        "mix_re":     jax.random.uniform(ks[4], (N_WORDS,), jnp.float32),
        "mix_im":     jax.random.uniform(ks[5], (N_WORDS,), jnp.float32),
        "qff_params": jax.random.uniform(ks[6], (N_ROTS,), jnp.float32),
        "ff1_w":      jax.random.uniform(ks[7], (N_MEAS, EMB_DIM), jnp.float32, -lim_m, lim_m),
        "ff1_b":      jax.random.uniform(ks[8], (EMB_DIM,), jnp.float32, -lim_m, lim_m),
        "ff2_w":      jax.random.uniform(ks[9], (EMB_DIM, VOCAB), jnp.float32, -lim_e, lim_e),
        "ff2_b":      jax.random.uniform(ks[10], (VOCAB,), jnp.float32, -lim_e, lim_e),
    }
    x = jax.random.randint(ks[11], (BATCH, N_WORDS), 0, VOCAB, jnp.int32)
    consts = make_constants()

    op, mean_prob = jax.jit(quixer_forward)(params, consts, x)
    jax.block_until_ready((op, mean_prob))
    assert op.shape == (BATCH, VOCAB) and op.dtype == jnp.float32
    assert mean_prob.shape == ()

    # sanity check against an independent pure-JAX complex reference
    # (tolerance tightened vs. previous version per review: f32 vs complex64
    #  should agree to ~1e-4; 5e-3 leaves margin for transcendental differences).
    op_ref, mp_ref = jax.jit(quixer_reference)(params, consts, x)
    jax.block_until_ready((op_ref, mp_ref))
    err_op = float(jnp.max(jnp.abs(op - op_ref)))
    err_mp = float(jnp.abs(mean_prob - mp_ref))
    assert err_op < 5e-3 and err_mp < 5e-3, (err_op, err_mp)

    print("KERNEL_OK")
</pallas_src>

<mosaic_0001>
module attributes {stable_mosaic.version = 11 : i64} {
  func.func @_quixer_kernel(%arg0: i32, %arg1: memref<4xf32, #tpu.memory_space<smem>>, %arg2: memref<1x16x16xf32, #tpu.memory_space<vmem>>, %arg3: memref<12x16xf32, #tpu.memory_space<vmem>>, %arg4: memref<12x1xf32, #tpu.memory_space<vmem>>, %arg5: memref<16x256xf32, #tpu.memory_space<vmem>>, %arg6: memref<32x128xf32, #tpu.memory_space<vmem>>, %arg7: memref<12x384x128xf32, #tpu.memory_space<vmem>>, %arg8: memref<128x16xf32, #tpu.memory_space<vmem>>, %arg9: memref<16x256xf32, #tpu.memory_space<vmem>>, %arg10: memref<16x256xf32, #tpu.memory_space<vmem>>, %arg11: memref<256x9xf32, #tpu.memory_space<vmem>>, %arg12: memref<9x16xf32, #tpu.memory_space<vmem>>, %arg13: memref<1x16xf32, #tpu.memory_space<vmem>>, %arg14: memref<16x128xf32, #tpu.memory_space<vmem>>, %arg15: memref<1x128xf32, #tpu.memory_space<vmem>>, %arg16: memref<2x128xf32, #tpu.memory_space<vmem>>) attributes {dimension_semantics = [#tpu.dimension_semantics<parallel>], iteration_bounds = array<i64: 1>, scalar_prefetch = 0 : i64, scratch_operands = 0 : i64, tpu.core_type = #tpu.core_type<tc>, window_params = [{transform_indices = @transform_0, window_bounds = array<i64: 4>}, {transform_indices = @transform_1, window_bounds = array<i64: 1, 16, 16>}, {pipeline_mode = #tpu.pipeline_mode<synchronous>, transform_indices = @transform_2, window_bounds = array<i64: 12, 16>}, {pipeline_mode = #tpu.pipeline_mode<synchronous>, transform_indices = @transform_3, window_bounds = array<i64: 12, 1>}, {pipeline_mode = #tpu.pipeline_mode<synchronous>, transform_indices = @transform_4, window_bounds = array<i64: 16, 256>}, {pipeline_mode = #tpu.pipeline_mode<synchronous>, transform_indices = @transform_5, window_bounds = array<i64: 32, 128>}, {pipeline_mode = #tpu.pipeline_mode<synchronous>, transform_indices = @transform_6, window_bounds = array<i64: 12, 384, 128>}, {pipeline_mode = #tpu.pipeline_mode<synchronous>, transform_indices = @transform_7, window_bounds = array<i64: 128, 16>}, {pipeline_mode = #tpu.pipeline_mode<synchronous>, transform_indices = @transform_8, window_bounds = array<i64: 16, 256>}, {pipeline_mode = #tpu.pipeline_mode<synchronous>, transform_indices = @transform_9, window_bounds = array<i64: 16, 256>}, {pipeline_mode = #tpu.pipeline_mode<synchronous>, transform_indices = @transform_10, window_bounds = array<i64: 256, 9>}, {pipeline_mode = #tpu.pipeline_mode<synchronous>, transform_indices = @transform_11, window_bounds = array<i64: 9, 16>}, {pipeline_mode = #tpu.pipeline_mode<synchronous>, transform_indices = @transform_12, window_bounds = array<i64: 1, 16>}, {pipeline_mode = #tpu.pipeline_mode<synchronous>, transform_indices = @transform_13, window_bounds = array<i64: 16, 128>}, {pipeline_mode = #tpu.pipeline_mode<synchronous>, transform_indices = @transform_14, window_bounds = array<i64: 1, 128>}, {transform_indices = @transform_15, window_bounds = array<i64: 2, 128>}]} {
    %c0 = arith.constant 0 : index
    %c0_0 = arith.constant 0 : index
    %0 = vector.load %arg3[%c0, %c0_0] : memref<12x16xf32, #tpu.memory_space<vmem>>, vector<12x16xf32>
    %c0_1 = arith.constant 0 : index
    %c0_2 = arith.constant 0 : index
    %c0_3 = arith.constant 0 : index
    %1 = vector.load %arg2[%c0_1, %c0_2, %c0_3] : memref<1x16x16xf32, #tpu.memory_space<vmem>>, vector<1x16x16xf32>
    %2 = vector.shape_cast %1 : vector<1x16x16xf32> to vector<16x16xf32>
    %cst = arith.constant dense<0.000000e+00> : vector<12x16xf32>
    %3 = tpu.matmul %0, %2, %cst {dimension_numbers = #tpu.dot_dimension_numbers<[1], [0], [0], [1], [0, 0, 1, 1], [], []>} : vector<12x16xf32>, vector<16x16xf32>, vector<12x16xf32> -> vector<12x16xf32>
    %c0_4 = arith.constant 0 : index
    %c0_5 = arith.constant 0 : index
    %4 = vector.load %arg4[%c0_4, %c0_5] : memref<12x1xf32, #tpu.memory_space<vmem>>, vector<12x1xf32>
    %5 = vector.broadcast %4 : vector<12x1xf32> to vector<12x16xf32>
    %6 = arith.addf %3, %5 : vector<12x16xf32>
    %cst_6 = arith.constant 5.000000e-01 : f32
    %7 = vector.broadcast %cst_6 : f32 to vector<12x16xf32>
    %8 = arith.mulf %7, %6 : vector<12x16xf32>
    %9 = math.cos %8 : vector<12x16xf32>
    %c0_7 = arith.constant 0 : index
    %c0_8 = arith.constant 0 : index
    %10 = vector.load %arg5[%c0_7, %c0_8] : memref<16x256xf32, #tpu.memory_space<vmem>>, vector<16x256xf32>
    %cst_9 = arith.constant dense<0.000000e+00> : vector<12x256xf32>
    %11 = tpu.matmul %9, %10, %cst_9 {dimension_numbers = #tpu.dot_dimension_numbers<[1], [0], [0], [1], [0, 0, 1, 1], [], []>} : vector<12x16xf32>, vector<16x256xf32>, vector<12x256xf32> -> vector<12x256xf32>
    %12 = math.sin %8 : vector<12x16xf32>
    %c0_10 = arith.constant 0 : index
    %c0_11 = arith.constant 0 : index
    %13 = vector.load %arg5[%c0_10, %c0_11] : memref<16x256xf32, #tpu.memory_space<vmem>>, vector<16x256xf32>
    %cst_12 = arith.constant dense<0.000000e+00> : vector<12x256xf32>
    %14 = tpu.matmul %12, %13, %cst_12 {dimension_numbers = #tpu.dot_dimension_numbers<[1], [0], [0], [1], [0, 0, 1, 1], [], []>} : vector<12x16xf32>, vector<16x256xf32>, vector<12x256xf32> -> vector<12x256xf32>
    %c0_13 = arith.constant 0 : index
    %c0_14 = arith.constant 0 : index
    %15 = vector.load %arg6[%c0_13, %c0_14] : memref<32x128xf32, #tpu.memory_space<vmem>>, vector<32x128xf32>
    %16 = vector.extract_strided_slice %11 {offsets = [0, 0], sizes = [1, 128], strides = [1, 1]} : vector<12x256xf32> to vector<1x128xf32>
    %17 = vector.shape_cast %16 : vector<1x128xf32> to vector<1x128xf32>
    %18 = vector.broadcast %17 : vector<1x128xf32> to vector<16x128xf32>
    %19 = vector.extract_strided_slice %11 {offsets = [0, 128], sizes = [1, 128], strides = [1, 1]} : vector<12x256xf32> to vector<1x128xf32>
    %20 = vector.shape_cast %19 : vector<1x128xf32> to vector<1x128xf32>
    %21 = vector.broadcast %20 : vector<1x128xf32> to vector<16x128xf32>
    %22 = tpu.concatenate %18, %21 in 0 : vector<16x128xf32>, vector<16x128xf32> -> vector<32x128xf32>
    %23 = vector.extract_strided_slice %14 {offsets = [0, 0], sizes = [1, 128], strides = [1, 1]} : vector<12x256xf32> to vector<1x128xf32>
    %24 = vector.shape_cast %23 : vector<1x128xf32> to vector<1x128xf32>
    %25 = vector.broadcast %24 : vector<1x128xf32> to vector<16x128xf32>
    %26 = vector.extract_strided_slice %14 {offsets = [0, 128], sizes = [1, 128], strides = [1, 1]} : vector<12x256xf32> to vector<1x128xf32>
    %27 = vector.shape_cast %26 : vector<1x128xf32> to vector<1x128xf32>
    %28 = vector.broadcast %27 : vector<1x128xf32> to vector<16x128xf32>
    %29 = tpu.concatenate %25, %28 in 0 : vector<16x128xf32>, vector<16x128xf32> -> vector<32x128xf32>
    %30 = arith.mulf %15, %22 : vector<32x128xf32>
    %31 = arith.mulf %15, %29 : vector<32x128xf32>
    %32 = tpu.concatenate %15, %30, %31 in 1 : vector<32x128xf32>, vector<32x128xf32>, vector<32x128xf32> -> vector<32x384xf32>
    %c0_15 = arith.constant 0 : index
    %c0_16 = arith.constant 0 : index
    %c0_17 = arith.constant 0 : index
    %33 = vector.load %arg7[%c0_15, %c0_16, %c0_17] : memref<12x384x128xf32, #tpu.memory_space<vmem>>, vector<1x384x128xf32>
    %34 = vector.shape_cast %33 : vector<1x384x128xf32> to vector<384x128xf32>
    %cst_18 = arith.constant dense<0.000000e+00> : vector<32x128xf32>
    %35 = tpu.matmul %32, %34, %cst_18 {dimension_numbers = #tpu.dot_dimension_numbers<[1], [0], [0], [1], [0, 0, 1, 1], [], []>} : vector<32x384xf32>, vector<384x128xf32>, vector<32x128xf32> -> vector<32x128xf32>
    %36 = vector.extract_strided_slice %11 {offsets = [1, 0], sizes = [1, 128], strides = [1, 1]} : vector<12x256xf32> to vector<1x128xf32>
    %37 = vector.shape_cast %36 : vector<1x128xf32> to vector<1x128xf32>
    %38 = vector.broadcast %37 : vector<1x128xf32> to vector<16x128xf32>
    %39 = vector.extract_strided_slice %11 {offsets = [1, 128], sizes = [1, 128], strides = [1, 1]} : vector<12x256xf32> to vector<1x128xf32>
    %40 = vector.shape_cast %39 : vector<1x128xf32> to vector<1x128xf32>
    %41 = vector.broadcast %40 : vector<1x128xf32> to vector<16x128xf32>
    %42 = tpu.concatenate %38, %41 in 0 : vector<16x128xf32>, vector<16x128xf32> -> vector<32x128xf32>
    %43 = vector.extract_strided_slice %14 {offsets = [1, 0], sizes = [1, 128], strides = [1, 1]} : vector<12x256xf32> to vector<1x128xf32>
    %44 = vector.shape_cast %43 : vector<1x128xf32> to vector<1x128xf32>
    %45 = vector.broadcast %44 : vector<1x128xf32> to vector<16x128xf32>
    %46 = vector.extract_strided_slice %14 {offsets = [1, 128], sizes = [1, 128], strides = [1, 1]} : vector<12x256xf32> to vector<1x128xf32>
    %47 = vector.shape_cast %46 : vector<1x128xf32> to vector<1x128xf32>
    %48 = vector.broadcast %47 : vector<1x128xf32> to vector<16x128xf32>
    %49 = tpu.concatenate %45, %48 in 0 : vector<16x128xf32>, vector<16x128xf32> -> vector<32x128xf32>
    %50 = arith.mulf %35, %42 : vector<32x128xf32>
    %51 = arith.mulf %35, %49 : vector<32x128xf32>
    %52 = tpu.concatenate %35, %50, %51 in 1 : vector<32x128xf32>, vector<32x128xf32>, vector<32x128xf32> -> vector<32x384xf32>
    %c1 = arith.constant 1 : index
    %c0_19 = arith.constant 0 : index
    %c0_20 = arith.constant 0 : index
    %53 = vector.load %arg7[%c1, %c0_19, %c0_20] : memref<12x384x128xf32, #tpu.memory_space<vmem>>, vector<1x384x128xf32>
    %54 = vector.shape_cast %53 : vector<1x384x128xf32> to vector<384x128xf32>
    %cst_21 = arith.constant dense<0.000000e+00> : vector<32x128xf32>
    %55 = tpu.matmul %52, %54, %cst_21 {dimension_numbers = #tpu.dot_dimension_numbers<[1], [0], [0], [1], [0, 0, 1, 1], [], []>} : vector<32x384xf32>, vector<384x128xf32>, vector<32x128xf32> -> vector<32x128xf32>
    %56 = vector.extract_strided_slice %11 {offsets = [2, 0], sizes = [1, 128], strides = [1, 1]} : vector<12x256xf32> to vector<1x128xf32>
    %57 = vector.shape_cast %56 : vector<1x128xf32> to vector<1x128xf32>
    %58 = vector.broadcast %57 : vector<1x128xf32> to vector<16x128xf32>
    %59 = vector.extract_strided_slice %11 {offsets = [2, 128], sizes = [1, 128], strides = [1, 1]} : vector<12x256xf32> to vector<1x128xf32>
    %60 = vector.shape_cast %59 : vector<1x128xf32> to vector<1x128xf32>
    %61 = vector.broadcast %60 : vector<1x128xf32> to vector<16x128xf32>
    %62 = tpu.concatenate %58, %61 in 0 : vector<16x128xf32>, vector<16x128xf32> -> vector<32x128xf32>
    %63 = vector.extract_strided_slice %14 {offsets = [2, 0], sizes = [1, 128], strides = [1, 1]} : vector<12x256xf32> to vector<1x128xf32>
    %64 = vector.shape_cast %63 : vector<1x128xf32> to vector<1x128xf32>
    %65 = vector.broadcast %64 : vector<1x128xf32> to vector<16x128xf32>
    %66 = vector.extract_strided_slice %14 {offsets = [2, 128], sizes = [1, 128], strides = [1, 1]} : vector<12x256xf32> to vector<1x128xf32>
    %67 = vector.shape_cast %66 : vector<1x128xf32> to vector<1x128xf32>
    %68 = vector.broadcast %67 : vector<1x128xf32> to vector<16x128xf32>
    %69 = tpu.concatenate %65, %68 in 0 : vector<16x128xf32>, vector<16x128xf32> -> vector<32x128xf32>
    %70 = arith.mulf %55, %62 : vector<32x128xf32>
    %71 = arith.mulf %55, %69 : vector<32x128xf32>
    %72 = tpu.concatenate %55, %70, %71 in 1 : vector<32x128xf32>, vector<32x128xf32>, vector<32x128xf32> -> vector<32x384xf32>
    %c2 = arith.constant 2 : index
    %c0_22 = arith.constant 0 : index
    %c0_23 = arith.constant 0 : index
    %73 = vector.load %arg7[%c2, %c0_22, %c0_23] : memref<12x384x128xf32, #tpu.memory_space<vmem>>, vector<1x384x128xf32>
    %74 = vector.shape_cast %73 : vector<1x384x128xf32> to vector<384x128xf32>
    %cst_24 = arith.constant dense<0.000000e+00> : vector<32x128xf32>
    %75 = tpu.matmul %72, %74, %cst_24 {dimension_numbers = #tpu.dot_dimension_numbers<[1], [0], [0], [1], [0, 0, 1, 1], [], []>} : vector<32x384xf32>, vector<384x128xf32>, vector<32x128xf32> -> vector<32x128xf32>
    %76 = vector.extract_strided_slice %11 {offsets = [3, 0], sizes = [1, 128], strides = [1, 1]} : vector<12x256xf32> to vector<1x128xf32>
    %77 = vector.shape_cast %76 : vector<1x128xf32> to vector<1x128xf32>
    %78 = vector.broadcast %77 : vector<1x128xf32> to vector<16x128xf32>
    %79 = vector.extract_strided_slice %11 {offsets = [3, 128], sizes = [1, 128], strides = [1, 1]} : vector<12x256xf32> to vector<1x128xf32>
    %80 = vector.shape_cast %79 : vector<1x128xf32> to vector<1x128xf32>
    %81 = vector.broadcast %80 : vector<1x128xf32> to vector<16x128xf32>
    %82 = tpu.concatenate %78, %81 in 0 : vector<16x128xf32>, vector<16x128xf32> -> vector<32x128xf32>
    %83 = vector.extract_strided_slice %14 {offsets = [3, 0], sizes = [1, 128], strides = [1, 1]} : vector<12x256xf32> to vector<1x128xf32>
    %84 = vector.shape_cast %83 : vector<1x128xf32> to vector<1x128xf32>
    %85 = vector.broadcast %84 : vector<1x128xf32> to vector<16x128xf32>
    %86 = vector.extract_strided_slice %14 {offsets = [3, 128], sizes = [1, 128], strides = [1, 1]} : vector<12x256xf32> to vector<1x128xf32>
    %87 = vector.shape_cast %86 : vector<1x128xf32> to vector<1x128xf32>
    %88 = vector.broadcast %87 : vector<1x128xf32> to vector<16x128xf32>
    %89 = tpu.concatenate %85, %88 in 0 : vector<16x128xf32>, vector<16x128xf32> -> vector<32x128xf32>
    %90 = arith.mulf %75, %82 : vector<32x128xf32>
    %91 = arith.mulf %75, %89 : vector<32x128xf32>
    %92 = tpu.concatenate %75, %90, %91 in 1 : vector<32x128xf32>, vector<32x128xf32>, vector<32x128xf32> -> vector<32x384xf32>
    %c3 = arith.constant 3 : index
    %c0_25 = arith.constant 0 : index
    %c0_26 = arith.constant 0 : index
    %93 = vector.load %arg7[%c3, %c0_25, %c0_26] : memref<12x384x128xf32, #tpu.memory_space<vmem>>, vector<1x384x128xf32>
    %94 = vector.shape_cast %93 : vector<1x384x128xf32> to vector<384x128xf32>
    %cst_27 = arith.constant dense<0.000000e+00> : vector<32x128xf32>
    %95 = tpu.matmul %92, %94, %cst_27 {dimension_numbers = #tpu.dot_dimension_numbers<[1], [0], [0], [1], [0, 0, 1, 1], [], []>} : vector<32x384xf32>, vector<384x128xf32>, vector<32x128xf32> -> vector<32x128xf32>
    %96 = vector.extract_strided_slice %11 {offsets = [4, 0], sizes = [1, 128], strides = [1, 1]} : vector<12x256xf32> to vector<1x128xf32>
    %97 = vector.shape_cast %96 : vector<1x128xf32> to vector<1x128xf32>
    %98 = vector.broadcast %97 : vector<1x128xf32> to vector<16x128xf32>
    %99 = vector.extract_strided_slice %11 {offsets = [4, 128], sizes = [1, 128], strides = [1, 1]} : vector<12x256xf32> to vector<1x128xf32>
    %100 = vector.shape_cast %99 : vector<1x128xf32> to vector<1x128xf32>
    %101 = vector.broadcast %100 : vector<1x128xf32> to vector<16x128xf32>
    %102 = tpu.concatenate %98, %101 in 0 : vector<16x128xf32>, vector<16x128xf32> -> vector<32x128xf32>
    %103 = vector.extract_strided_slice %14 {offsets = [4, 0], sizes = [1, 128], strides = [1, 1]} : vector<12x256xf32> to vector<1x128xf32>
    %104 = vector.shape_cast %103 : vector<1x128xf32> to vector<1x128xf32>
    %105 = vector.broadcast %104 : vector<1x128xf32> to vector<16x128xf32>
    %106 = vector.extract_strided_slice %14 {offsets = [4, 128], sizes = [1, 128], strides = [1, 1]} : vector<12x256xf32> to vector<1x128xf32>
    %107 = vector.shape_cast %106 : vector<1x128xf32> to vector<1x128xf32>
    %108 = vector.broadcast %107 : vector<1x128xf32> to vector<16x128xf32>
    %109 = tpu.concatenate %105, %108 in 0 : vector<16x128xf32>, vector<16x128xf32> -> vector<32x128xf32>
    %110 = arith.mulf %95, %102 : vector<32x128xf32>
    %111 = arith.mulf %95, %109 : vector<32x128xf32>
    %112 = tpu.concatenate %95, %110, %111 in 1 : vector<32x128xf32>, vector<32x128xf32>, vector<32x128xf32> -> vector<32x384xf32>
    %c4 = arith.constant 4 : index
    %c0_28 = arith.constant 0 : index
    %c0_29 = arith.constant 0 : index
    %113 = vector.load %arg7[%c4, %c0_28, %c0_29] : memref<12x384x128xf32, #tpu.memory_space<vmem>>, vector<1x384x128xf32>
    %114 = vector.shape_cast %113 : vector<1x384x128xf32> to vector<384x128xf32>
    %cst_30 = arith.constant dense<0.000000e+00> : vector<32x128xf32>
    %115 = tpu.matmul %112, %114, %cst_30 {dimension_numbers = #tpu.dot_dimension_numbers<[1], [0], [0], [1], [0, 0, 1, 1], [], []>} : vector<32x384xf32>, vector<384x128xf32>, vector<32x128xf32> -> vector<32x128xf32>
    %116 = vector.extract_strided_slice %11 {offsets = [5, 0], sizes = [1, 128], strides = [1, 1]} : vector<12x256xf32> to vector<1x128xf32>
    %117 = vector.shape_cast %116 : vector<1x128xf32> to vector<1x128xf32>
    %118 = vector.broadcast %117 : vector<1x128xf32> to vector<16x128xf32>
    %119 = vector.extract_strided_slice %11 {offsets = [5, 128], sizes = [1, 128], strides = [1, 1]} : vector<12x256xf32> to vector<1x128xf32>
    %120 = vector.shape_cast %119 : vector<1x128xf32> to vector<1x128xf32>
    %121 = vector.broadcast %120 : vector<1x128xf32> to vector<16x128xf32>
    %122 = tpu.concatenate %118, %121 in 0 : vector<16x128xf32>, vector<16x128xf32> -> vector<32x128xf32>
    %123 = vector.extract_strided_slice %14 {offsets = [5, 0], sizes = [1, 128], strides = [1, 1]} : vector<12x256xf32> to vector<1x128xf32>
    %124 = vector.shape_cast %123 : vector<1x128xf32> to vector<1x128xf32>
    %125 = vector.broadcast %124 : vector<1x128xf32> to vector<16x128xf32>
    %126 = vector.extract_strided_slice %14 {offsets = [5, 128], sizes = [1, 128], strides = [1, 1]} : vector<12x256xf32> to vector<1x128xf32>
    %127 = vector.shape_cast %126 : vector<1x128xf32> to vector<1x128xf32>
    %128 = vector.broadcast %127 : vector<1x128xf32> to vector<16x128xf32>
    %129 = tpu.concatenate %125, %128 in 0 : vector<16x128xf32>, vector<16x128xf32> -> vector<32x128xf32>
    %130 = arith.mulf %115, %122 : vector<32x128xf32>
    %131 = arith.mulf %115, %129 : vector<32x128xf32>
    %132 = tpu.concatenate %115, %130, %131 in 1 : vector<32x128xf32>, vector<32x128xf32>, vector<32x128xf32> -> vector<32x384xf32>
    %c5 = arith.constant 5 : index
    %c0_31 = arith.constant 0 : index
    %c0_32 = arith.constant 0 : index
    %133 = vector.load %arg7[%c5, %c0_31, %c0_32] : memref<12x384x128xf32, #tpu.memory_space<vmem>>, vector<1x384x128xf32>
    %134 = vector.shape_cast %133 : vector<1x384x128xf32> to vector<384x128xf32>
    %cst_33 = arith.constant dense<0.000000e+00> : vector<32x128xf32>
    %135 = tpu.matmul %132, %134, %cst_33 {dimension_numbers = #tpu.dot_dimension_numbers<[1], [0], [0], [1], [0, 0, 1, 1], [], []>} : vector<32x384xf32>, vector<384x128xf32>, vector<32x128xf32> -> vector<32x128xf32>
    %136 = vector.extract_strided_slice %11 {offsets = [6, 0], sizes = [1, 128], strides = [1, 1]} : vector<12x256xf32> to vector<1x128xf32>
    %137 = vector.shape_cast %136 : vector<1x128xf32> to vector<1x128xf32>
    %138 = vector.broadcast %137 : vector<1x128xf32> to vector<16x128xf32>
    %139 = vector.extract_strided_slice %11 {offsets = [6, 128], sizes = [1, 128], strides = [1, 1]} : vector<12x256xf32> to vector<1x128xf32>
    %140 = vector.shape_cast %139 : vector<1x128xf32> to vector<1x128xf32>
    %141 = vector.broadcast %140 : vector<1x128xf32> to vector<16x128xf32>
    %142 = tpu.concatenate %138, %141 in 0 : vector<16x128xf32>, vector<16x128xf32> -> vector<32x128xf32>
    %143 = vector.extract_strided_slice %14 {offsets = [6, 0], sizes = [1, 128], strides = [1, 1]} : vector<12x256xf32> to vector<1x128xf32>
    %144 = vector.shape_cast %143 : vector<1x128xf32> to vector<1x128xf32>
    %145 = vector.broadcast %144 : vector<1x128xf32> to vector<16x128xf32>
    %146 = vector.extract_strided_slice %14 {offsets = [6, 128], sizes = [1, 128], strides = [1, 1]} : vector<12x256xf32> to vector<1x128xf32>
    %147 = vector.shape_cast %146 : vector<1x128xf32> to vector<1x128xf32>
    %148 = vector.broadcast %147 : vector<1x128xf32> to vector<16x128xf32>
    %149 = tpu.concatenate %145, %148 in 0 : vector<16x128xf32>, vector<16x128xf32> -> vector<32x128xf32>
    %150 = arith.mulf %135, %142 : vector<32x128xf32>
    %151 = arith.mulf %135, %149 : vector<32x128xf32>
    %152 = tpu.concatenate %135, %150, %151 in 1 : vector<32x128xf32>, vector<32x128xf32>, vector<32x128xf32> -> vector<32x384xf32>
    %c6 = arith.constant 6 : index
    %c0_34 = arith.constant 0 : index
    %c0_35 = arith.constant 0 : index
    %153 = vector.load %arg7[%c6, %c0_34, %c0_35] : memref<12x384x128xf32, #tpu.memory_space<vmem>>, vector<1x384x128xf32>
    %154 = vector.shape_cast %153 : vector<1x384x128xf32> to vector<384x128xf32>
    %cst_36 = arith.constant dense<0.000000e+00> : vector<32x128xf32>
    %155 = tpu.matmul %152, %154, %cst_36 {dimension_numbers = #tpu.dot_dimension_numbers<[1], [0], [0], [1], [0, 0, 1, 1], [], []>} : vector<32x384xf32>, vector<384x128xf32>, vector<32x128xf32> -> vector<32x128xf32>
    %156 = vector.extract_strided_slice %11 {offsets = [7, 0], sizes = [1, 128], strides = [1, 1]} : vector<12x256xf32> to vector<1x128xf32>
    %157 = vector.shape_cast %156 : vector<1x128xf32> to vector<1x128xf32>
    %158 = vector.broadcast %157 : vector<1x128xf32> to vector<16x128xf32>
    %159 = vector.extract_strided_slice %11 {offsets = [7, 128], sizes = [1, 128], strides = [1, 1]} : vector<12x256xf32> to vector<1x128xf32>
    %160 = vector.shape_cast %159 : vector<1x128xf32> to vector<1x128xf32>
    %161 = vector.broadcast %160 : vector<1x128xf32> to vector<16x128xf32>
    %162 = tpu.concatenate %158, %161 in 0 : vector<16x128xf32>, vector<16x128xf32> -> vector<32x128xf32>
    %163 = vector.extract_strided_slice %14 {offsets = [7, 0], sizes = [1, 128], strides = [1, 1]} : vector<12x256xf32> to vector<1x128xf32>
    %164 = vector.shape_cast %163 : vector<1x128xf32> to vector<1x128xf32>
    %165 = vector.broadcast %164 : vector<1x128xf32> to vector<16x128xf32>
    %166 = vector.extract_strided_slice %14 {offsets = [7, 128], sizes = [1, 128], strides = [1, 1]} : vector<12x256xf32> to vector<1x128xf32>
    %167 = vector.shape_cast %166 : vector<1x128xf32> to vector<1x128xf32>
    %168 = vector.broadcast %167 : vector<1x128xf32> to vector<16x128xf32>
    %169 = tpu.concatenate %165, %168 in 0 : vector<16x128xf32>, vector<16x128xf32> -> vector<32x128xf32>
    %170 = arith.mulf %155, %162 : vector<32x128xf32>
    %171 = arith.mulf %155, %169 : vector<32x128xf32>
    %172 = tpu.concatenate %155, %170, %171 in 1 : vector<32x128xf32>, vector<32x128xf32>, vector<32x128xf32> -> vector<32x384xf32>
    %c7 = arith.constant 7 : index
    %c0_37 = arith.constant 0 : index
    %c0_38 = arith.constant 0 : index
    %173 = vector.load %arg7[%c7, %c0_37, %c0_38] : memref<12x384x128xf32, #tpu.memory_space<vmem>>, vector<1x384x128xf32>
    %174 = vector.shape_cast %173 : vector<1x384x128xf32> to vector<384x128xf32>
    %cst_39 = arith.constant dense<0.000000e+00> : vector<32x128xf32>
    %175 = tpu.matmul %172, %174, %cst_39 {dimension_numbers = #tpu.dot_dimension_numbers<[1], [0], [0], [1], [0, 0, 1, 1], [], []>} : vector<32x384xf32>, vector<384x128xf32>, vector<32x128xf32> -> vector<32x128xf32>
    %176 = vector.extract_strided_slice %11 {offsets = [8, 0], sizes = [1, 128], strides = [1, 1]} : vector<12x256xf32> to vector<1x128xf32>
    %177 = vector.shape_cast %176 : vector<1x128xf32> to vector<1x128xf32>
    %178 = vector.broadcast %177 : vector<1x128xf32> to vector<16x128xf32>
    %179 = vector.extract_strided_slice %11 {offsets = [8, 128], sizes = [1, 128], strides = [1, 1]} : vector<12x256xf32> to vector<1x128xf32>
    %180 = vector.shape_cast %179 : vector<1x128xf32> to vector<1x128xf32>
    %181 = vector.broadcast %180 : vector<1x128xf32> to vector<16x128xf32>
    %182 = tpu.concatenate %178, %181 in 0 : vector<16x128xf32>, vector<16x128xf32> -> vector<32x128xf32>
    %183 = vector.extract_strided_slice %14 {offsets = [8, 0], sizes = [1, 128], strides = [1, 1]} : vector<12x256xf32> to vector<1x128xf32>
    %184 = vector.shape_cast %183 : vector<1x128xf32> to vector<1x128xf32>
    %185 = vector.broadcast %184 : vector<1x128xf32> to vector<16x128xf32>
    %186 = vector.extract_strided_slice %14 {offsets = [8, 128], sizes = [1, 128], strides = [1, 1]} : vector<12x256xf32> to vector<1x128xf32>
    %187 = vector.shape_cast %186 : vector<1x128xf32> to vector<1x128xf32>
    %188 = vector.broadcast %187 : vector<1x128xf32> to vector<16x128xf32>
    %189 = tpu.concatenate %185, %188 in 0 : vector<16x128xf32>, vector<16x128xf32> -> vector<32x128xf32>
    %190 = arith.mulf %175, %182 : vector<32x128xf32>
    %191 = arith.mulf %175, %189 : vector<32x128xf32>
    %192 = tpu.concatenate %175, %190, %191 in 1 : vector<32x128xf32>, vector<32x128xf32>, vector<32x128xf32> -> vector<32x384xf32>
    %c8 = arith.constant 8 : index
    %c0_40 = arith.constant 0 : index
    %c0_41 = arith.constant 0 : index
    %193 = vector.load %arg7[%c8, %c0_40, %c0_41] : memref<12x384x128xf32, #tpu.memory_space<vmem>>, vector<1x384x128xf32>
    %194 = vector.shape_cast %193 : vector<1x384x128xf32> to vector<384x128xf32>
    %cst_42 = arith.constant dense<0.000000e+00> : vector<32x128xf32>
    %195 = tpu.matmul %192, %194, %cst_42 {dimension_numbers = #tpu.dot_dimension_numbers<[1], [0], [0], [1], [0, 0, 1, 1], [], []>} : vector<32x384xf32>, vector<384x128xf32>, vector<32x128xf32> -> vector<32x128xf32>
    %196 = vector.extract_strided_slice %11 {offsets = [9, 0], sizes = [1, 128], strides = [1, 1]} : vector<12x256xf32> to vector<1x128xf32>
    %197 = vector.shape_cast %196 : vector<1x128xf32> to vector<1x128xf32>
    %198 = vector.broadcast %197 : vector<1x128xf32> to vector<16x128xf32>
    %199 = vector.extract_strided_slice %11 {offsets = [9, 128], sizes = [1, 128], strides = [1, 1]} : vector<12x256xf32> to vector<1x128xf32>
    %200 = vector.shape_cast %199 : vector<1x128xf32> to vector<1x128xf32>
    %201 = vector.broadcast %200 : vector<1x128xf32> to vector<16x128xf32>
    %202 = tpu.concatenate %198, %201 in 0 : vector<16x128xf32>, vector<16x128xf32> -> vector<32x128xf32>
    %203 = vector.extract_strided_slice %14 {offsets = [9, 0], sizes = [1, 128], strides = [1, 1]} : vector<12x256xf32> to vector<1x128xf32>
    %204 = vector.shape_cast %203 : vector<1x128xf32> to vector<1x128xf32>
    %205 = vector.broadcast %204 : vector<1x128xf32> to vector<16x128xf32>
    %206 = vector.extract_strided_slice %14 {offsets = [9, 128], sizes = [1, 128], strides = [1, 1]} : vector<12x256xf32> to vector<1x128xf32>
    %207 = vector.shape_cast %206 : vector<1x128xf32> to vector<1x128xf32>
    %208 = vector.broadcast %207 : vector<1x128xf32> to vector<16x128xf32>
    %209 = tpu.concatenate %205, %208 in 0 : vector<16x128xf32>, vector<16x128xf32> -> vector<32x128xf32>
    %210 = arith.mulf %195, %202 : vector<32x128xf32>
    %211 = arith.mulf %195, %209 : vector<32x128xf32>
    %212 = tpu.concatenate %195, %210, %211 in 1 : vector<32x128xf32>, vector<32x128xf32>, vector<32x128xf32> -> vector<32x384xf32>
    %c9 = arith.constant 9 : index
    %c0_43 = arith.constant 0 : index
    %c0_44 = arith.constant 0 : index
    %213 = vector.load %arg7[%c9, %c0_43, %c0_44] : memref<12x384x128xf32, #tpu.memory_space<vmem>>, vector<1x384x128xf32>
    %214 = vector.shape_cast %213 : vector<1x384x128xf32> to vector<384x128xf32>
    %cst_45 = arith.constant dense<0.000000e+00> : vector<32x128xf32>
    %215 = tpu.matmul %212, %214, %cst_45 {dimension_numbers = #tpu.dot_dimension_numbers<[1], [0], [0], [1], [0, 0, 1, 1], [], []>} : vector<32x384xf32>, vector<384x128xf32>, vector<32x128xf32> -> vector<32x128xf32>
    %216 = vector.extract_strided_slice %11 {offsets = [10, 0], sizes = [1, 128], strides = [1, 1]} : vector<12x256xf32> to vector<1x128xf32>
    %217 = vector.shape_cast %216 : vector<1x128xf32> to vector<1x128xf32>
    %218 = vector.broadcast %217 : vector<1x128xf32> to vector<16x128xf32>
    %219 = vector.extract_strided_slice %11 {offsets = [10, 128], sizes = [1, 128], strides = [1, 1]} : vector<12x256xf32> to vector<1x128xf32>
    %220 = vector.shape_cast %219 : vector<1x128xf32> to vector<1x128xf32>
    %221 = vector.broadcast %220 : vector<1x128xf32> to vector<16x128xf32>
    %222 = tpu.concatenate %218, %221 in 0 : vector<16x128xf32>, vector<16x128xf32> -> vector<32x128xf32>
    %223 = vector.extract_strided_slice %14 {offsets = [10, 0], sizes = [1, 128], strides = [1, 1]} : vector<12x256xf32> to vector<1x128xf32>
    %224 = vector.shape_cast %223 : vector<1x128xf32> to vector<1x128xf32>
    %225 = vector.broadcast %224 : vector<1x128xf32> to vector<16x128xf32>
    %226 = vector.extract_strided_slice %14 {offsets = [10, 128], sizes = [1, 128], strides = [1, 1]} : vector<12x256xf32> to vector<1x128xf32>
    %227 = vector.shape_cast %226 : vector<1x128xf32> to vector<1x128xf32>
    %228 = vector.broadcast %227 : vector<1x128xf32> to vector<16x128xf32>
    %229 = tpu.concatenate %225, %228 in 0 : vector<16x128xf32>, vector<16x128xf32> -> vector<32x128xf32>
    %230 = arith.mulf %215, %222 : vector<32x128xf32>
    %231 = arith.mulf %215, %229 : vector<32x128xf32>
    %232 = tpu.concatenate %215, %230, %231 in 1 : vector<32x128xf32>, vector<32x128xf32>, vector<32x128xf32> -> vector<32x384xf32>
    %c10 = arith.constant 10 : index
    %c0_46 = arith.constant 0 : index
    %c0_47 = arith.constant 0 : index
    %233 = vector.load %arg7[%c10, %c0_46, %c0_47] : memref<12x384x128xf32, #tpu.memory_space<vmem>>, vector<1x384x128xf32>
    %234 = vector.shape_cast %233 : vector<1x384x128xf32> to vector<384x128xf32>
    %cst_48 = arith.constant dense<0.000000e+00> : vector<32x128xf32>
    %235 = tpu.matmul %232, %234, %cst_48 {dimension_numbers = #tpu.dot_dimension_numbers<[1], [0], [0], [1], [0, 0, 1, 1], [], []>} : vector<32x384xf32>, vector<384x128xf32>, vector<32x128xf32> -> vector<32x128xf32>
    %236 = vector.extract_strided_slice %11 {offsets = [11, 0], sizes = [1, 128], strides = [1, 1]} : vector<12x256xf32> to vector<1x128xf32>
    %237 = vector.shape_cast %236 : vector<1x128xf32> to vector<1x128xf32>
    %238 = vector.broadcast %237 : vector<1x128xf32> to vector<16x128xf32>
    %239 = vector.extract_strided_slice %11 {offsets = [11, 128], sizes = [1, 128], strides = [1, 1]} : vector<12x256xf32> to vector<1x128xf32>
    %240 = vector.shape_cast %239 : vector<1x128xf32> to vector<1x128xf32>
    %241 = vector.broadcast %240 : vector<1x128xf32> to vector<16x128xf32>
    %242 = tpu.concatenate %238, %241 in 0 : vector<16x128xf32>, vector<16x128xf32> -> vector<32x128xf32>
    %243 = vector.extract_strided_slice %14 {offsets = [11, 0], sizes = [1, 128], strides = [1, 1]} : vector<12x256xf32> to vector<1x128xf32>
    %244 = vector.shape_cast %243 : vector<1x128xf32> to vector<1x128xf32>
    %245 = vector.broadcast %244 : vector<1x128xf32> to vector<16x128xf32>
    %246 = vector.extract_strided_slice %14 {offsets = [11, 128], sizes = [1, 128], strides = [1, 1]} : vector<12x256xf32> to vector<1x128xf32>
    %247 = vector.shape_cast %246 : vector<1x128xf32> to vector<1x128xf32>
    %248 = vector.broadcast %247 : vector<1x128xf32> to vector<16x128xf32>
    %249 = tpu.concatenate %245, %248 in 0 : vector<16x128xf32>, vector<16x128xf32> -> vector<32x128xf32>
    %250 = arith.mulf %235, %242 : vector<32x128xf32>
    %251 = arith.mulf %235, %249 : vector<32x128xf32>
    %252 = tpu.concatenate %235, %250, %251 in 1 : vector<32x128xf32>, vector<32x128xf32>, vector<32x128xf32> -> vector<32x384xf32>
    %c11 = arith.constant 11 : index
    %c0_49 = arith.constant 0 : index
    %c0_50 = arith.constant 0 : index
    %253 = vector.load %arg7[%c11, %c0_49, %c0_50] : memref<12x384x128xf32, #tpu.memory_space<vmem>>, vector<1x384x128xf32>
    %254 = vector.shape_cast %253 : vector<1x384x128xf32> to vector<384x128xf32>
    %cst_51 = arith.constant dense<0.000000e+00> : vector<32x128xf32>
    %255 = tpu.matmul %252, %254, %cst_51 {dimension_numbers = #tpu.dot_dimension_numbers<[1], [0], [0], [1], [0, 0, 1, 1], [], []>} : vector<32x384xf32>, vector<384x128xf32>, vector<32x128xf32> -> vector<32x128xf32>
    %c0_52 = arith.constant 0 : index
    %c0_53 = arith.constant 0 : index
    %256 = vector.load %arg8[%c0_52, %c0_53] : memref<128x16xf32, #tpu.memory_space<vmem>>, vector<128x16xf32>
    %cst_54 = arith.constant dense<0.000000e+00> : vector<32x16xf32>
    %257 = tpu.matmul %255, %256, %cst_54 {dimension_numbers = #tpu.dot_dimension_numbers<[1], [0], [0], [1], [0, 0, 1, 1], [], []>} : vector<32x128xf32>, vector<128x16xf32>, vector<32x16xf32> -> vector<32x16xf32>
    %258 = tpu.iota {dimensions = array<i32: 1>} : vector<1x16xi32>
    %c0_i32 = arith.constant 0 : i32
    %259 = vector.broadcast %c0_i32 : i32 to vector<1x16xi32>
    %260 = arith.cmpi eq, %258, %259 : vector<1x16xi32>
    %261 = arith.extui %260 : vector<1x16xi1> to vector<1x16xi32>
    %262 = arith.sitofp %261 : vector<1x16xi32> to vector<1x16xf32>
    %263 = vector.extract_strided_slice %257 {offsets = [0, 0], sizes = [16, 16], strides = [1, 1]} : vector<32x16xf32> to vector<16x16xf32>
    %c0_55 = arith.constant 0 : index
    %264 = memref.load %arg1[%c0_55] : memref<4xf32, #tpu.memory_space<smem>>
    %265 = vector.broadcast %264 : f32 to vector<1x16xf32>
    %266 = arith.mulf %265, %262 : vector<1x16xf32>
    %c1_56 = arith.constant 1 : index
    %267 = memref.load %arg1[%c1_56] : memref<4xf32, #tpu.memory_space<smem>>
    %268 = vector.extract_strided_slice %263 {offsets = [0, 0], sizes = [1, 16], strides = [1, 1]} : vector<16x16xf32> to vector<1x16xf32>
    %269 = vector.broadcast %267 : f32 to vector<1x16xf32>
    %270 = arith.mulf %269, %268 : vector<1x16xf32>
    %271 = arith.addf %266, %270 : vector<1x16xf32>
    %cst_57 = arith.constant dense<0.000000e+00> : vector<16x16xf32>
    %272 = tpu.matmul %263, %263, %cst_57 {dimension_numbers = #tpu.dot_dimension_numbers<[1], [0], [0], [1], [0, 0, 1, 1], [], []>} : vector<16x16xf32>, vector<16x16xf32>, vector<16x16xf32> -> vector<16x16xf32>
    %c2_58 = arith.constant 2 : index
    %273 = memref.load %arg1[%c2_58] : memref<4xf32, #tpu.memory_space<smem>>
    %274 = vector.extract_strided_slice %272 {offsets = [0, 0], sizes = [1, 16], strides = [1, 1]} : vector<16x16xf32> to vector<1x16xf32>
    %275 = vector.broadcast %273 : f32 to vector<1x16xf32>
    %276 = arith.mulf %275, %274 : vector<1x16xf32>
    %277 = arith.addf %271, %276 : vector<1x16xf32>
    %cst_59 = arith.constant dense<0.000000e+00> : vector<16x16xf32>
    %278 = tpu.matmul %272, %263, %cst_59 {dimension_numbers = #tpu.dot_dimension_numbers<[1], [0], [0], [1], [0, 0, 1, 1], [], []>} : vector<16x16xf32>, vector<16x16xf32>, vector<16x16xf32> -> vector<16x16xf32>
    %c3_60 = arith.constant 3 : index
    %279 = memref.load %arg1[%c3_60] : memref<4xf32, #tpu.memory_space<smem>>
    %280 = vector.extract_strided_slice %278 {offsets = [0, 0], sizes = [1, 16], strides = [1, 1]} : vector<16x16xf32> to vector<1x16xf32>
    %281 = vector.broadcast %279 : f32 to vector<1x16xf32>
    %282 = arith.mulf %281, %280 : vector<1x16xf32>
    %283 = arith.addf %277, %282 : vector<1x16xf32>
    %284 = arith.mulf %283, %283 : vector<1x16xf32>
    %285 = vector.shape_cast %284 : vector<1x16xf32> to vector<1x1x16xf32>
    %cst_61 = arith.constant dense<0.000000e+00> : vector<1xf32>
    %286 = vector.multi_reduction <add>, %285, %cst_61 [1, 2] : vector<1x1x16xf32> to vector<1xf32>
    %287 = vector.shape_cast %286 : vector<1xf32> to vector<1x1x1xf32>
    %288 = vector.extract %287[0, 0, 0] : f32 from vector<1x1x1xf32>
    %289 = vector.broadcast %288 : f32 to vector<1x1xf32>
    %290 = math.sqrt %289 : vector<1x1xf32>
    %cst_62 = arith.constant 9.99999996E-13 : f32
    %291 = vector.broadcast %cst_62 : f32 to vector<1x1xf32>
    %292 = arith.maximumf %290, %291 : vector<1x1xf32>
    %cst_63 = arith.constant 1.000000e+00 : f32
    %293 = vector.broadcast %cst_63 : f32 to vector<1x1xf32>
    %294 = arith.divf %293, %292 : vector<1x1xf32>
    %295 = vector.broadcast %294 : vector<1x1xf32> to vector<1x16xf32>
    %296 = arith.mulf %283, %295 : vector<1x16xf32>
    %297 = vector.extract_strided_slice %257 {offsets = [16, 0], sizes = [16, 16], strides = [1, 1]} : vector<32x16xf32> to vector<16x16xf32>
    %c0_64 = arith.constant 0 : index
    %298 = memref.load %arg1[%c0_64] : memref<4xf32, #tpu.memory_space<smem>>
    %299 = vector.broadcast %298 : f32 to vector<1x16xf32>
    %300 = arith.mulf %299, %262 : vector<1x16xf32>
    %c1_65 = arith.constant 1 : index
    %301 = memref.load %arg1[%c1_65] : memref<4xf32, #tpu.memory_space<smem>>
    %302 = vector.extract_strided_slice %297 {offsets = [0, 0], sizes = [1, 16], strides = [1, 1]} : vector<16x16xf32> to vector<1x16xf32>
    %303 = vector.broadcast %301 : f32 to vector<1x16xf32>
    %304 = arith.mulf %303, %302 : vector<1x16xf32>
    %305 = arith.addf %300, %304 : vector<1x16xf32>
    %cst_66 = arith.constant dense<0.000000e+00> : vector<16x16xf32>
    %306 = tpu.matmul %297, %297, %cst_66 {dimension_numbers = #tpu.dot_dimension_numbers<[1], [0], [0], [1], [0, 0, 1, 1], [], []>} : vector<16x16xf32>, vector<16x16xf32>, vector<16x16xf32> -> vector<16x16xf32>
    %c2_67 = arith.constant 2 : index
    %307 = memref.load %arg1[%c2_67] : memref<4xf32, #tpu.memory_space<smem>>
    %308 = vector.extract_strided_slice %306 {offsets = [0, 0], sizes = [1, 16], strides = [1, 1]} : vector<16x16xf32> to vector<1x16xf32>
    %309 = vector.broadcast %307 : f32 to vector<1x16xf32>
    %310 = arith.mulf %309, %308 : vector<1x16xf32>
    %311 = arith.addf %305, %310 : vector<1x16xf32>
    %cst_68 = arith.constant dense<0.000000e+00> : vector<16x16xf32>
    %312 = tpu.matmul %306, %297, %cst_68 {dimension_numbers = #tpu.dot_dimension_numbers<[1], [0], [0], [1], [0, 0, 1, 1], [], []>} : vector<16x16xf32>, vector<16x16xf32>, vector<16x16xf32> -> vector<16x16xf32>
    %c3_69 = arith.constant 3 : index
    %313 = memref.load %arg1[%c3_69] : memref<4xf32, #tpu.memory_space<smem>>
    %314 = vector.extract_strided_slice %312 {offsets = [0, 0], sizes = [1, 16], strides = [1, 1]} : vector<16x16xf32> to vector<1x16xf32>
    %315 = vector.broadcast %313 : f32 to vector<1x16xf32>
    %316 = arith.mulf %315, %314 : vector<1x16xf32>
    %317 = arith.addf %311, %316 : vector<1x16xf32>
    %318 = arith.mulf %317, %317 : vector<1x16xf32>
    %319 = vector.shape_cast %318 : vector<1x16xf32> to vector<1x1x16xf32>
    %cst_70 = arith.constant dense<0.000000e+00> : vector<1xf32>
    %320 = vector.multi_reduction <add>, %319, %cst_70 [1, 2] : vector<1x1x16xf32> to vector<1xf32>
    %321 = vector.shape_cast %320 : vector<1xf32> to vector<1x1x1xf32>
    %322 = vector.extract %321[0, 0, 0] : f32 from vector<1x1x1xf32>
    %323 = vector.broadcast %322 : f32 to vector<1x1xf32>
    %324 = math.sqrt %323 : vector<1x1xf32>
    %cst_71 = arith.constant 9.99999996E-13 : f32
    %325 = vector.broadcast %cst_71 : f32 to vector<1x1xf32>
    %326 = arith.maximumf %324, %325 : vector<1x1xf32>
    %cst_72 = arith.constant 1.000000e+00 : f32
    %327 = vector.broadcast %cst_72 : f32 to vector<1x1xf32>
    %328 = arith.divf %327, %326 : vector<1x1xf32>
    %329 = vector.broadcast %328 : vector<1x1xf32> to vector<1x16xf32>
    %330 = arith.mulf %317, %329 : vector<1x16xf32>
    %331 = tpu.concatenate %296, %330 in 0 : vector<1x16xf32>, vector<1x16xf32> -> vector<2x16xf32>
    %332 = tpu.concatenate %290, %324 in 0 : vector<1x1xf32>, vector<1x1xf32> -> vector<2x1xf32>
    %c0_73 = arith.constant 0 : index
    %c0_74 = arith.constant 0 : index
    %333 = vector.load %arg9[%c0_73, %c0_74] : memref<16x256xf32, #tpu.memory_space<vmem>>, vector<16x256xf32>
    %cst_75 = arith.constant dense<0.000000e+00> : vector<2x256xf32>
    %334 = tpu.matmul %331, %333, %cst_75 {dimension_numbers = #tpu.dot_dimension_numbers<[1], [0], [0], [1], [0, 0, 1, 1], [], []>} : vector<2x16xf32>, vector<16x256xf32>, vector<2x256xf32> -> vector<2x256xf32>
    %c0_76 = arith.constant 0 : index
    %c0_77 = arith.constant 0 : index
    %335 = vector.load %arg10[%c0_76, %c0_77] : memref<16x256xf32, #tpu.memory_space<vmem>>, vector<16x256xf32>
    %cst_78 = arith.constant dense<0.000000e+00> : vector<2x256xf32>
    %336 = tpu.matmul %331, %335, %cst_78 {dimension_numbers = #tpu.dot_dimension_numbers<[1], [0], [0], [1], [0, 0, 1, 1], [], []>} : vector<2x16xf32>, vector<16x256xf32>, vector<2x256xf32> -> vector<2x256xf32>
    %337 = arith.mulf %334, %336 : vector<2x256xf32>
    %c0_79 = arith.constant 0 : index
    %c0_80 = arith.constant 0 : index
    %338 = vector.load %arg11[%c0_79, %c0_80] : memref<256x9xf32, #tpu.memory_space<vmem>>, vector<256x9xf32>
    %cst_81 = arith.constant dense<0.000000e+00> : vector<2x9xf32>
    %339 = tpu.matmul %337, %338, %cst_81 {dimension_numbers = #tpu.dot_dimension_numbers<[1], [0], [0], [1], [0, 0, 1, 1], [], []>} : vector<2x256xf32>, vector<256x9xf32>, vector<2x9xf32> -> vector<2x9xf32>
    %c0_82 = arith.constant 0 : index
    %c0_83 = arith.constant 0 : index
    %340 = vector.load %arg12[%c0_82, %c0_83] : memref<9x16xf32, #tpu.memory_space<vmem>>, vector<9x16xf32>
    %cst_84 = arith.constant dense<0.000000e+00> : vector<2x16xf32>
    %341 = tpu.matmul %339, %340, %cst_84 {dimension_numbers = #tpu.dot_dimension_numbers<[1], [0], [0], [1], [0, 0, 1, 1], [], []>} : vector<2x9xf32>, vector<9x16xf32>, vector<2x16xf32> -> vector<2x16xf32>
    %c0_85 = arith.constant 0 : index
    %c0_86 = arith.constant 0 : index
    %342 = vector.load %arg13[%c0_85, %c0_86] : memref<1x16xf32, #tpu.memory_space<vmem>>, vector<1x16xf32>
    %343 = vector.broadcast %342 : vector<1x16xf32> to vector<2x16xf32>
    %344 = arith.addf %341, %343 : vector<2x16xf32>
    %cst_87 = arith.constant 0.000000e+00 : f32
    %345 = vector.broadcast %cst_87 : f32 to vector<2x16xf32>
    %346 = arith.maximumf %344, %345 : vector<2x16xf32>
    %c0_88 = arith.constant 0 : index
    %c0_89 = arith.constant 0 : index
    %347 = vector.load %arg14[%c0_88, %c0_89] : memref<16x128xf32, #tpu.memory_space<vmem>>, vector<16x128xf32>
    %cst_90 = arith.constant dense<0.000000e+00> : vector<2x128xf32>
    %348 = tpu.matmul %346, %347, %cst_90 {dimension_numbers = #tpu.dot_dimension_numbers<[1], [0], [0], [1], [0, 0, 1, 1], [], []>} : vector<2x16xf32>, vector<16x128xf32>, vector<2x128xf32> -> vector<2x128xf32>
    %c0_91 = arith.constant 0 : index
    %c0_92 = arith.constant 0 : index
    %349 = vector.load %arg15[%c0_91, %c0_92] : memref<1x128xf32, #tpu.memory_space<vmem>>, vector<1x128xf32>
    %350 = vector.broadcast %349 : vector<1x128xf32> to vector<2x128xf32>
    %351 = arith.addf %348, %350 : vector<2x128xf32>
    %352 = tpu.iota {dimensions = array<i32: 1>} : vector<1x128xi32>
    %c32_i32 = arith.constant 32 : i32
    %353 = vector.broadcast %c32_i32 : i32 to vector<1x128xi32>
    %354 = arith.cmpi eq, %352, %353 : vector<1x128xi32>
    %355 = arith.extui %354 : vector<1x128xi1> to vector<1x128xi32>
    %356 = arith.sitofp %355 : vector<1x128xi32> to vector<1x128xf32>
    %357 = vector.broadcast %332 : vector<2x1xf32> to vector<2x128xf32>
    %358 = vector.broadcast %356 : vector<1x128xf32> to vector<2x128xf32>
    %359 = arith.mulf %357, %358 : vector<2x128xf32>
    %360 = arith.addf %351, %359 : vector<2x128xf32>
    %c0_93 = arith.constant 0 : index
    %c0_94 = arith.constant 0 : index
    %361 = vector.load %arg16[%c0_93, %c0_94] : memref<2x128xf32, #tpu.memory_space<vmem>>, vector<2x128xf32>
    tpu.vector_store %arg16[%c0_93, %c0_94], %360 {strides = array<i32>} : memref<2x128xf32, #tpu.memory_space<vmem>>, vector<2x128xf32>,
    return
  }
  func.func @transform_0(%arg0: i32) -> i32 {
    %c0_i32 = arith.constant 0 : i32
    %c0_i32_0 = arith.constant 0 : i32
    return %c0_i32 : i32
  }
  func.func @transform_1(%arg0: i32) -> (i32, i32, i32) {
    %c0_i32 = arith.constant 0 : i32
    %c0_i32_0 = arith.constant 0 : i32
    %c0_i32_1 = arith.constant 0 : i32
    return %arg0, %c0_i32, %c0_i32_0 : i32, i32, i32
  }
  func.func @transform_2(%arg0: i32) -> (i32, i32) {
    %c0_i32 = arith.constant 0 : i32
    %c0_i32_0 = arith.constant 0 : i32
    %c0_i32_1 = arith.constant 0 : i32
    return %c0_i32, %c0_i32_0 : i32, i32
  }
  func.func @transform_3(%arg0: i32) -> (i32, i32) {
    %c0_i32 = arith.constant 0 : i32
    %c0_i32_0 = arith.constant 0 : i32
    %c0_i32_1 = arith.constant 0 : i32
    return %c0_i32, %c0_i32_0 : i32, i32
  }
  func.func @transform_4(%arg0: i32) -> (i32, i32) {
    %c0_i32 = arith.constant 0 : i32
    %c0_i32_0 = arith.constant 0 : i32
    %c0_i32_1 = arith.constant 0 : i32
    return %c0_i32, %c0_i32_0 : i32, i32
  }
  func.func @transform_5(%arg0: i32) -> (i32, i32) {
    %c0_i32 = arith.constant 0 : i32
    %c0_i32_0 = arith.constant 0 : i32
    %c0_i32_1 = arith.constant 0 : i32
    return %c0_i32, %c0_i32_0 : i32, i32
  }
  func.func @transform_6(%arg0: i32) -> (i32, i32, i32) {
    %c0_i32 = arith.constant 0 : i32
    %c0_i32_0 = arith.constant 0 : i32
    %c0_i32_1 = arith.constant 0 : i32
    %c0_i32_2 = arith.constant 0 : i32
    return %c0_i32, %c0_i32_0, %c0_i32_1 : i32, i32, i32
  }
  func.func @transform_7(%arg0: i32) -> (i32, i32) {
    %c0_i32 = arith.constant 0 : i32
    %c0_i32_0 = arith.constant 0 : i32
    %c0_i32_1 = arith.constant 0 : i32
    return %c0_i32, %c0_i32_0 : i32, i32
  }
  func.func @transform_8(%arg0: i32) -> (i32, i32) {
    %c0_i32 = arith.constant 0 : i32
    %c0_i32_0 = arith.constant 0 : i32
    %c0_i32_1 = arith.constant 0 : i32
    return %c0_i32, %c0_i32_0 : i32, i32
  }
  func.func @transform_9(%arg0: i32) -> (i32, i32) {
    %c0_i32 = arith.constant 0 : i32
    %c0_i32_0 = arith.constant 0 : i32
    %c0_i32_1 = arith.constant 0 : i32
    return %c0_i32, %c0_i32_0 : i32, i32
  }
  func.func @transform_10(%arg0: i32) -> (i32, i32) {
    %c0_i32 = arith.constant 0 : i32
    %c0_i32_0 = arith.constant 0 : i32
    %c0_i32_1 = arith.constant 0 : i32
    return %c0_i32, %c0_i32_0 : i32, i32
  }
  func.func @transform_11(%arg0: i32) -> (i32, i32) {
    %c0_i32 = arith.constant 0 : i32
    %c0_i32_0 = arith.constant 0 : i32
    %c0_i32_1 = arith.constant 0 : i32
    return %c0_i32, %c0_i32_0 : i32, i32
  }
  func.func @transform_12(%arg0: i32) -> (i32, i32) {
    %c0_i32 = arith.constant 0 : i32
    %c0_i32_0 = arith.constant 0 : i32
    %c0_i32_1 = arith.constant 0 : i32
    return %c0_i32, %c0_i32_0 : i32, i32
  }
  func.func @transform_13(%arg0: i32) -> (i32, i32) {
    %c0_i32 = arith.constant 0 : i32
    %c0_i32_0 = arith.constant 0 : i32
    %c0_i32_1 = arith.constant 0 : i32
    return %c0_i32, %c0_i32_0 : i32, i32
  }
  func.func @transform_14(%arg0: i32) -> (i32, i32) {
    %c0_i32 = arith.constant 0 : i32
    %c0_i32_0 = arith.constant 0 : i32
    %c0_i32_1 = arith.constant 0 : i32
    return %c0_i32, %c0_i32_0 : i32, i32
  }
  func.func @transform_15(%arg0: i32) -> (i32, i32) {
    %c0_i32 = arith.constant 0 : i32
    %c0_i32_0 = arith.constant 0 : i32
    return %arg0, %c0_i32 : i32, i32
  }
}

</mosaic_0001>

<llo_original>
// kernel: custom-call.2
$region0: #{custom-call.2}
  %s0 = inlined_call_operand.vmem [shape: c64[12,8,8], index: 0, kind: input, shape index: {}]
  %s1 = inlined_call_operand.vmem [shape: f32[12,8,8], index: 1, kind: output, shape index: {}]
  %v2 = vld [vmem:[%s0] sm:$0xff]
  %3 = vst [vmem:[%s1] sm:$0xff] %v2
  %s4 = scalar_lea.vmem %s1, 8
  %s5 = scalar_lea.vmem %s0, 8
  %v6 = vld [vmem:[%s5] sm:$0xff]
  %7 = vst [vmem:[%s4] sm:$0xff] %v6
  %s8 = scalar_lea.vmem %s1, 16
  %s9 = scalar_lea.vmem %s0, 16
  %v10 = vld [vmem:[%s9] sm:$0xff]
  %11 = vst [vmem:[%s8] sm:$0xff] %v10
  %s12 = scalar_lea.vmem %s1, 24
  %s13 = scalar_lea.vmem %s0, 24
  %v14 = vld [vmem:[%s13] sm:$0xff]
  %15 = vst [vmem:[%s12] sm:$0xff] %v14
  %s16 = scalar_lea.vmem %s1, 32
  %s17 = scalar_lea.vmem %s0, 32
  %v18 = vld [vmem:[%s17] sm:$0xff]
  %19 = vst [vmem:[%s16] sm:$0xff] %v18
  %s20 = scalar_lea.vmem %s1, 40
  %s21 = scalar_lea.vmem %s0, 40
  %v22 = vld [vmem:[%s21] sm:$0xff]
  %23 = vst [vmem:[%s20] sm:$0xff] %v22
  %s24 = scalar_lea.vmem %s1, 48
  %s25 = scalar_lea.vmem %s0, 48
  %v26 = vld [vmem:[%s25] sm:$0xff]
  %27 = vst [vmem:[%s24] sm:$0xff] %v26
  %s28 = scalar_lea.vmem %s1, 56
  %s29 = scalar_lea.vmem %s0, 56
  %v30 = vld [vmem:[%s29] sm:$0xff]
  %31 = vst [vmem:[%s28] sm:$0xff] %v30
  %s32 = scalar_lea.vmem %s1, 64
  %s33 = scalar_lea.vmem %s0, 64
  %v34 = vld [vmem:[%s33] sm:$0xff]
  %35 = vst [vmem:[%s32] sm:$0xff] %v34
  %s36 = scalar_lea.vmem %s1, 72
  %s37 = scalar_lea.vmem %s0, 72
  %v38 = vld [vmem:[%s37] sm:$0xff]
  %39 = vst [vmem:[%s36] sm:$0xff] %v38
  %s40 = scalar_lea.vmem %s1, 80
  %s41 = scalar_lea.vmem %s0, 80
  %v42 = vld [vmem:[%s41] sm:$0xff]
  %43 = vst [vmem:[%s40] sm:$0xff] %v42
  %s44 = scalar_lea.vmem %s1, 88
  %s45 = scalar_lea.vmem %s0, 88
  %v46 = vld [vmem:[%s45] sm:$0xff]
  %47 = vst [vmem:[%s44] sm:$0xff] %v46

// kernel: custom-call.3
$region0: #{custom-call.3}
  %s0 = inlined_call_operand.vmem [shape: c64[12,8,8], index: 0, kind: input, shape index: {}]
  %s1 = inlined_call_operand.vmem [shape: f32[12,8,8], index: 1, kind: output, shape index: {}]
  %s2 = scalar_lea.vmem %s0, 96
  %v3 = vld [vmem:[%s2] sm:$0xff]
  %4 = vst [vmem:[%s1] sm:$0xff] %v3
  %s5 = scalar_lea.vmem %s1, 8
  %s6 = scalar_lea.vmem %s2, 8
  %v7 = vld [vmem:[%s6] sm:$0xff]
  %8 = vst [vmem:[%s5] sm:$0xff] %v7
  %s9 = scalar_lea.vmem %s1, 16
  %s10 = scalar_lea.vmem %s2, 16
  %v11 = vld [vmem:[%s10] sm:$0xff]
  %12 = vst [vmem:[%s9] sm:$0xff] %v11
  %s13 = scalar_lea.vmem %s1, 24
  %s14 = scalar_lea.vmem %s2, 24
  %v15 = vld [vmem:[%s14] sm:$0xff]
  %16 = vst [vmem:[%s13] sm:$0xff] %v15
  %s17 = scalar_lea.vmem %s1, 32
  %s18 = scalar_lea.vmem %s2, 32
  %v19 = vld [vmem:[%s18] sm:$0xff]
  %20 = vst [vmem:[%s17] sm:$0xff] %v19
  %s21 = scalar_lea.vmem %s1, 40
  %s22 = scalar_lea.vmem %s2, 40
  %v23 = vld [vmem:[%s22] sm:$0xff]
  %24 = vst [vmem:[%s21] sm:$0xff] %v23
  %s25 = scalar_lea.vmem %s1, 48
  %s26 = scalar_lea.vmem %s2, 48
  %v27 = vld [vmem:[%s26] sm:$0xff]
  %28 = vst [vmem:[%s25] sm:$0xff] %v27
  %s29 = scalar_lea.vmem %s1, 56
  %s30 = scalar_lea.vmem %s2, 56
  %v31 = vld [vmem:[%s30] sm:$0xff]
  %32 = vst [vmem:[%s29] sm:$0xff] %v31
  %s33 = scalar_lea.vmem %s1, 64
  %s34 = scalar_lea.vmem %s2, 64
  %v35 = vld [vmem:[%s34] sm:$0xff]
  %36 = vst [vmem:[%s33] sm:$0xff] %v35
  %s37 = scalar_lea.vmem %s1, 72
  %s38 = scalar_lea.vmem %s2, 72
  %v39 = vld [vmem:[%s38] sm:$0xff]
  %40 = vst [vmem:[%s37] sm:$0xff] %v39
  %s41 = scalar_lea.vmem %s1, 80
  %s42 = scalar_lea.vmem %s2, 80
  %v43 = vld [vmem:[%s42] sm:$0xff]
  %44 = vst [vmem:[%s41] sm:$0xff] %v43
  %s45 = scalar_lea.vmem %s1, 88
  %s46 = scalar_lea.vmem %s2, 88
  %v47 = vld [vmem:[%s46] sm:$0xff]
  %48 = vst [vmem:[%s45] sm:$0xff] %v47

// kernel: custom-call
$region0: #{custom-call}
  %s0 = inlined_call_operand.hbm [shape: c64[9,8,8], index: 0, kind: input, shape index: {}]
  %s1 = inlined_call_operand.vmem [shape: f32[9,8,8], index: 1, kind: output, shape index: {}]
  $region1: #{custom-call} parent=0
    #allocation0 [shape = 's32[1]{0}', space=sflag, size = 0x4, scoped, tag = 'scoped memory for custom-call']
    %2 = vsyncpa [#allocation0], 0
    %s3 = sshll.u32 %s1, 4
    %s4 = int_to_ptr.vmem [resolvable:$true] %s3
    %6 = dma.hbm_to_vmem [thread:$0]  %s0, 1024, %s4, [#allocation0]
    %7 = dma.done [#allocation0], 1024
    %8 = vsyncpa [#allocation0], 1

// kernel: custom-call.1
$region0: #{custom-call.1}
  %s0 = inlined_call_operand.hbm [shape: c64[9,8,8], index: 0, kind: input, shape index: {}]
  %s1 = inlined_call_operand.vmem [shape: f32[9,8,8], index: 1, kind: output, shape index: {}]
  %s2 = scalar_lea.hbm %s0, 1024
  $region1: #{custom-call.1} parent=0
    #allocation0 [shape = 's32[1]{0}', space=sflag, size = 0x4, scoped, tag = 'scoped memory for custom-call.1']
    %3 = vsyncpa [#allocation0], 0
    %s4 = sshll.u32 %s1, 4
    %s5 = int_to_ptr.vmem [resolvable:$true] %s4
    %7 = dma.hbm_to_vmem [thread:$0]  %s2, 1024, %s5, [#allocation0]
    %8 = dma.done [#allocation0], 1024
    %9 = vsyncpa [#allocation0], 1

// kernel: quixer_forward.1
$region0: #{quixer_forward.1}
  #allocation0 [shape = 'u32[]', space=smem, size = 0x4, offset = 0x4, fixed_abs, tag = 'smem constant byte address 0x4 - core index']
  #allocation1 [shape = 'u32[144,128]{1,0:T(1,128)}', space=vmem, size = 0x12000, scoped, tag = 'internal scratch']
  %s0 = inlined_call_operand.vmem [shape: f32[4], index: 0, kind: input, shape index: {}]
  %s1 = inlined_call_operand.vmem [shape: f32[1,16,16], index: 1, kind: input, shape index: {}]
  %s2 = inlined_call_operand.vmem [shape: f32[12,16], index: 2, kind: input, shape index: {}]
  %s3 = inlined_call_operand.vmem [shape: f32[12,1], index: 3, kind: input, shape index: {}]
  %s4 = inlined_call_operand.vmem [shape: f32[16,256], index: 4, kind: input, shape index: {}]
  %s5 = inlined_call_operand.vmem [shape: f32[32,128], index: 5, kind: input, shape index: {}]
  %s6 = inlined_call_operand.vmem [shape: f32[12,384,128], index: 6, kind: input, shape index: {}]
  %s7 = inlined_call_operand.vmem [shape: f32[128,16], index: 7, kind: input, shape index: {}]
  %s8 = inlined_call_operand.vmem [shape: f32[16,256], index: 8, kind: input, shape index: {}]
  %s9 = inlined_call_operand.vmem [shape: f32[16,256], index: 9, kind: input, shape index: {}]
  %s10 = inlined_call_operand.vmem [shape: f32[256,9], index: 10, kind: input, shape index: {}]
  %s11 = inlined_call_operand.vmem [shape: f32[9,16], index: 11, kind: input, shape index: {}]
  %s12 = inlined_call_operand.vmem [shape: f32[1,16], index: 12, kind: input, shape index: {}]
  %s13 = inlined_call_operand.vmem [shape: f32[16,128], index: 13, kind: input, shape index: {}]
  %s14 = inlined_call_operand.vmem [shape: f32[1,128], index: 14, kind: input, shape index: {}]
  %s15 = inlined_call_operand.vmem [shape: f32[2,128], index: 15, kind: output, shape index: {}]
  %s16 = sld [smem:[#allocation0]]
  $region74: #{quixer_forward.1} parent=0
    _
  %s18 = ssub.s32 1, %s16
  %s19 = scalar_select 0, %s18, %s16
  $region1: #{quixer_forward.1} parent=0
    #allocation2 [shape = 'u8[512]{0}', space=smem, size = 0x200, scoped, tag = 'input window, operand 0, single buffered']
    #allocation3 [shape = 's32[1]{0}', space=sflag, size = 0x4, scoped, tag = 'scoped memory for quixer_forward.1']
    %20 = vsyncpa [#allocation3], 0
    // Predicated region
    $region2: #{quixer_forward.1} parent=1 // pred_check
      _
    $region3: #{quixer_forward.1} parent=1 // pred_check_branch
      %22 = sbr.rel (0) target = $region5
    $region4: #{quixer_forward.1} parent=1 // pred_region
      %s24 = ssub.s32 16, 16
      %25 = vsyncadd [#allocation3], %s24
      %s27 = sshll.u32 %s0, 4
      %s28 = int_to_ptr.vmem [resolvable:$true] %s27
      %30 = dma.vmem_to_smem %s28, 16, [#allocation2], [#allocation3]
    $region5: #{quixer_forward.1} parent=1 // pred_fallthru
      _
    // Predicated region
    $region6: #{quixer_forward.1} parent=1 // pred_check
      _
    $region7: #{quixer_forward.1} parent=1 // pred_check_branch
      %32 = sbr.rel (0) target = $region9
    $region8: #{quixer_forward.1} parent=1 // pred_region
      _
    $region9: #{quixer_forward.1} parent=1 // pred_fallthru
      _
    // Predicated region
    $region10: #{quixer_forward.1} parent=1 // pred_check
      _
    $region11: #{quixer_forward.1} parent=1 // pred_check_branch
      %34 = sbr.rel (0) target = $region13
    $region12: #{quixer_forward.1} parent=1 // pred_region
      _
    $region13: #{quixer_forward.1} parent=1 // pred_fallthru
      _
    // Predicated region
    $region14: #{quixer_forward.1} parent=1 // pred_check
      _
    $region15: #{quixer_forward.1} parent=1 // pred_check_branch
      %36 = sbr.rel (0) target = $region17
    $region16: #{quixer_forward.1} parent=1 // pred_region
      _
    $region17: #{quixer_forward.1} parent=1 // pred_fallthru
      _
    // Predicated region
    $region18: #{quixer_forward.1} parent=1 // pred_check
      _
    $region19: #{quixer_forward.1} parent=1 // pred_check_branch
      %38 = sbr.rel (0) target = $region21
    $region20: #{quixer_forward.1} parent=1 // pred_region
      _
    $region21: #{quixer_forward.1} parent=1 // pred_fallthru
      _
    // Predicated region
    $region22: #{quixer_forward.1} parent=1 // pred_check
      _
    $region23: #{quixer_forward.1} parent=1 // pred_check_branch
      %40 = sbr.rel (0) target = $region25
    $region24: #{quixer_forward.1} parent=1 // pred_region
      _
    $region25: #{quixer_forward.1} parent=1 // pred_fallthru
      _
    // Predicated region
    $region26: #{quixer_forward.1} parent=1 // pred_check
      _
    $region27: #{quixer_forward.1} parent=1 // pred_check_branch
      %42 = sbr.rel (0) target = $region29
    $region28: #{quixer_forward.1} parent=1 // pred_region
      _
    $region29: #{quixer_forward.1} parent=1 // pred_fallthru
      _
    // Predicated region
    $region30: #{quixer_forward.1} parent=1 // pred_check
      _
    $region31: #{quixer_forward.1} parent=1 // pred_check_branch
      %44 = sbr.rel (0) target = $region33
    $region32: #{quixer_forward.1} parent=1 // pred_region
      _
    $region33: #{quixer_forward.1} parent=1 // pred_fallthru
      _
    // Predicated region
    $region34: #{quixer_forward.1} parent=1 // pred_check
      _
    $region35: #{quixer_forward.1} parent=1 // pred_check_branch
      %46 = sbr.rel (0) target = $region37
    $region36: #{quixer_forward.1} parent=1 // pred_region
      _
    $region37: #{quixer_forward.1} parent=1 // pred_fallthru
      _
    // Predicated region
    $region38: #{quixer_forward.1} parent=1 // pred_check
      _
    $region39: #{quixer_forward.1} parent=1 // pred_check_branch
      %48 = sbr.rel (0) target = $region41
    $region40: #{quixer_forward.1} parent=1 // pred_region
      _
    $region41: #{quixer_forward.1} parent=1 // pred_fallthru
      _
    // Predicated region
    $region42: #{quixer_forward.1} parent=1 // pred_check
      _
    $region43: #{quixer_forward.1} parent=1 // pred_check_branch
      %50 = sbr.rel (0) target = $region45
    $region44: #{quixer_forward.1} parent=1 // pred_region
      _
    $region45: #{quixer_forward.1} parent=1 // pred_fallthru
      _
    // Predicated region
    $region46: #{quixer_forward.1} parent=1 // pred_check
      _
    $region47: #{quixer_forward.1} parent=1 // pred_check_branch
      %52 = sbr.rel (0) target = $region49
    $region48: #{quixer_forward.1} parent=1 // pred_region
      _
    $region49: #{quixer_forward.1} parent=1 // pred_fallthru
      _
    // Predicated region
    $region50: #{quixer_forward.1} parent=1 // pred_check
      _
    $region51: #{quixer_forward.1} parent=1 // pred_check_branch
      %54 = sbr.rel (0) target = $region53
    $region52: #{quixer_forward.1} parent=1 // pred_region
      _
    $region53: #{quixer_forward.1} parent=1 // pred_fallthru
      _
    // Predicated region
    $region54: #{quixer_forward.1} parent=1 // pred_check
      _
    $region55: #{quixer_forward.1} parent=1 // pred_check_branch
      %56 = sbr.rel (0) target = $region57
    $region56: #{quixer_forward.1} parent=1 // pred_region
      _
    $region57: #{quixer_forward.1} parent=1 // pred_fallthru
      _
    // Predicated region
    $region58: #{quixer_forward.1} parent=1 // pred_check
      _
    $region59: #{quixer_forward.1} parent=1 // pred_check_branch
      %58 = sbr.rel (0) target = $region61
    $region60: #{quixer_forward.1} parent=1 // pred_region
      _
    $region61: #{quixer_forward.1} parent=1 // pred_fallthru
      _
    // Predicated region
    $region62: #{quixer_forward.1} parent=1 // pred_check
      _
    $region63: #{quixer_forward.1} parent=1 // pred_check_branch
      %60 = sbr.rel (0) target = $region65
    $region64: #{quixer_forward.1} parent=1 // pred_region
      %61 = dma.done [#allocation3], 16
    $region65: #{quixer_forward.1} parent=1 // pred_fallthru
      _
    %62 = sfence
    %v63 = vld [vmem:[%s2] sm:$0xff]
    %v64 = vld [vmem:[%s2 + $0x8] sm:$0xf]
    %v65 = vld [vmem:[%s1] sm:$0xff]
    %v66 = vld [vmem:[%s1 + $0x8] sm:$0xff]
    %v67 = vld [vmem:[%s3] sm:$0xff]
    %v68 = vld [vmem:[%s3 + $0x8] sm:$0xf]
    %70 = vset.pattern.permute.xlu0 0
    %71 = vperm.xlu0 %70, %v67
    %v72 = vpop.permute.xlu0 %71
    %75 = vset.pattern.permute.xlu0 0
    %76 = vperm.xlu0 %75, %v68
    %v77 = vpop.permute.xlu0 %76
    %vm79 = vcmask 130048
    %v81 = vsel %vm79, %v63, 0
    %v84 = vsel %vm79, %v64, 0
    %86 = vmatprep.subr.mxu0 0.0
    %87 = vmatpush1.msra.mxu0 %v65
    %88 = vmatprep.subr.mxu0 0.0
    %89 = vmatpush1.msra.mxu0 %v66
    %90 = vmatprep.subr.mxu0 0.0
    %91 = vmatpush1.msra.mxu0 0.0
    %92 = vmatprep.subr.mxu0 0.0
    %93 = vmatpush1.msra.mxu0 0.0
    %94 = vmatprep.subr.mxu0 0.0
    %95 = vmatpush1.msra.mxu0 0.0
    %96 = vmatprep.subr.mxu0 0.0
    %97 = vmatpush1.msra.mxu0 0.0
    %98 = vmatprep.subr.mxu0 0.0
    %99 = vmatpush1.msra.mxu0 0.0
    %100 = vmatprep.subr.mxu0 0.0
    %101 = vmatpush1.msra.mxu0 0.0
    %102 = vmatprep.subr.mxu0 0.0
    %103 = vmatpush1.msra.mxu0 0.0
    %104 = vmatprep.subr.mxu0 0.0
    %105 = vmatpush1.msra.mxu0 0.0
    %106 = vmatprep.subr.mxu0 0.0
    %107 = vmatpush1.msra.mxu0 0.0
    %108 = vmatprep.subr.mxu0 0.0
    %109 = vmatpush1.msra.mxu0 0.0
    %110 = vmatprep.subr.mxu0 0.0
    %111 = vmatpush1.msra.mxu0 0.0
    %112 = vmatprep.subr.mxu0 0.0
    %113 = vmatpush1.msra.mxu0 0.0
    %114 = vmatprep.subr.mxu0 0.0
    %115 = vmatpush1.msra.mxu0 0.0
    %116 = vmatprep.subr.mxu0 0.0
    %117 = vmatpush1.msra.mxu0 0.0
    %118 = vmatprep.subr.mxu0 0.0
    %119 = vmatpush1.msra.mxu0 0.0
    %120 = vmatprep.subr.mxu0 0.0
    %121 = vmatpush1.msra.mxu0 0.0
    %122 = vmatprep.subr.mxu0 0.0
    %123 = vmatpush1.msra.mxu0 0.0
    %124 = vmatprep.subr.mxu0 0.0
    %125 = vmatpush1.msra.mxu0 0.0
    %126 = vmatprep.subr.mxu0 0.0
    %127 = vmatpush1.msra.mxu0 0.0
    %128 = vmatprep.subr.mxu0 0.0
    %129 = vmatpush1.msra.mxu0 0.0
    %130 = vmatprep.subr.mxu0 0.0
    %131 = vmatpush1.msra.mxu0 0.0
    %132 = vmatprep.subr.mxu0 0.0
    %133 = vmatpush1.msra.mxu0 0.0
    %134 = vmatprep.subr.mxu0 0.0
    %135 = vmatpush1.msra.mxu0 0.0
    %136 = vmatprep.subr.mxu0 0.0
    %137 = vmatpush1.msra.mxu0 0.0
    %138 = vmatprep.subr.mxu0 0.0
    %139 = vmatpush1.msra.mxu0 0.0
    %140 = vmatprep.subr.mxu0 0.0
    %141 = vmatpush1.msra.mxu0 0.0
    %142 = vmatprep.subr.mxu0 0.0
    %143 = vmatpush1.msra.mxu0 0.0
    %144 = vmatprep.subr.mxu0 0.0
    %145 = vmatpush1.msra.mxu0 0.0
    %146 = vmatprep.subr.mxu0 0.0
    %147 = vmatpush1.msra.mxu0 0.0
    %148 = vmatprep.subr.mxu0 0.0
    %149 = vmatpush1.msra.mxu0 0.0
    %150 = vmatprep.mubr.f32.mxu0 0.0
    %151 = vmatmul.mubr.f32.gmra.mrb[0].mxu0 %v81
    %v152 = vpop.f32.mrb[0].mxu0
    %v153 = vadd.f32 %v72, %v152
    %v154 = vpop.f32.mrb[0].mxu0
    %155 = vmatprep.mubr.f32.mxu0 0.0
    %156 = vmatmul.mubr.f32.gmra.mrb[0].mxu0 %v84
    %v157 = vpop.f32.mrb[0].mxu0
    %v158 = vadd.f32 %v77, %v157
    %v159 = vpop.f32.mrb[0].mxu0
    %160 = vdwg.mxu0
    %v161 = vmul.f32 %v153, 0.5
    %v162 = vmul.f32 %v158, 0.5
    %v163 = vand.u32 2147483647, %v161
    %vm164 = vcmp.le.f32.partialorder %v163, 0.7853982
    %vm165 = vcmp.lt.s32.totalorder %v161, 0
    %v166 = vand.u32 %v161, 2139095040
    %v167 = vshrl.u32 %v166, 23
    %v168 = vsub.s32 %v167, 127
    %v169 = vand.u32 2147483647, %v161
    %v170 = vand.u32 %v169, 8388607
    %v171 = vor.u32 %v170, 8388608
    %v172 = vsub.s32 0, %v171
    %v173 = vadd.s32 %v168, 1
    %vm174 = vcmp.gt.s32.totalorder %v173, 0
    %v175 = vsel %vm174, %v173, 0
    %v176 = vshrl.u32 %v175, 5
    %v177 = vand.u32 %v175, 31
    %v178 = vsub.s32 32, %v177
    %v179 = vshrl.u32 683565275, %v178
    %v180 = vshll.u32 683565275, %v177
    %v181 = vshrl.u32 2475754826, %v178
    %v182 = vor.u32 %v180, %v181
    %v183 = vshll.u32 2475754826, %v177
    %v184 = vshrl.u32 2131351028, %v178
    %v185 = vor.u32 %v183, %v184
    %v186 = vshll.u32 2131351028, %v177
    %v187 = vshrl.u32 2102212464, %v178
    %v188 = vor.u32 %v186, %v187
    %v189 = vshll.u32 2102212464, %v177
    %v190 = vshrl.u32 920167782, %v178
    %v191 = vor.u32 %v189, %v190
    %v192 = vshll.u32 920167782, %v177
    %v193 = vshrl.u32 1326507024, %v178
    %v194 = vor.u32 %v192, %v193
    %vm195 = vcmp.lt.s32.totalorder %v176, 1
    %vm196 = vcmp.lt.s32.totalorder %v176, 2
    %vm197 = vcmp.lt.s32.totalorder %v176, 3
    %vm198 = vcmp.lt.s32.totalorder %v176, 4
    %v199 = vsel %vm195, %v179, %v182
    %v200 = vsel %vm198, %v188, 2102212464
    %v201 = vsel %vm197, %v185, %v200
    %v202 = vsel %vm196, %v199, %v201
    %v203 = vsel %vm195, %v182, %v185
    %v204 = vsel %vm198, %v191, 920167782
    %v205 = vsel %vm197, %v188, %v204
    %v206 = vsel %vm196, %v203, %v205
    %v207 = vsel %vm195, %v185, %v188
    %v208 = vsel %vm198, %v194, 1326507024
    %v209 = vsel %vm197, %v191, %v208
    %v210 = vsel %vm196, %v207, %v209
    %v211 = vshll.u32 %v171, 8
    %v212 = vmul.u32.u64.compose %v211, %v210
    %v213 = vextract.low.u32 %v212
    %v214 = vextract.high.u32 %v212
    %v215 = vmul.u32.u64.compose %v211, %v206
    %v216 = vextract.low.u32 %v215
    %v217 = vextract.high.u32 %v215
    %v218 = vmul.u32 %v211, %v202
    %v219 = vadd.s32 %v214, %v216
    %vm220 = vc.u32 %v214, %v216
    %v221 = vadd.s32 %v217, 1
    %v222 = vsel %vm220, %v221, %v217
    %v223 = vadd.s32 %v218, %v222
    %v224 = vadd.s32 %v223, 536870912
    %v225 = vshrl.u32 %v224, 30
    %v226 = vshll.u32 %v225, 30
    %v227 = vsub.s32 %v223, %v226
    %vm228 = vcmp.lt.s32.totalorder %v227, 0
    %v229 = vsub.s32 0, %v227
    %v230 = vsel %vm228, %v229, %v227
    %v231 = vclz %v230
    %v232 = vsub.s32 %v231, 2
    %vm233 = vcmp.gt.s32.totalorder 0, %v232
    %v234 = vsel %vm233, 0, %v232
    %v235 = vsub.s32 32, %v234
    %v236 = vshll.u32 %v227, %v234
    %v237 = vshrl.u32 %v219, %v235
    %v238 = vor.u32 %v236, %v237
    %v239 = vsub.s32 4294967266, %v234
    %v240 = vadd.s32 %v239, 127
    %v241 = vshll.u32 %v240, 23
    %v242 = vor.u32 4788187, %v241
    %v243 = vand.u32 2147483647, %v242
    %v245 = vcvt.s32.f32 %v238
    %v246 = vmul.f32 %v245, %v243
    %v247 = vxor.u32 %v246, 2147483648
    %v248 = vsel %vm165, %v247, %v246
    %v249 = vsub.s32 4, %v225
    %v250 = vsel %vm165, %v249, %v225
    %v251 = vsel %vm164, %v161, %v248
    %v252 = vsel %vm164, 0, %v250
    %v253 = vcosq.f32.pop %v251
    %v254 = vsinq.f32.pop %v251
    %vm255 = vweird.f32 %v161
    %v256 = vand.u32 %v252, 3
    %vm257 = vcmp.lt.s32.totalorder %v256, 2
    %vm258 = vcmp.eq.s32.totalorder %v256, 0
    %v259 = vxor.u32 %v254, 2147483648
    %v260 = vsel %vm258, %v253, %v259
    %vm261 = vcmp.eq.s32.totalorder %v256, 2
    %v262 = vxor.u32 %v253, 2147483648
    %v263 = vsel %vm261, %v262, %v254
    %v264 = vsel %vm257, %v260, %v263
    %v265 = vsel %vm255, nan, %v264
    %v266 = vand.u32 2147483647, %v162
    %vm267 = vcmp.le.f32.partialorder %v266, 0.7853982
    %vm268 = vcmp.lt.s32.totalorder %v162, 0
    %v269 = vand.u32 %v162, 2139095040
    %v270 = vshrl.u32 %v269, 23
    %v271 = vsub.s32 %v270, 127
    %v272 = vand.u32 2147483647, %v162
    %v273 = vand.u32 %v272, 8388607
    %v274 = vor.u32 %v273, 8388608
    %v275 = vsub.s32 0, %v274
    %v276 = vadd.s32 %v271, 1
    %vm277 = vcmp.gt.s32.totalorder %v276, 0
    %v278 = vsel %vm277, %v276, 0
    %v279 = vshrl.u32 %v278, 5
    %v280 = vand.u32 %v278, 31
    %v281 = vsub.s32 32, %v280
    %v282 = vshrl.u32 683565275, %v281
    %v283 = vshll.u32 683565275, %v280
    %v284 = vshrl.u32 2475754826, %v281
    %v285 = vor.u32 %v283, %v284
    %v286 = vshll.u32 2475754826, %v280
    %v287 = vshrl.u32 2131351028, %v281
    %v288 = vor.u32 %v286, %v287
    %v289 = vshll.u32 2131351028, %v280
    %v290 = vshrl.u32 2102212464, %v281
    %v291 = vor.u32 %v289, %v290
    %v292 = vshll.u32 2102212464, %v280
    %v293 = vshrl.u32 920167782, %v281
    %v294 = vor.u32 %v292, %v293
    %v295 = vshll.u32 920167782, %v280
    %v296 = vshrl.u32 1326507024, %v281
    %v297 = vor.u32 %v295, %v296
    %vm298 = vcmp.lt.s32.totalorder %v279, 1
    %vm299 = vcmp.lt.s32.totalorder %v279, 2
    %vm300 = vcmp.lt.s32.totalorder %v279, 3
    %vm301 = vcmp.lt.s32.totalorder %v279, 4
    %v302 = vsel %vm298, %v282, %v285
    %v303 = vsel %vm301, %v291, 2102212464
    %v304 = vsel %vm300, %v288, %v303
    %v305 = vsel %vm299, %v302, %v304
    %v306 = vsel %vm298, %v285, %v288
    %v307 = vsel %vm301, %v294, 920167782
    %v308 = vsel %vm300, %v291, %v307
    %v309 = vsel %vm299, %v306, %v308
    %v310 = vsel %vm298, %v288, %v291
    %v311 = vsel %vm301, %v297, 1326507024
    %v312 = vsel %vm300, %v294, %v311
    %v313 = vsel %vm299, %v310, %v312
    %v314 = vshll.u32 %v274, 8
    %v315 = vmul.u32.u64.compose %v314, %v313
    %v316 = vextract.low.u32 %v315
    %v317 = vextract.high.u32 %v315
    %v318 = vmul.u32.u64.compose %v314, %v309
    %v319 = vextract.low.u32 %v318
    %v320 = vextract.high.u32 %v318
    %v321 = vmul.u32 %v314, %v305
    %v322 = vadd.s32 %v317, %v319
    %vm323 = vc.u32 %v317, %v319
    %v324 = vadd.s32 %v320, 1
    %v325 = vsel %vm323, %v324, %v320
    %v326 = vadd.s32 %v321, %v325
    %v327 = vadd.s32 %v326, 536870912
    %v328 = vshrl.u32 %v327, 30
    %v329 = vshll.u32 %v328, 30
    %v330 = vsub.s32 %v326, %v329
    %vm331 = vcmp.lt.s32.totalorder %v330, 0
    %v332 = vsub.s32 0, %v330
    %v333 = vsel %vm331, %v332, %v330
    %v334 = vclz %v333
    %v335 = vsub.s32 %v334, 2
    %vm336 = vcmp.gt.s32.totalorder 0, %v335
    %v337 = vsel %vm336, 0, %v335
    %v338 = vsub.s32 32, %v337
    %v339 = vshll.u32 %v330, %v337
    %v340 = vshrl.u32 %v322, %v338
    %v341 = vor.u32 %v339, %v340
    %v342 = vsub.s32 4294967266, %v337
    %v343 = vadd.s32 %v342, 127
    %v344 = vshll.u32 %v343, 23
    %v345 = vor.u32 4788187, %v344
    %v346 = vand.u32 2147483647, %v345
    %v348 = vcvt.s32.f32 %v341
    %v349 = vmul.f32 %v348, %v346
    %v350 = vxor.u32 %v349, 2147483648
    %v351 = vsel %vm268, %v350, %v349
    %v352 = vsub.s32 4, %v328
    %v353 = vsel %vm268, %v352, %v328
    %v354 = vsel %vm267, %v162, %v351
    %v355 = vsel %vm267, 0, %v353
    %v356 = vcosq.f32.pop %v354
    %v357 = vsinq.f32.pop %v354
    %vm358 = vweird.f32 %v162
    %v359 = vand.u32 %v355, 3
    %vm360 = vcmp.lt.s32.totalorder %v359, 2
    %vm361 = vcmp.eq.s32.totalorder %v359, 0
    %v362 = vxor.u32 %v357, 2147483648
    %v363 = vsel %vm361, %v356, %v362
    %vm364 = vcmp.eq.s32.totalorder %v359, 2
    %v365 = vxor.u32 %v356, 2147483648
    %v366 = vsel %vm364, %v365, %v357
    %v367 = vsel %vm360, %v363, %v366
    %v368 = vsel %vm358, nan, %v367
    %v369 = vld [vmem:[%s4] sm:$0xff]
    %v370 = vld [vmem:[%s4 + $0x8] sm:$0xff]
    %v371 = vld [vmem:[%s4 + $0x10] sm:$0xff]
    %v372 = vld [vmem:[%s4 + $0x18] sm:$0xff]
    %v374 = vsel %vm79, %v265, 0
    %v377 = vsel %vm79, %v368, 0
    %379 = vmatprep.subr.mxu0 %v370
    %380 = vmatpush1.msra.mxu0 %v369
    %381 = vmatprep.subr.mxu0 %v372
    %382 = vmatpush1.msra.mxu0 %v371
    %383 = vmatprep.subr.mxu0 0.0
    %384 = vmatpush1.msra.mxu0 0.0
    %385 = vmatprep.subr.mxu0 0.0
    %386 = vmatpush1.msra.mxu0 0.0
    %387 = vmatprep.subr.mxu0 0.0
    %388 = vmatpush1.msra.mxu0 0.0
    %389 = vmatprep.subr.mxu0 0.0
    %390 = vmatpush1.msra.mxu0 0.0
    %391 = vmatprep.subr.mxu0 0.0
    %392 = vmatpush1.msra.mxu0 0.0
    %393 = vmatprep.subr.mxu0 0.0
    %394 = vmatpush1.msra.mxu0 0.0
    %395 = vmatprep.subr.mxu0 0.0
    %396 = vmatpush1.msra.mxu0 0.0
    %397 = vmatprep.subr.mxu0 0.0
    %398 = vmatpush1.msra.mxu0 0.0
    %399 = vmatprep.subr.mxu0 0.0
    %400 = vmatpush1.msra.mxu0 0.0
    %401 = vmatprep.subr.mxu0 0.0
    %402 = vmatpush1.msra.mxu0 0.0
    %403 = vmatprep.subr.mxu0 0.0
    %404 = vmatpush1.msra.mxu0 0.0
    %405 = vmatprep.subr.mxu0 0.0
    %406 = vmatpush1.msra.mxu0 0.0
    %407 = vmatprep.subr.mxu0 0.0
    %408 = vmatpush1.msra.mxu0 0.0
    %409 = vmatprep.subr.mxu0 0.0
    %410 = vmatpush1.msra.mxu0 0.0
    %411 = vmatprep.subr.mxu0 0.0
    %412 = vmatpush1.msra.mxu0 0.0
    %413 = vmatprep.subr.mxu0 0.0
    %414 = vmatpush1.msra.mxu0 0.0
    %415 = vmatprep.subr.mxu0 0.0
    %416 = vmatpush1.msra.mxu0 0.0
    %417 = vmatprep.subr.mxu0 0.0
    %418 = vmatpush1.msra.mxu0 0.0
    %419 = vmatprep.subr.mxu0 0.0
    %420 = vmatpush1.msra.mxu0 0.0
    %421 = vmatprep.subr.mxu0 0.0
    %422 = vmatpush1.msra.mxu0 0.0
    %423 = vmatprep.subr.mxu0 0.0
    %424 = vmatpush1.msra.mxu0 0.0
    %425 = vmatprep.subr.mxu0 0.0
    %426 = vmatpush1.msra.mxu0 0.0
    %427 = vmatprep.subr.mxu0 0.0
    %428 = vmatpush1.msra.mxu0 0.0
    %429 = vmatprep.subr.mxu0 0.0
    %430 = vmatpush1.msra.mxu0 0.0
    %431 = vmatprep.subr.mxu0 0.0
    %432 = vmatpush1.msra.mxu0 0.0
    %433 = vmatprep.subr.mxu0 0.0
    %434 = vmatpush1.msra.mxu0 0.0
    %435 = vmatprep.subr.mxu0 0.0
    %436 = vmatpush1.msra.mxu0 0.0
    %437 = vmatprep.subr.mxu0 0.0
    %438 = vmatpush1.msra.mxu0 0.0
    %439 = vmatprep.subr.mxu0 0.0
    %440 = vmatpush1.msra.mxu0 0.0
    %441 = vmatprep.subr.mxu0 0.0
    %442 = vmatpush1.msra.mxu0 0.0
    %443 = vmatprep.mubr.f32.mxu0 0.0
    %444 = vmatmul.mubr.f32.gmra.mrb[0].mxu0 %v374
    %v445 = vpop.f32.mrb[0].mxu0
    %v446 = vadd.f32 0.0, %v445
    %v447 = vpop.f32.mrb[0].mxu0
    %v448 = vadd.f32 0.0, %v447
    %449 = vmatprep.mubr.f32.mxu0 0.0
    %450 = vmatmul.mubr.f32.gmra.mrb[0].mxu0 %v377
    %v451 = vpop.f32.mrb[0].mxu0
    %v452 = vadd.f32 0.0, %v451
    %v453 = vpop.f32.mrb[0].mxu0
    %v454 = vadd.f32 0.0, %v453
    %455 = vdwg.mxu0
    %v456 = vand.u32 2147483647, %v161
    %vm457 = vcmp.le.f32.partialorder %v456, 0.7853982
    %vm458 = vcmp.lt.s32.totalorder %v161, 0
    %v459 = vand.u32 %v161, 2139095040
    %v460 = vshrl.u32 %v459, 23
    %v461 = vsub.s32 %v460, 127
    %v462 = vand.u32 2147483647, %v161
    %v463 = vand.u32 %v462, 8388607
    %v464 = vor.u32 %v463, 8388608
    %v465 = vsub.s32 0, %v464
    %v466 = vadd.s32 %v461, 1
    %vm467 = vcmp.gt.s32.totalorder %v466, 0
    %v468 = vsel %vm467, %v466, 0
    %v469 = vshrl.u32 %v468, 5
    %v470 = vand.u32 %v468, 31
    %v471 = vsub.s32 32, %v470
    %v472 = vshrl.u32 683565275, %v471
    %v473 = vshll.u32 683565275, %v470
    %v474 = vshrl.u32 2475754826, %v471
    %v475 = vor.u32 %v473, %v474
    %v476 = vshll.u32 2475754826, %v470
    %v477 = vshrl.u32 2131351028, %v471
    %v478 = vor.u32 %v476, %v477
    %v479 = vshll.u32 2131351028, %v470
    %v480 = vshrl.u32 2102212464, %v471
    %v481 = vor.u32 %v479, %v480
    %v482 = vshll.u32 2102212464, %v470
    %v483 = vshrl.u32 920167782, %v471
    %v484 = vor.u32 %v482, %v483
    %v485 = vshll.u32 920167782, %v470
    %v486 = vshrl.u32 1326507024, %v471
    %v487 = vor.u32 %v485, %v486
    %vm488 = vcmp.lt.s32.totalorder %v469, 1
    %vm489 = vcmp.lt.s32.totalorder %v469, 2
    %vm490 = vcmp.lt.s32.totalorder %v469, 3
    %vm491 = vcmp.lt.s32.totalorder %v469, 4
    %v492 = vsel %vm488, %v472, %v475
    %v493 = vsel %vm491, %v481, 2102212464
    %v494 = vsel %vm490, %v478, %v493
    %v495 = vsel %vm489, %v492, %v494
    %v496 = vsel %vm488, %v475, %v478
    %v497 = vsel %vm491, %v484, 920167782
    %v498 = vsel %vm490, %v481, %v497
    %v499 = vsel %vm489, %v496, %v498
    %v500 = vsel %vm488, %v478, %v481
    %v501 = vsel %vm491, %v487, 1326507024
    %v502 = vsel %vm490, %v484, %v501
    %v503 = vsel %vm489, %v500, %v502
    %v504 = vshll.u32 %v464, 8
    %v505 = vmul.u32.u64.compose %v504, %v503
    %v506 = vextract.low.u32 %v505
    %v507 = vextract.high.u32 %v505
    %v508 = vmul.u32.u64.compose %v504, %v499
    %v509 = vextract.low.u32 %v508
    %v510 = vextract.high.u32 %v508
    %v511 = vmul.u32 %v504, %v495
    %v512 = vadd.s32 %v507, %v509
    %vm513 = vc.u32 %v507, %v509
    %v514 = vadd.s32 %v510, 1
    %v515 = vsel %vm513, %v514, %v510
    %v516 = vadd.s32 %v511, %v515
    %v517 = vadd.s32 %v516, 536870912
    %v518 = vshrl.u32 %v517, 30
    %v519 = vshll.u32 %v518, 30
    %v520 = vsub.s32 %v516, %v519
    %vm521 = vcmp.lt.s32.totalorder %v520, 0
    %v522 = vsub.s32 0, %v520
    %v523 = vsel %vm521, %v522, %v520
    %v524 = vclz %v523
    %v525 = vsub.s32 %v524, 2
    %vm526 = vcmp.gt.s32.totalorder 0, %v525
    %v527 = vsel %vm526, 0, %v525
    %v528 = vsub.s32 32, %v527
    %v529 = vshll.u32 %v520, %v527
    %v530 = vshrl.u32 %v512, %v528
    %v531 = vor.u32 %v529, %v530
    %v532 = vsub.s32 4294967266, %v527
    %v533 = vadd.s32 %v532, 127
    %v534 = vshll.u32 %v533, 23
    %v535 = vor.u32 4788187, %v534
    %v536 = vand.u32 2147483647, %v535
    %v538 = vcvt.s32.f32 %v531
    %v539 = vmul.f32 %v538, %v536
    %v540 = vxor.u32 %v539, 2147483648
    %v541 = vsel %vm458, %v540, %v539
    %v542 = vsub.s32 4, %v518
    %v543 = vsel %vm458, %v542, %v518
    %v544 = vsel %vm457, %v161, %v541
    %v545 = vsel %vm457, 0, %v543
    %v546 = vcosq.f32.pop %v544
    %v547 = vsinq.f32.pop %v544
    %vm548 = vweird.f32 %v161
    %v549 = vadd.s32 %v545, 3
    %v550 = vand.u32 %v549, 3
    %vm551 = vcmp.lt.s32.totalorder %v550, 2
    %vm552 = vcmp.eq.s32.totalorder %v550, 0
    %v553 = vxor.u32 %v547, 2147483648
    %v554 = vsel %vm552, %v546, %v553
    %vm555 = vcmp.eq.s32.totalorder %v550, 2
    %v556 = vxor.u32 %v546, 2147483648
    %v557 = vsel %vm555, %v556, %v547
    %v558 = vsel %vm551, %v554, %v557
    %v559 = vsel %vm548, nan, %v558
    %v560 = vand.u32 2147483647, %v162
    %vm561 = vcmp.le.f32.partialorder %v560, 0.7853982
    %vm562 = vcmp.lt.s32.totalorder %v162, 0
    %v563 = vand.u32 %v162, 2139095040
    %v564 = vshrl.u32 %v563, 23
    %v565 = vsub.s32 %v564, 127
    %v566 = vand.u32 2147483647, %v162
    %v567 = vand.u32 %v566, 8388607
    %v568 = vor.u32 %v567, 8388608
    %v569 = vsub.s32 0, %v568
    %v570 = vadd.s32 %v565, 1
    %vm571 = vcmp.gt.s32.totalorder %v570, 0
    %v572 = vsel %vm571, %v570, 0
    %v573 = vshrl.u32 %v572, 5
    %v574 = vand.u32 %v572, 31
    %v575 = vsub.s32 32, %v574
    %v576 = vshrl.u32 683565275, %v575
    %v577 = vshll.u32 683565275, %v574
    %v578 = vshrl.u32 2475754826, %v575
    %v579 = vor.u32 %v577, %v578
    %v580 = vshll.u32 2475754826, %v574
    %v581 = vshrl.u32 2131351028, %v575
    %v582 = vor.u32 %v580, %v581
    %v583 = vshll.u32 2131351028, %v574
    %v584 = vshrl.u32 2102212464, %v575
    %v585 = vor.u32 %v583, %v584
    %v586 = vshll.u32 2102212464, %v574
    %v587 = vshrl.u32 920167782, %v575
    %v588 = vor.u32 %v586, %v587
    %v589 = vshll.u32 920167782, %v574
    %v590 = vshrl.u32 1326507024, %v575
    %v591 = vor.u32 %v589, %v590
    %vm592 = vcmp.lt.s32.totalorder %v573, 1
    %vm593 = vcmp.lt.s32.totalorder %v573, 2
    %vm594 = vcmp.lt.s32.totalorder %v573, 3
    %vm595 = vcmp.lt.s32.totalorder %v573, 4
    %v596 = vsel %vm592, %v576, %v579
    %v597 = vsel %vm595, %v585, 2102212464
    %v598 = vsel %vm594, %v582, %v597
    %v599 = vsel %vm593, %v596, %v598
    %v600 = vsel %vm592, %v579, %v582
    %v601 = vsel %vm595, %v588, 920167782
    %v602 = vsel %vm594, %v585, %v601
    %v603 = vsel %vm593, %v600, %v602
    %v604 = vsel %vm592, %v582, %v585
    %v605 = vsel %vm595, %v591, 1326507024
    %v606 = vsel %vm594, %v588, %v605
    %v607 = vsel %vm593, %v604, %v606
    %v608 = vshll.u32 %v568, 8
    %v609 = vmul.u32.u64.compose %v608, %v607
    %v610 = vextract.low.u32 %v609
    %v611 = vextract.high.u32 %v609
    %v612 = vmul.u32.u64.compose %v608, %v603
    %v613 = vextract.low.u32 %v612
    %v614 = vextract.high.u32 %v612
    %v615 = vmul.u32 %v608, %v599
    %v616 = vadd.s32 %v611, %v613
    %vm617 = vc.u32 %v611, %v613
    %v618 = vadd.s32 %v614, 1
    %v619 = vsel %vm617, %v618, %v614
    %v620 = vadd.s32 %v615, %v619
    %v621 = vadd.s32 %v620, 536870912
    %v622 = vshrl.u32 %v621, 30
    %v623 = vshll.u32 %v622, 30
    %v624 = vsub.s32 %v620, %v623
    %vm625 = vcmp.lt.s32.totalorder %v624, 0
    %v626 = vsub.s32 0, %v624
    %v627 = vsel %vm625, %v626, %v624
    %v628 = vclz %v627
    %v629 = vsub.s32 %v628, 2
    %vm630 = vcmp.gt.s32.totalorder 0, %v629
    %v631 = vsel %vm630, 0, %v629
    %v632 = vsub.s32 32, %v631
    %v633 = vshll.u32 %v624, %v631
    %v634 = vshrl.u32 %v616, %v632
    %v635 = vor.u32 %v633, %v634
    %v636 = vsub.s32 4294967266, %v631
    %v637 = vadd.s32 %v636, 127
    %v638 = vshll.u32 %v637, 23
    %v639 = vor.u32 4788187, %v638
    %v640 = vand.u32 2147483647, %v639
    %v642 = vcvt.s32.f32 %v635
    %v643 = vmul.f32 %v642, %v640
    %v644 = vxor.u32 %v643, 2147483648
    %v645 = vsel %vm562, %v644, %v643
    %v646 = vsub.s32 4, %v622
    %v647 = vsel %vm562, %v646, %v622
    %v648 = vsel %vm561, %v162, %v645
    %v649 = vsel %vm561, 0, %v647
    %v650 = vcosq.f32.pop %v648
    %v651 = vsinq.f32.pop %v648
    %vm652 = vweird.f32 %v162
    %v653 = vadd.s32 %v649, 3
    %v654 = vand.u32 %v653, 3
    %vm655 = vcmp.lt.s32.totalorder %v654, 2
    %vm656 = vcmp.eq.s32.totalorder %v654, 0
    %v657 = vxor.u32 %v651, 2147483648
    %v658 = vsel %vm656, %v650, %v657
    %vm659 = vcmp.eq.s32.totalorder %v654, 2
    %v660 = vxor.u32 %v650, 2147483648
    %v661 = vsel %vm659, %v660, %v651
    %v662 = vsel %vm655, %v658, %v661
    %v663 = vsel %vm652, nan, %v662
    %v665 = vsel %vm79, %v559, 0
    %v668 = vsel %vm79, %v663, 0
    %670 = vmatprep.subr.mxu0 %v370
    %671 = vmatpush1.msra.mxu0 %v369
    %672 = vmatprep.subr.mxu0 %v372
    %673 = vmatpush1.msra.mxu0 %v371
    %674 = vmatprep.subr.mxu0 0.0
    %675 = vmatpush1.msra.mxu0 0.0
    %676 = vmatprep.subr.mxu0 0.0
    %677 = vmatpush1.msra.mxu0 0.0
    %678 = vmatprep.subr.mxu0 0.0
    %679 = vmatpush1.msra.mxu0 0.0
    %680 = vmatprep.subr.mxu0 0.0
    %681 = vmatpush1.msra.mxu0 0.0
    %682 = vmatprep.subr.mxu0 0.0
    %683 = vmatpush1.msra.mxu0 0.0
    %684 = vmatprep.subr.mxu0 0.0
    %685 = vmatpush1.msra.mxu0 0.0
    %686 = vmatprep.subr.mxu0 0.0
    %687 = vmatpush1.msra.mxu0 0.0
    %688 = vmatprep.subr.mxu0 0.0
    %689 = vmatpush1.msra.mxu0 0.0
    %690 = vmatprep.subr.mxu0 0.0
    %691 = vmatpush1.msra.mxu0 0.0
    %692 = vmatprep.subr.mxu0 0.0
    %693 = vmatpush1.msra.mxu0 0.0
    %694 = vmatprep.subr.mxu0 0.0
    %695 = vmatpush1.msra.mxu0 0.0
    %696 = vmatprep.subr.mxu0 0.0
    %697 = vmatpush1.msra.mxu0 0.0
    %698 = vmatprep.subr.mxu0 0.0
    %699 = vmatpush1.msra.mxu0 0.0
    %700 = vmatprep.subr.mxu0 0.0
    %701 = vmatpush1.msra.mxu0 0.0
    %702 = vmatprep.subr.mxu0 0.0
    %703 = vmatpush1.msra.mxu0 0.0
    %704 = vmatprep.subr.mxu0 0.0
    %705 = vmatpush1.msra.mxu0 0.0
    %706 = vmatprep.subr.mxu0 0.0
    %707 = vmatpush1.msra.mxu0 0.0
    %708 = vmatprep.subr.mxu0 0.0
    %709 = vmatpush1.msra.mxu0 0.0
    %710 = vmatprep.subr.mxu0 0.0
    %711 = vmatpush1.msra.mxu0 0.0
    %712 = vmatprep.subr.mxu0 0.0
    %713 = vmatpush1.msra.mxu0 0.0
    %714 = vmatprep.subr.mxu0 0.0
    %715 = vmatpush1.msra.mxu0 0.0
    %716 = vmatprep.subr.mxu0 0.0
    %717 = vmatpush1.msra.mxu0 0.0
    %718 = vmatprep.subr.mxu0 0.0
    %719 = vmatpush1.msra.mxu0 0.0
    %720 = vmatprep.subr.mxu0 0.0
    %721 = vmatpush1.msra.mxu0 0.0
    %722 = vmatprep.subr.mxu0 0.0
    %723 = vmatpush1.msra.mxu0 0.0
    %724 = vmatprep.subr.mxu0 0.0
    %725 = vmatpush1.msra.mxu0 0.0
    %726 = vmatprep.subr.mxu0 0.0
    %727 = vmatpush1.msra.mxu0 0.0
    %728 = vmatprep.subr.mxu0 0.0
    %729 = vmatpush1.msra.mxu0 0.0
    %730 = vmatprep.subr.mxu0 0.0
    %731 = vmatpush1.msra.mxu0 0.0
    %732 = vmatprep.subr.mxu0 0.0
    %733 = vmatpush1.msra.mxu0 0.0
    %734 = vmatprep.mubr.f32.mxu0 0.0
    %735 = vmatmul.mubr.f32.gmra.mrb[0].mxu0 %v665
    %v736 = vpop.f32.mrb[0].mxu0
    %v737 = vadd.f32 0.0, %v736
    %v738 = vpop.f32.mrb[0].mxu0
    %v739 = vadd.f32 0.0, %v738
    %740 = vmatprep.mubr.f32.mxu0 0.0
    %741 = vmatmul.mubr.f32.gmra.mrb[0].mxu0 %v668
    %v742 = vpop.f32.mrb[0].mxu0
    %v743 = vadd.f32 0.0, %v742
    %v744 = vpop.f32.mrb[0].mxu0
    %v745 = vadd.f32 0.0, %v744
    %746 = vdwg.mxu0
    %v747 = vld [vmem:[%s5] sm:$0xff]
    %v748 = vld [vmem:[%s5 + $0x8] sm:$0xff]
    %v749 = vld [vmem:[%s5 + $0x10] sm:$0xff]
    %v750 = vld [vmem:[%s5 + $0x18] sm:$0xff]
    %v751 = vlaneseq
    %v752 = vshrl.u32 %v751, 7
    %v753 = vsub.s32 0, %v752
    %v754 = vrot.slane %v446, %v753
    %v755 = vlaneseq
    %v756 = vshrl.u32 %v755, 7
    %v757 = vsub.s32 0, %v756
    %v758 = vrot.slane %v448, %v757
    %v759 = vlaneseq
    %v760 = vshrl.u32 %v759, 7
    %v761 = vsub.s32 0, %v760
    %v762 = vrot.slane %v737, %v761
    %v763 = vlaneseq
    %v764 = vshrl.u32 %v763, 7
    %v765 = vsub.s32 0, %v764
    %v766 = vrot.slane %v739, %v765
    %v767 = vmul.f32 %v747, %v754
    %v768 = vmul.f32 %v748, %v754
    %v769 = vmul.f32 %v749, %v758
    %v770 = vmul.f32 %v750, %v758
    %v771 = vmul.f32 %v747, %v762
    %v772 = vmul.f32 %v748, %v762
    %v773 = vmul.f32 %v749, %v766
    %v774 = vmul.f32 %v750, %v766
    %v775 = vld [vmem:[%s6] sm:$0xff]
    %v776 = vld [vmem:[%s6 + $0x8] sm:$0xff]
    %v777 = vld [vmem:[%s6 + $0x10] sm:$0xff]
    %v778 = vld [vmem:[%s6 + $0x18] sm:$0xff]
    %v779 = vld [vmem:[%s6 + $0x20] sm:$0xff]
    %v780 = vld [vmem:[%s6 + $0x28] sm:$0xff]
    %v781 = vld [vmem:[%s6 + $0x30] sm:$0xff]
    %v782 = vld [vmem:[%s6 + $0x38] sm:$0xff]
    %v783 = vld [vmem:[%s6 + $0x40] sm:$0xff]
    %v784 = vld [vmem:[%s6 + $0x48] sm:$0xff]
    %v785 = vld [vmem:[%s6 + $0x50] sm:$0xff]
    %v786 = vld [vmem:[%s6 + $0x58] sm:$0xff]
    %v787 = vld [vmem:[%s6 + $0x60] sm:$0xff]
    %v788 = vld [vmem:[%s6 + $0x68] sm:$0xff]
    %v789 = vld [vmem:[%s6 + $0x70] sm:$0xff]
    %v790 = vld [vmem:[%s6 + $0x78] sm:$0xff]
    %v791 = vld [vmem:[%s6 + $0x80] sm:$0xff]
    %v792 = vld [vmem:[%s6 + $0x88] sm:$0xff]
    %v793 = vld [vmem:[%s6 + $0x90] sm:$0xff]
    %v794 = vld [vmem:[%s6 + $0x98] sm:$0xff]
    %v795 = vld [vmem:[%s6 + $0xa0] sm:$0xff]
    %v796 = vld [vmem:[%s6 + $0xa8] sm:$0xff]
    %v797 = vld [vmem:[%s6 + $0xb0] sm:$0xff]
    %v798 = vld [vmem:[%s6 + $0xb8] sm:$0xff]
    %v799 = vld [vmem:[%s6 + $0xc0] sm:$0xff]
    %v800 = vld [vmem:[%s6 + $0xc8] sm:$0xff]
    %v801 = vld [vmem:[%s6 + $0xd0] sm:$0xff]
    %v802 = vld [vmem:[%s6 + $0xd8] sm:$0xff]
    %v803 = vld [vmem:[%s6 + $0xe0] sm:$0xff]
    %v804 = vld [vmem:[%s6 + $0xe8] sm:$0xff]
    %v805 = vld [vmem:[%s6 + $0xf0] sm:$0xff]
    %v806 = vld [vmem:[%s6 + $0xf8] sm:$0xff]
    %v807 = vld [vmem:[%s6 + $0x100] sm:$0xff]
    %v808 = vld [vmem:[%s6 + $0x108] sm:$0xff]
    %v809 = vld [vmem:[%s6 + $0x110] sm:$0xff]
    %v810 = vld [vmem:[%s6 + $0x118] sm:$0xff]
    %v811 = vld [vmem:[%s6 + $0x120] sm:$0xff]
    %v812 = vld [vmem:[%s6 + $0x128] sm:$0xff]
    %v813 = vld [vmem:[%s6 + $0x130] sm:$0xff]
    %v814 = vld [vmem:[%s6 + $0x138] sm:$0xff]
    %v815 = vld [vmem:[%s6 + $0x140] sm:$0xff]
    %v816 = vld [vmem:[%s6 + $0x148] sm:$0xff]
    %v817 = vld [vmem:[%s6 + $0x150] sm:$0xff]
    %v818 = vld [vmem:[%s6 + $0x158] sm:$0xff]
    %v819 = vld [vmem:[%s6 + $0x160] sm:$0xff]
    %v820 = vld [vmem:[%s6 + $0x168] sm:$0xff]
    %v821 = vld [vmem:[%s6 + $0x170] sm:$0xff]
    %v822 = vld [vmem:[%s6 + $0x178] sm:$0xff]
    %823 = vmatprep.subr.mxu0 0.0
    %824 = vmatpush1.msra.mxu0 %v775
    %825 = vmatprep.subr.mxu0 0.0
    %826 = vmatpush1.msra.mxu0 %v776
    %827 = vmatprep.subr.mxu0 0.0
    %828 = vmatpush1.msra.mxu0 %v777
    %829 = vmatprep.subr.mxu0 0.0
    %830 = vmatpush1.msra.mxu0 %v778
    %831 = vmatprep.subr.mxu0 0.0
    %832 = vmatpush1.msra.mxu0 %v779
    %833 = vmatprep.subr.mxu0 0.0
    %834 = vmatpush1.msra.mxu0 %v780
    %835 = vmatprep.subr.mxu0 0.0
    %836 = vmatpush1.msra.mxu0 %v781
    %837 = vmatprep.subr.mxu0 0.0
    %838 = vmatpush1.msra.mxu0 %v782
    %839 = vmatprep.subr.mxu0 0.0
    %840 = vmatpush1.msra.mxu0 %v783
    %841 = vmatprep.subr.mxu0 0.0
    %842 = vmatpush1.msra.mxu0 %v784
    %843 = vmatprep.subr.mxu0 0.0
    %844 = vmatpush1.msra.mxu0 %v785
    %845 = vmatprep.subr.mxu0 0.0
    %846 = vmatpush1.msra.mxu0 %v786
    %847 = vmatprep.subr.mxu0 0.0
    %848 = vmatpush1.msra.mxu0 %v787
    %849 = vmatprep.subr.mxu0 0.0
    %850 = vmatpush1.msra.mxu0 %v788
    %851 = vmatprep.subr.mxu0 0.0
    %852 = vmatpush1.msra.mxu0 %v789
    %853 = vmatprep.subr.mxu0 0.0
    %854 = vmatpush1.msra.mxu0 %v790
    %855 = vmatprep.subr.mxu0 0.0
    %856 = vmatpush1.msra.mxu0 %v791
    %857 = vmatprep.subr.mxu0 0.0
    %858 = vmatpush1.msra.mxu0 %v792
    %859 = vmatprep.subr.mxu0 0.0
    %860 = vmatpush1.msra.mxu0 %v793
    %861 = vmatprep.subr.mxu0 0.0
    %862 = vmatpush1.msra.mxu0 %v794
    %863 = vmatprep.subr.mxu0 0.0
    %864 = vmatpush1.msra.mxu0 %v795
    %865 = vmatprep.subr.mxu0 0.0
    %866 = vmatpush1.msra.mxu0 %v796
    %867 = vmatprep.subr.mxu0 0.0
    %868 = vmatpush1.msra.mxu0 %v797
    %869 = vmatprep.subr.mxu0 0.0
    %870 = vmatpush1.msra.mxu0 %v798
    %871 = vmatprep.subr.mxu0 0.0
    %872 = vmatpush1.msra.mxu0 %v799
    %873 = vmatprep.subr.mxu0 0.0
    %874 = vmatpush1.msra.mxu0 %v800
    %875 = vmatprep.subr.mxu0 0.0
    %876 = vmatpush1.msra.mxu0 %v801
    %877 = vmatprep.subr.mxu0 0.0
    %878 = vmatpush1.msra.mxu0 %v802
    %879 = vmatprep.subr.mxu0 0.0
    %880 = vmatpush1.msra.mxu0 %v803
    %881 = vmatprep.subr.mxu0 0.0
    %882 = vmatpush1.msra.mxu0 %v804
    %883 = vmatprep.subr.mxu0 0.0
    %884 = vmatpush1.msra.mxu0 %v805
    %885 = vmatprep.subr.mxu0 0.0
    %886 = vmatpush1.msra.mxu0 %v806
    %887 = vmatprep.mubr.f32.mxu0 %v767
    %888 = vmatmul.mubr.f32.gmra.mrb[0].mxu0 %v747
    %v889 = vpop.f32.mrb[0].mxu0
    %v890 = vadd.f32 0.0, %v889
    %v891 = vpop.f32.mrb[0].mxu0
    %892 = vmatprep.mubr.f32.mxu0 %v768
    %893 = vmatmul.mubr.f32.gmra.mrb[0].mxu0 %v748
    %v894 = vpop.f32.mrb[0].mxu0
    %v895 = vadd.f32 0.0, %v894
    %v896 = vpop.f32.mrb[0].mxu0
    %897 = vmatprep.mubr.f32.mxu0 %v769
    %898 = vmatmul.mubr.f32.gmra.mrb[0].mxu0 %v749
    %v899 = vpop.f32.mrb[0].mxu0
    %v900 = vadd.f32 0.0, %v899
    %v901 = vpop.f32.mrb[0].mxu0
    %902 = vmatprep.mubr.f32.mxu0 %v770
    %903 = vmatmul.mubr.f32.gmra.mrb[0].mxu0 %v750
    %v904 = vpop.f32.mrb[0].mxu0
    %v905 = vadd.f32 0.0, %v904
    %v906 = vpop.f32.mrb[0].mxu0
    %907 = vdwg.mxu0
    %908 = vmatprep.subr.mxu0 0.0
    %909 = vmatpush1.msra.mxu0 %v807
    %910 = vmatprep.subr.mxu0 0.0
    %911 = vmatpush1.msra.mxu0 %v808
    %912 = vmatprep.subr.mxu0 0.0
    %913 = vmatpush1.msra.mxu0 %v809
    %914 = vmatprep.subr.mxu0 0.0
    %915 = vmatpush1.msra.mxu0 %v810
    %916 = vmatprep.subr.mxu0 0.0
    %917 = vmatpush1.msra.mxu0 %v811
    %918 = vmatprep.subr.mxu0 0.0
    %919 = vmatpush1.msra.mxu0 %v812
    %920 = vmatprep.subr.mxu0 0.0
    %921 = vmatpush1.msra.mxu0 %v813
    %922 = vmatprep.subr.mxu0 0.0
    %923 = vmatpush1.msra.mxu0 %v814
    %924 = vmatprep.subr.mxu0 0.0
    %925 = vmatpush1.msra.mxu0 %v815
    %926 = vmatprep.subr.mxu0 0.0
    %927 = vmatpush1.msra.mxu0 %v816
    %928 = vmatprep.subr.mxu0 0.0
    %929 = vmatpush1.msra.mxu0 %v817
    %930 = vmatprep.subr.mxu0 0.0
    %931 = vmatpush1.msra.mxu0 %v818
    %932 = vmatprep.subr.mxu0 0.0
    %933 = vmatpush1.msra.mxu0 %v819
    %934 = vmatprep.subr.mxu0 0.0
    %935 = vmatpush1.msra.mxu0 %v820
    %936 = vmatprep.subr.mxu0 0.0
    %937 = vmatpush1.msra.mxu0 %v821
    %938 = vmatprep.subr.mxu0 0.0
    %939 = vmatpush1.msra.mxu0 %v822
    %940 = vmatprep.subr.mxu0 0.0
    %941 = vmatpush1.msra.mxu0 0.0
    %942 = vmatprep.subr.mxu0 0.0
    %943 = vmatpush1.msra.mxu0 0.0
    %944 = vmatprep.subr.mxu0 0.0
    %945 = vmatpush1.msra.mxu0 0.0
    %946 = vmatprep.subr.mxu0 0.0
    %947 = vmatpush1.msra.mxu0 0.0
    %948 = vmatprep.subr.mxu0 0.0
    %949 = vmatpush1.msra.mxu0 0.0
    %950 = vmatprep.subr.mxu0 0.0
    %951 = vmatpush1.msra.mxu0 0.0
    %952 = vmatprep.subr.mxu0 0.0
    %953 = vmatpush1.msra.mxu0 0.0
    %954 = vmatprep.subr.mxu0 0.0
    %955 = vmatpush1.msra.mxu0 0.0
    %956 = vmatprep.subr.mxu0 0.0
    %957 = vmatpush1.msra.mxu0 0.0
    %958 = vmatprep.subr.mxu0 0.0
    %959 = vmatpush1.msra.mxu0 0.0
    %960 = vmatprep.subr.mxu0 0.0
    %961 = vmatpush1.msra.mxu0 0.0
    %962 = vmatprep.subr.mxu0 0.0
    %963 = vmatpush1.msra.mxu0 0.0
    %964 = vmatprep.subr.mxu0 0.0
    %965 = vmatpush1.msra.mxu0 0.0
    %966 = vmatprep.subr.mxu0 0.0
    %967 = vmatpush1.msra.mxu0 0.0
    %968 = vmatprep.subr.mxu0 0.0
    %969 = vmatpush1.msra.mxu0 0.0
    %970 = vmatprep.subr.mxu0 0.0
    %971 = vmatpush1.msra.mxu0 0.0
    %972 = vmatprep.mubr.f32.mxu0 0.0
    %973 = vmatmul.mubr.f32.gmra.mrb[0].mxu0 %v771
    %v974 = vpop.f32.mrb[0].mxu0
    %v975 = vadd.f32 %v890, %v974
    %v976 = vpop.f32.mrb[0].mxu0
    %977 = vmatprep.mubr.f32.mxu0 0.0
    %978 = vmatmul.mubr.f32.gmra.mrb[0].mxu0 %v772
    %v979 = vpop.f32.mrb[0].mxu0
    %v980 = vadd.f32 %v895, %v979
    %v981 = vpop.f32.mrb[0].mxu0
    %982 = vmatprep.mubr.f32.mxu0 0.0
    %983 = vmatmul.mubr.f32.gmra.mrb[0].mxu0 %v773
    %v984 = vpop.f32.mrb[0].mxu0
    %v985 = vadd.f32 %v900, %v984
    %v986 = vpop.f32.mrb[0].mxu0
    %987 = vmatprep.mubr.f32.mxu0 0.0
    %988 = vmatmul.mubr.f32.gmra.mrb[0].mxu0 %v774
    %v989 = vpop.f32.mrb[0].mxu0
    %v990 = vadd.f32 %v905, %v989
    %v991 = vpop.f32.mrb[0].mxu0
    %992 = vdwg.mxu0
    %v993 = vlaneseq
    %v994 = vshrl.u32 %v993, 7
    %v995 = vsub.s32 1, %v994
    %v996 = vrot.slane %v446, %v995
    %v997 = vlaneseq
    %v998 = vshrl.u32 %v997, 7
    %v999 = vsub.s32 1, %v998
    %v1000 = vrot.slane %v448, %v999
    %v1001 = vlaneseq
    %v1002 = vshrl.u32 %v1001, 7
    %v1003 = vsub.s32 1, %v1002
    %v1004 = vrot.slane %v737, %v1003
    %v1005 = vlaneseq
    %v1006 = vshrl.u32 %v1005, 7
    %v1007 = vsub.s32 1, %v1006
    %v1008 = vrot.slane %v739, %v1007
    %v1009 = vmul.f32 %v975, %v996
    %v1010 = vmul.f32 %v980, %v996
    %v1011 = vmul.f32 %v985, %v1000
    %v1012 = vmul.f32 %v990, %v1000
    %v1013 = vmul.f32 %v975, %v1004
    %v1014 = vmul.f32 %v980, %v1004
    %v1015 = vmul.f32 %v985, %v1008
    %v1016 = vmul.f32 %v990, %v1008
    %s1017 = scalar_lea.vmem %s6, 384
    %v1018 = vld [vmem:[%s1017] sm:$0xff]
    %v1019 = vld [vmem:[%s1017 + $0x8] sm:$0xff]
    %v1020 = vld [vmem:[%s1017 + $0x10] sm:$0xff]
    %v1021 = vld [vmem:[%s1017 + $0x18] sm:$0xff]
    %v1022 = vld [vmem:[%s1017 + $0x20] sm:$0xff]
    %v1023 = vld [vmem:[%s1017 + $0x28] sm:$0xff]
    %v1024 = vld [vmem:[%s1017 + $0x30] sm:$0xff]
    %v1025 = vld [vmem:[%s1017 + $0x38] sm:$0xff]
    %v1026 = vld [vmem:[%s1017 + $0x40] sm:$0xff]
    %v1027 = vld [vmem:[%s1017 + $0x48] sm:$0xff]
    %v1028 = vld [vmem:[%s1017 + $0x50] sm:$0xff]
    %v1029 = vld [vmem:[%s1017 + $0x58] sm:$0xff]
    %v1030 = vld [vmem:[%s1017 + $0x60] sm:$0xff]
    %v1031 = vld [vmem:[%s1017 + $0x68] sm:$0xff]
    %v1032 = vld [vmem:[%s1017 + $0x70] sm:$0xff]
    %v1033 = vld [vmem:[%s1017 + $0x78] sm:$0xff]
    %v1034 = vld [vmem:[%s1017 + $0x80] sm:$0xff]
    %v1035 = vld [vmem:[%s1017 + $0x88] sm:$0xff]
    %v1036 = vld [vmem:[%s1017 + $0x90] sm:$0xff]
    %v1037 = vld [vmem:[%s1017 + $0x98] sm:$0xff]
    %v1038 = vld [vmem:[%s1017 + $0xa0] sm:$0xff]
    %v1039 = vld [vmem:[%s1017 + $0xa8] sm:$0xff]
    %v1040 = vld [vmem:[%s1017 + $0xb0] sm:$0xff]
    %v1041 = vld [vmem:[%s1017 + $0xb8] sm:$0xff]
    %v1042 = vld [vmem:[%s1017 + $0xc0] sm:$0xff]
    %v1043 = vld [vmem:[%s1017 + $0xc8] sm:$0xff]
    %v1044 = vld [vmem:[%s1017 + $0xd0] sm:$0xff]
    %v1045 = vld [vmem:[%s1017 + $0xd8] sm:$0xff]
    %v1046 = vld [vmem:[%s1017 + $0xe0] sm:$0xff]
    %v1047 = vld [vmem:[%s1017 + $0xe8] sm:$0xff]
    %v1048 = vld [vmem:[%s1017 + $0xf0] sm:$0xff]
    %v1049 = vld [vmem:[%s1017 + $0xf8] sm:$0xff]
    %v1050 = vld [vmem:[%s1017 + $0x100] sm:$0xff]
    %v1051 = vld [vmem:[%s1017 + $0x108] sm:$0xff]
    %v1052 = vld [vmem:[%s1017 + $0x110] sm:$0xff]
    %v1053 = vld [vmem:[%s1017 + $0x118] sm:$0xff]
    %v1054 = vld [vmem:[%s1017 + $0x120] sm:$0xff]
    %v1055 = vld [vmem:[%s1017 + $0x128] sm:$0xff]
    %v1056 = vld [vmem:[%s1017 + $0x130] sm:$0xff]
    %v1057 = vld [vmem:[%s1017 + $0x138] sm:$0xff]
    %v1058 = vld [vmem:[%s1017 + $0x140] sm:$0xff]
    %v1059 = vld [vmem:[%s1017 + $0x148] sm:$0xff]
    %v1060 = vld [vmem:[%s1017 + $0x150] sm:$0xff]
    %v1061 = vld [vmem:[%s1017 + $0x158] sm:$0xff]
    %v1062 = vld [vmem:[%s1017 + $0x160] sm:$0xff]
    %v1063 = vld [vmem:[%s1017 + $0x168] sm:$0xff]
    %v1064 = vld [vmem:[%s1017 + $0x170] sm:$0xff]
    %v1065 = vld [vmem:[%s1017 + $0x178] sm:$0xff]
    %1066 = vmatprep.subr.mxu0 0.0
    %1067 = vmatpush1.msra.mxu0 %v1018
    %1068 = vmatprep.subr.mxu0 0.0
    %1069 = vmatpush1.msra.mxu0 %v1019
    %1070 = vmatprep.subr.mxu0 0.0
    %1071 = vmatpush1.msra.mxu0 %v1020
    %1072 = vmatprep.subr.mxu0 0.0
    %1073 = vmatpush1.msra.mxu0 %v1021
    %1074 = vmatprep.subr.mxu0 0.0
    %1075 = vmatpush1.msra.mxu0 %v1022
    %1076 = vmatprep.subr.mxu0 0.0
    %1077 = vmatpush1.msra.mxu0 %v1023
    %1078 = vmatprep.subr.mxu0 0.0
    %1079 = vmatpush1.msra.mxu0 %v1024
    %1080 = vmatprep.subr.mxu0 0.0
    %1081 = vmatpush1.msra.mxu0 %v1025
    %1082 = vmatprep.subr.mxu0 0.0
    %1083 = vmatpush1.msra.mxu0 %v1026
    %1084 = vmatprep.subr.mxu0 0.0
    %1085 = vmatpush1.msra.mxu0 %v1027
    %1086 = vmatprep.subr.mxu0 0.0
    %1087 = vmatpush1.msra.mxu0 %v1028
    %1088 = vmatprep.subr.mxu0 0.0
    %1089 = vmatpush1.msra.mxu0 %v1029
    %1090 = vmatprep.subr.mxu0 0.0
    %1091 = vmatpush1.msra.mxu0 %v1030
    %1092 = vmatprep.subr.mxu0 0.0
    %1093 = vmatpush1.msra.mxu0 %v1031
    %1094 = vmatprep.subr.mxu0 0.0
    %1095 = vmatpush1.msra.mxu0 %v1032
    %1096 = vmatprep.subr.mxu0 0.0
    %1097 = vmatpush1.msra.mxu0 %v1033
    %1098 = vmatprep.subr.mxu0 0.0
    %1099 = vmatpush1.msra.mxu0 %v1034
    %1100 = vmatprep.subr.mxu0 0.0
    %1101 = vmatpush1.msra.mxu0 %v1035
    %1102 = vmatprep.subr.mxu0 0.0
    %1103 = vmatpush1.msra.mxu0 %v1036
    %1104 = vmatprep.subr.mxu0 0.0
    %1105 = vmatpush1.msra.mxu0 %v1037
    %1106 = vmatprep.subr.mxu0 0.0
    %1107 = vmatpush1.msra.mxu0 %v1038
    %1108 = vmatprep.subr.mxu0 0.0
    %1109 = vmatpush1.msra.mxu0 %v1039
    %1110 = vmatprep.subr.mxu0 0.0
    %1111 = vmatpush1.msra.mxu0 %v1040
    %1112 = vmatprep.subr.mxu0 0.0
    %1113 = vmatpush1.msra.mxu0 %v1041
    %1114 = vmatprep.subr.mxu0 0.0
    %1115 = vmatpush1.msra.mxu0 %v1042
    %1116 = vmatprep.subr.mxu0 0.0
    %1117 = vmatpush1.msra.mxu0 %v1043
    %1118 = vmatprep.subr.mxu0 0.0
    %1119 = vmatpush1.msra.mxu0 %v1044
    %1120 = vmatprep.subr.mxu0 0.0
    %1121 = vmatpush1.msra.mxu0 %v1045
    %1122 = vmatprep.subr.mxu0 0.0
    %1123 = vmatpush1.msra.mxu0 %v1046
    %1124 = vmatprep.subr.mxu0 0.0
    %1125 = vmatpush1.msra.mxu0 %v1047
    %1126 = vmatprep.subr.mxu0 0.0
    %1127 = vmatpush1.msra.mxu0 %v1048
    %1128 = vmatprep.subr.mxu0 0.0
    %1129 = vmatpush1.msra.mxu0 %v1049
    %1130 = vmatprep.mubr.f32.mxu0 %v1009
    %1131 = vmatmul.mubr.f32.gmra.mrb[0].mxu0 %v975
    %v1132 = vpop.f32.mrb[0].mxu0
    %v1133 = vadd.f32 0.0, %v1132
    %v1134 = vpop.f32.mrb[0].mxu0
    %1135 = vmatprep.mubr.f32.mxu0 %v1010
    %1136 = vmatmul.mubr.f32.gmra.mrb[0].mxu0 %v980
    %v1137 = vpop.f32.mrb[0].mxu0
    %v1138 = vadd.f32 0.0, %v1137
    %v1139 = vpop.f32.mrb[0].mxu0
    %1140 = vmatprep.mubr.f32.mxu0 %v1011
    %1141 = vmatmul.mubr.f32.gmra.mrb[0].mxu0 %v985
    %v1142 = vpop.f32.mrb[0].mxu0
    %v1143 = vadd.f32 0.0, %v1142
    %v1144 = vpop.f32.mrb[0].mxu0
    %1145 = vmatprep.mubr.f32.mxu0 %v1012
    %1146 = vmatmul.mubr.f32.gmra.mrb[0].mxu0 %v990
    %v1147 = vpop.f32.mrb[0].mxu0
    %v1148 = vadd.f32 0.0, %v1147
    %v1149 = vpop.f32.mrb[0].mxu0
    %1150 = vdwg.mxu0
    %1151 = vmatprep.subr.mxu0 0.0
    %1152 = vmatpush1.msra.mxu0 %v1050
    %1153 = vmatprep.subr.mxu0 0.0
    %1154 = vmatpush1.msra.mxu0 %v1051
    %1155 = vmatprep.subr.mxu0 0.0
    %1156 = vmatpush1.msra.mxu0 %v1052
    %1157 = vmatprep.subr.mxu0 0.0
    %1158 = vmatpush1.msra.mxu0 %v1053
    %1159 = vmatprep.subr.mxu0 0.0
    %1160 = vmatpush1.msra.mxu0 %v1054
    %1161 = vmatprep.subr.mxu0 0.0
    %1162 = vmatpush1.msra.mxu0 %v1055
    %1163 = vmatprep.subr.mxu0 0.0
    %1164 = vmatpush1.msra.mxu0 %v1056
    %1165 = vmatprep.subr.mxu0 0.0
    %1166 = vmatpush1.msra.mxu0 %v1057
    %1167 = vmatprep.subr.mxu0 0.0
    %1168 = vmatpush1.msra.mxu0 %v1058
    %1169 = vmatprep.subr.mxu0 0.0
    %1170 = vmatpush1.msra.mxu0 %v1059
    %1171 = vmatprep.subr.mxu0 0.0
    %1172 = vmatpush1.msra.mxu0 %v1060
    %1173 = vmatprep.subr.mxu0 0.0
    %1174 = vmatpush1.msra.mxu0 %v1061
    %1175 = vmatprep.subr.mxu0 0.0
    %1176 = vmatpush1.msra.mxu0 %v1062
    %1177 = vmatprep.subr.mxu0 0.0
    %1178 = vmatpush1.msra.mxu0 %v1063
    %1179 = vmatprep.subr.mxu0 0.0
    %1180 = vmatpush1.msra.mxu0 %v1064
    %1181 = vmatprep.subr.mxu0 0.0
    %1182 = vmatpush1.msra.mxu0 %v1065
    %1183 = vmatprep.subr.mxu0 0.0
    %1184 = vmatpush1.msra.mxu0 0.0
    %1185 = vmatprep.subr.mxu0 0.0
    %1186 = vmatpush1.msra.mxu0 0.0
    %1187 = vmatprep.subr.mxu0 0.0
    %1188 = vmatpush1.msra.mxu0 0.0
    %1189 = vmatprep.subr.mxu0 0.0
    %1190 = vmatpush1.msra.mxu0 0.0
    %1191 = vmatprep.subr.mxu0 0.0
    %1192 = vmatpush1.msra.mxu0 0.0
    %1193 = vmatprep.subr.mxu0 0.0
    %1194 = vmatpush1.msra.mxu0 0.0
    %1195 = vmatprep.subr.mxu0 0.0
    %1196 = vmatpush1.msra.mxu0 0.0
    %1197 = vmatprep.subr.mxu0 0.0
    %1198 = vmatpush1.msra.mxu0 0.0
    %1199 = vmatprep.subr.mxu0 0.0
    %1200 = vmatpush1.msra.mxu0 0.0
    %1201 = vmatprep.subr.mxu0 0.0
    %1202 = vmatpush1.msra.mxu0 0.0
    %1203 = vmatprep.subr.mxu0 0.0
    %1204 = vmatpush1.msra.mxu0 0.0
    %1205 = vmatprep.subr.mxu0 0.0
    %1206 = vmatpush1.msra.mxu0 0.0
    %1207 = vmatprep.subr.mxu0 0.0
    %1208 = vmatpush1.msra.mxu0 0.0
    %1209 = vmatprep.subr.mxu0 0.0
    %1210 = vmatpush1.msra.mxu0 0.0
    %1211 = vmatprep.subr.mxu0 0.0
    %1212 = vmatpush1.msra.mxu0 0.0
    %1213 = vmatprep.subr.mxu0 0.0
    %1214 = vmatpush1.msra.mxu0 0.0
    %1215 = vmatprep.mubr.f32.mxu0 0.0
    %1216 = vmatmul.mubr.f32.gmra.mrb[0].mxu0 %v1013
    %v1217 = vpop.f32.mrb[0].mxu0
    %v1218 = vadd.f32 %v1133, %v1217
    %v1219 = vpop.f32.mrb[0].mxu0
    %1220 = vmatprep.mubr.f32.mxu0 0.0
    %1221 = vmatmul.mubr.f32.gmra.mrb[0].mxu0 %v1014
    %v1222 = vpop.f32.mrb[0].mxu0
    %v1223 = vadd.f32 %v1138, %v1222
    %v1224 = vpop.f32.mrb[0].mxu0
    %1225 = vmatprep.mubr.f32.mxu0 0.0
    %1226 = vmatmul.mubr.f32.gmra.mrb[0].mxu0 %v1015
    %v1227 = vpop.f32.mrb[0].mxu0
    %v1228 = vadd.f32 %v1143, %v1227
    %v1229 = vpop.f32.mrb[0].mxu0
    %1230 = vmatprep.mubr.f32.mxu0 0.0
    %1231 = vmatmul.mubr.f32.gmra.mrb[0].mxu0 %v1016
    %v1232 = vpop.f32.mrb[0].mxu0
    %v1233 = vadd.f32 %v1148, %v1232
    %v1234 = vpop.f32.mrb[0].mxu0
    %1235 = vdwg.mxu0
    %v1236 = vlaneseq
    %v1237 = vshrl.u32 %v1236, 7
    %v1238 = vsub.s32 2, %v1237
    %v1239 = vrot.slane %v446, %v1238
    %v1240 = vlaneseq
    %v1241 = vshrl.u32 %v1240, 7
    %v1242 = vsub.s32 2, %v1241
    %v1243 = vrot.slane %v448, %v1242
    %v1244 = vlaneseq
    %v1245 = vshrl.u32 %v1244, 7
    %v1246 = vsub.s32 2, %v1245
    %v1247 = vrot.slane %v737, %v1246
    %v1248 = vlaneseq
    %v1249 = vshrl.u32 %v1248, 7
    %v1250 = vsub.s32 2, %v1249
    %v1251 = vrot.slane %v739, %v1250
    %v1252 = vmul.f32 %v1218, %v1239
    %v1253 = vmul.f32 %v1223, %v1239
    %v1254 = vmul.f32 %v1228, %v1243
    %v1255 = vmul.f32 %v1233, %v1243
    %v1256 = vmul.f32 %v1218, %v1247
    %v1257 = vmul.f32 %v1223, %v1247
    %v1258 = vmul.f32 %v1228, %v1251
    %v1259 = vmul.f32 %v1233, %v1251
    %s1260 = scalar_lea.vmem %s6, 768
    %v1261 = vld [vmem:[%s1260] sm:$0xff]
    %v1262 = vld [vmem:[%s1260 + $0x8] sm:$0xff]
    %v1263 = vld [vmem:[%s1260 + $0x10] sm:$0xff]
    %v1264 = vld [vmem:[%s1260 + $0x18] sm:$0xff]
    %v1265 = vld [vmem:[%s1260 + $0x20] sm:$0xff]
    %v1266 = vld [vmem:[%s1260 + $0x28] sm:$0xff]
    %v1267 = vld [vmem:[%s1260 + $0x30] sm:$0xff]
    %v1268 = vld [vmem:[%s1260 + $0x38] sm:$0xff]
    %v1269 = vld [vmem:[%s1260 + $0x40] sm:$0xff]
    %v1270 = vld [vmem:[%s1260 + $0x48] sm:$0xff]
    %v1271 = vld [vmem:[%s1260 + $0x50] sm:$0xff]
    %v1272 = vld [vmem:[%s1260 + $0x58] sm:$0xff]
    %v1273 = vld [vmem:[%s1260 + $0x60] sm:$0xff]
    %v1274 = vld [vmem:[%s1260 + $0x68] sm:$0xff]
    %v1275 = vld [vmem:[%s1260 + $0x70] sm:$0xff]
    %v1276 = vld [vmem:[%s1260 + $0x78] sm:$0xff]
    %v1277 = vld [vmem:[%s1260 + $0x80] sm:$0xff]
    %v1278 = vld [vmem:[%s1260 + $0x88] sm:$0xff]
    %v1279 = vld [vmem:[%s1260 + $0x90] sm:$0xff]
    %v1280 = vld [vmem:[%s1260 + $0x98] sm:$0xff]
    %v1281 = vld [vmem:[%s1260 + $0xa0] sm:$0xff]
    %v1282 = vld [vmem:[%s1260 + $0xa8] sm:$0xff]
    %v1283 = vld [vmem:[%s1260 + $0xb0] sm:$0xff]
    %v1284 = vld [vmem:[%s1260 + $0xb8] sm:$0xff]
    %v1285 = vld [vmem:[%s1260 + $0xc0] sm:$0xff]
    %v1286 = vld [vmem:[%s1260 + $0xc8] sm:$0xff]
    %v1287 = vld [vmem:[%s1260 + $0xd0] sm:$0xff]
    %v1288 = vld [vmem:[%s1260 + $0xd8] sm:$0xff]
    %v1289 = vld [vmem:[%s1260 + $0xe0] sm:$0xff]
    %v1290 = vld [vmem:[%s1260 + $0xe8] sm:$0xff]
    %v1291 = vld [vmem:[%s1260 + $0xf0] sm:$0xff]
    %v1292 = vld [vmem:[%s1260 + $0xf8] sm:$0xff]
    %v1293 = vld [vmem:[%s1260 + $0x100] sm:$0xff]
    %v1294 = vld [vmem:[%s1260 + $0x108] sm:$0xff]
    %v1295 = vld [vmem:[%s1260 + $0x110] sm:$0xff]
    %v1296 = vld [vmem:[%s1260 + $0x118] sm:$0xff]
    %v1297 = vld [vmem:[%s1260 + $0x120] sm:$0xff]
    %v1298 = vld [vmem:[%s1260 + $0x128] sm:$0xff]
    %v1299 = vld [vmem:[%s1260 + $0x130] sm:$0xff]
    %v1300 = vld [vmem:[%s1260 + $0x138] sm:$0xff]
    %v1301 = vld [vmem:[%s1260 + $0x140] sm:$0xff]
    %v1302 = vld [vmem:[%s1260 + $0x148] sm:$0xff]
    %v1303 = vld [vmem:[%s1260 + $0x150] sm:$0xff]
    %v1304 = vld [vmem:[%s1260 + $0x158] sm:$0xff]
    %v1305 = vld [vmem:[%s1260 + $0x160] sm:$0xff]
    %v1306 = vld [vmem:[%s1260 + $0x168] sm:$0xff]
    %v1307 = vld [vmem:[%s1260 + $0x170] sm:$0xff]
    %v1308 = vld [vmem:[%s1260 + $0x178] sm:$0xff]
    %1309 = vmatprep.subr.mxu0 0.0
    %1310 = vmatpush1.msra.mxu0 %v1261
    %1311 = vmatprep.subr.mxu0 0.0
    %1312 = vmatpush1.msra.mxu0 %v1262
    %1313 = vmatprep.subr.mxu0 0.0
    %1314 = vmatpush1.msra.mxu0 %v1263
    %1315 = vmatprep.subr.mxu0 0.0
    %1316 = vmatpush1.msra.mxu0 %v1264
    %1317 = vmatprep.subr.mxu0 0.0
    %1318 = vmatpush1.msra.mxu0 %v1265
    %1319 = vmatprep.subr.mxu0 0.0
    %1320 = vmatpush1.msra.mxu0 %v1266
    %1321 = vmatprep.subr.mxu0 0.0
    %1322 = vmatpush1.msra.mxu0 %v1267
    %1323 = vmatprep.subr.mxu0 0.0
    %1324 = vmatpush1.msra.mxu0 %v1268
    %1325 = vmatprep.subr.mxu0 0.0
    %1326 = vmatpush1.msra.mxu0 %v1269
    %1327 = vmatprep.subr.mxu0 0.0
    %1328 = vmatpush1.msra.mxu0 %v1270
    %1329 = vmatprep.subr.mxu0 0.0
    %1330 = vmatpush1.msra.mxu0 %v1271
    %1331 = vmatprep.subr.mxu0 0.0
    %1332 = vmatpush1.msra.mxu0 %v1272
    %1333 = vmatprep.subr.mxu0 0.0
    %1334 = vmatpush1.msra.mxu0 %v1273
    %1335 = vmatprep.subr.mxu0 0.0
    %1336 = vmatpush1.msra.mxu0 %v1274
    %1337 = vmatprep.subr.mxu0 0.0
    %1338 = vmatpush1.msra.mxu0 %v1275
    %1339 = vmatprep.subr.mxu0 0.0
    %1340 = vmatpush1.msra.mxu0 %v1276
    %1341 = vmatprep.subr.mxu0 0.0
    %1342 = vmatpush1.msra.mxu0 %v1277
    %1343 = vmatprep.subr.mxu0 0.0
    %1344 = vmatpush1.msra.mxu0 %v1278
    %1345 = vmatprep.subr.mxu0 0.0
    %1346 = vmatpush1.msra.mxu0 %v1279
    %1347 = vmatprep.subr.mxu0 0.0
    %1348 = vmatpush1.msra.mxu0 %v1280
    %1349 = vmatprep.subr.mxu0 0.0
    %1350 = vmatpush1.msra.mxu0 %v1281
    %1351 = vmatprep.subr.mxu0 0.0
    %1352 = vmatpush1.msra.mxu0 %v1282
    %1353 = vmatprep.subr.mxu0 0.0
    %1354 = vmatpush1.msra.mxu0 %v1283
    %1355 = vmatprep.subr.mxu0 0.0
    %1356 = vmatpush1.msra.mxu0 %v1284
    %1357 = vmatprep.subr.mxu0 0.0
    %1358 = vmatpush1.msra.mxu0 %v1285
    %1359 = vmatprep.subr.mxu0 0.0
    %1360 = vmatpush1.msra.mxu0 %v1286
    %1361 = vmatprep.subr.mxu0 0.0
    %1362 = vmatpush1.msra.mxu0 %v1287
    %1363 = vmatprep.subr.mxu0 0.0
    %1364 = vmatpush1.msra.mxu0 %v1288
    %1365 = vmatprep.subr.mxu0 0.0
    %1366 = vmatpush1.msra.mxu0 %v1289
    %1367 = vmatprep.subr.mxu0 0.0
    %1368 = vmatpush1.msra.mxu0 %v1290
    %1369 = vmatprep.subr.mxu0 0.0
    %1370 = vmatpush1.msra.mxu0 %v1291
    %1371 = vmatprep.subr.mxu0 0.0
    %1372 = vmatpush1.msra.mxu0 %v1292
    %1373 = vmatprep.mubr.f32.mxu0 %v1252
    %1374 = vmatmul.mubr.f32.gmra.mrb[0].mxu0 %v1218
    %v1375 = vpop.f32.mrb[0].mxu0
    %v1376 = vadd.f32 0.0, %v1375
    %v1377 = vpop.f32.mrb[0].mxu0
    %1378 = vmatprep.mubr.f32.mxu0 %v1253
    %1379 = vmatmul.mubr.f32.gmra.mrb[0].mxu0 %v1223
    %v1380 = vpop.f32.mrb[0].mxu0
    %v1381 = vadd.f32 0.0, %v1380
    %v1382 = vpop.f32.mrb[0].mxu0
    %1383 = vmatprep.mubr.f32.mxu0 %v1254
    %1384 = vmatmul.mubr.f32.gmra.mrb[0].mxu0 %v1228
    %v1385 = vpop.f32.mrb[0].mxu0
    %v1386 = vadd.f32 0.0, %v1385
    %v1387 = vpop.f32.mrb[0].mxu0
    %1388 = vmatprep.mubr.f32.mxu0 %v1255
    %1389 = vmatmul.mubr.f32.gmra.mrb[0].mxu0 %v1233
    %v1390 = vpop.f32.mrb[0].mxu0
    %v1391 = vadd.f32 0.0, %v1390
    %v1392 = vpop.f32.mrb[0].mxu0
    %1393 = vdwg.mxu0
    %1394 = vmatprep.subr.mxu0 0.0
    %1395 = vmatpush1.msra.mxu0 %v1293
    %1396 = vmatprep.subr.mxu0 0.0
    %1397 = vmatpush1.msra.mxu0 %v1294
    %1398 = vmatprep.subr.mxu0 0.0
    %1399 = vmatpush1.msra.mxu0 %v1295
    %1400 = vmatprep.subr.mxu0 0.0
    %1401 = vmatpush1.msra.mxu0 %v1296
    %1402 = vmatprep.subr.mxu0 0.0
    %1403 = vmatpush1.msra.mxu0 %v1297
    %1404 = vmatprep.subr.mxu0 0.0
    %1405 = vmatpush1.msra.mxu0 %v1298
    %1406 = vmatprep.subr.mxu0 0.0
    %1407 = vmatpush1.msra.mxu0 %v1299
    %1408 = vmatprep.subr.mxu0 0.0
    %1409 = vmatpush1.msra.mxu0 %v1300
    %1410 = vmatprep.subr.mxu0 0.0
    %1411 = vmatpush1.msra.mxu0 %v1301
    %1412 = vmatprep.subr.mxu0 0.0
    %1413 = vmatpush1.msra.mxu0 %v1302
    %1414 = vmatprep.subr.mxu0 0.0
    %1415 = vmatpush1.msra.mxu0 %v1303
    %1416 = vmatprep.subr.mxu0 0.0
    %1417 = vmatpush1.msra.mxu0 %v1304
    %1418 = vmatprep.subr.mxu0 0.0
    %1419 = vmatpush1.msra.mxu0 %v1305
    %1420 = vmatprep.subr.mxu0 0.0
    %1421 = vmatpush1.msra.mxu0 %v1306
    %1422 = vmatprep.subr.mxu0 0.0
    %1423 = vmatpush1.msra.mxu0 %v1307
    %1424 = vmatprep.subr.mxu0 0.0
    %1425 = vmatpush1.msra.mxu0 %v1308
    %1426 = vmatprep.subr.mxu0 0.0
    %1427 = vmatpush1.msra.mxu0 0.0
    %1428 = vmatprep.subr.mxu0 0.0
    %1429 = vmatpush1.msra.mxu0 0.0
    %1430 = vmatprep.subr.mxu0 0.0
    %1431 = vmatpush1.msra.mxu0 0.0
    %1432 = vmatprep.subr.mxu0 0.0
    %1433 = vmatpush1.msra.mxu0 0.0
    %1434 = vmatprep.subr.mxu0 0.0
    %1435 = vmatpush1.msra.mxu0 0.0
    %1436 = vmatprep.subr.mxu0 0.0
    %1437 = vmatpush1.msra.mxu0 0.0
    %1438 = vmatprep.subr.mxu0 0.0
    %1439 = vmatpush1.msra.mxu0 0.0
    %1440 = vmatprep.subr.mxu0 0.0
    %1441 = vmatpush1.msra.mxu0 0.0
    %1442 = vmatprep.subr.mxu0 0.0
    %1443 = vmatpush1.msra.mxu0 0.0
    %1444 = vmatprep.subr.mxu0 0.0
    %1445 = vmatpush1.msra.mxu0 0.0
    %1446 = vmatprep.subr.mxu0 0.0
    %1447 = vmatpush1.msra.mxu0 0.0
    %1448 = vmatprep.subr.mxu0 0.0
    %1449 = vmatpush1.msra.mxu0 0.0
    %1450 = vmatprep.subr.mxu0 0.0
    %1451 = vmatpush1.msra.mxu0 0.0
    %1452 = vmatprep.subr.mxu0 0.0
    %1453 = vmatpush1.msra.mxu0 0.0
    %1454 = vmatprep.subr.mxu0 0.0
    %1455 = vmatpush1.msra.mxu0 0.0
    %1456 = vmatprep.subr.mxu0 0.0
    %1457 = vmatpush1.msra.mxu0 0.0
    %1458 = vmatprep.mubr.f32.mxu0 0.0
    %1459 = vmatmul.mubr.f32.gmra.mrb[0].mxu0 %v1256
    %v1460 = vpop.f32.mrb[0].mxu0
    %v1461 = vadd.f32 %v1376, %v1460
    %v1462 = vpop.f32.mrb[0].mxu0
    %1463 = vmatprep.mubr.f32.mxu0 0.0
    %1464 = vmatmul.mubr.f32.gmra.mrb[0].mxu0 %v1257
    %v1465 = vpop.f32.mrb[0].mxu0
    %v1466 = vadd.f32 %v1381, %v1465
    %v1467 = vpop.f32.mrb[0].mxu0
    %1468 = vmatprep.mubr.f32.mxu0 0.0
    %1469 = vmatmul.mubr.f32.gmra.mrb[0].mxu0 %v1258
    %v1470 = vpop.f32.mrb[0].mxu0
    %v1471 = vadd.f32 %v1386, %v1470
    %v1472 = vpop.f32.mrb[0].mxu0
    %1473 = vmatprep.mubr.f32.mxu0 0.0
    %1474 = vmatmul.mubr.f32.gmra.mrb[0].mxu0 %v1259
    %v1475 = vpop.f32.mrb[0].mxu0
    %v1476 = vadd.f32 %v1391, %v1475
    %v1477 = vpop.f32.mrb[0].mxu0
    %1478 = vdwg.mxu0
    %v1479 = vlaneseq
    %v1480 = vshrl.u32 %v1479, 7
    %v1481 = vsub.s32 3, %v1480
    %v1482 = vrot.slane %v446, %v1481
    %v1483 = vlaneseq
    %v1484 = vshrl.u32 %v1483, 7
    %v1485 = vsub.s32 3, %v1484
    %v1486 = vrot.slane %v448, %v1485
    %v1487 = vlaneseq
    %v1488 = vshrl.u32 %v1487, 7
    %v1489 = vsub.s32 3, %v1488
    %v1490 = vrot.slane %v737, %v1489
    %v1491 = vlaneseq
    %v1492 = vshrl.u32 %v1491, 7
    %v1493 = vsub.s32 3, %v1492
    %v1494 = vrot.slane %v739, %v1493
    %v1495 = vmul.f32 %v1461, %v1482
    %v1496 = vmul.f32 %v1466, %v1482
    %v1497 = vmul.f32 %v1471, %v1486
    %v1498 = vmul.f32 %v1476, %v1486
    %v1499 = vmul.f32 %v1461, %v1490
    %v1500 = vmul.f32 %v1466, %v1490
    %v1501 = vmul.f32 %v1471, %v1494
    %v1502 = vmul.f32 %v1476, %v1494
    %s1503 = scalar_lea.vmem %s6, 1152
    %v1504 = vld [vmem:[%s1503] sm:$0xff]
    %v1505 = vld [vmem:[%s1503 + $0x8] sm:$0xff]
    %v1506 = vld [vmem:[%s1503 + $0x10] sm:$0xff]
    %v1507 = vld [vmem:[%s1503 + $0x18] sm:$0xff]
    %v1508 = vld [vmem:[%s1503 + $0x20] sm:$0xff]
    %v1509 = vld [vmem:[%s1503 + $0x28] sm:$0xff]
    %v1510 = vld [vmem:[%s1503 + $0x30] sm:$0xff]
    %v1511 = vld [vmem:[%s1503 + $0x38] sm:$0xff]
    %v1512 = vld [vmem:[%s1503 + $0x40] sm:$0xff]
    %v1513 = vld [vmem:[%s1503 + $0x48] sm:$0xff]
    %v1514 = vld [vmem:[%s1503 + $0x50] sm:$0xff]
    %v1515 = vld [vmem:[%s1503 + $0x58] sm:$0xff]
    %v1516 = vld [vmem:[%s1503 + $0x60] sm:$0xff]
    %v1517 = vld [vmem:[%s1503 + $0x68] sm:$0xff]
    %v1518 = vld [vmem:[%s1503 + $0x70] sm:$0xff]
    %v1519 = vld [vmem:[%s1503 + $0x78] sm:$0xff]
    %v1520 = vld [vmem:[%s1503 + $0x80] sm:$0xff]
    %v1521 = vld [vmem:[%s1503 + $0x88] sm:$0xff]
    %v1522 = vld [vmem:[%s1503 + $0x90] sm:$0xff]
    %v1523 = vld [vmem:[%s1503 + $0x98] sm:$0xff]
    %v1524 = vld [vmem:[%s1503 + $0xa0] sm:$0xff]
    %v1525 = vld [vmem:[%s1503 + $0xa8] sm:$0xff]
    %v1526 = vld [vmem:[%s1503 + $0xb0] sm:$0xff]
    %v1527 = vld [vmem:[%s1503 + $0xb8] sm:$0xff]
    %v1528 = vld [vmem:[%s1503 + $0xc0] sm:$0xff]
    %v1529 = vld [vmem:[%s1503 + $0xc8] sm:$0xff]
    %v1530 = vld [vmem:[%s1503 + $0xd0] sm:$0xff]
    %v1531 = vld [vmem:[%s1503 + $0xd8] sm:$0xff]
    %v1532 = vld [vmem:[%s1503 + $0xe0] sm:$0xff]
    %v1533 = vld [vmem:[%s1503 + $0xe8] sm:$0xff]
    %v1534 = vld [vmem:[%s1503 + $0xf0] sm:$0xff]
    %v1535 = vld [vmem:[%s1503 + $0xf8] sm:$0xff]
    %v1536 = vld [vmem:[%s1503 + $0x100] sm:$0xff]
    %v1537 = vld [vmem:[%s1503 + $0x108] sm:$0xff]
    %v1538 = vld [vmem:[%s1503 + $0x110] sm:$0xff]
    %v1539 = vld [vmem:[%s1503 + $0x118] sm:$0xff]
    %v1540 = vld [vmem:[%s1503 + $0x120] sm:$0xff]
    %v1541 = vld [vmem:[%s1503 + $0x128] sm:$0xff]
    %v1542 = vld [vmem:[%s1503 + $0x130] sm:$0xff]
    %v1543 = vld [vmem:[%s1503 + $0x138] sm:$0xff]
    %v1544 = vld [vmem:[%s1503 + $0x140] sm:$0xff]
    %v1545 = vld [vmem:[%s1503 + $0x148] sm:$0xff]
    %v1546 = vld [vmem:[%s1503 + $0x150] sm:$0xff]
    %v1547 = vld [vmem:[%s1503 + $0x158] sm:$0xff]
    %v1548 = vld [vmem:[%s1503 + $0x160] sm:$0xff]
    %v1549 = vld [vmem:[%s1503 + $0x168] sm:$0xff]
    %v1550 = vld [vmem:[%s1503 + $0x170] sm:$0xff]
    %v1551 = vld [vmem:[%s1503 + $0x178] sm:$0xff]
    %1552 = vmatprep.subr.mxu0 0.0
    %1553 = vmatpush1.msra.mxu0 %v1504
    %1554 = vmatprep.subr.mxu0 0.0
    %1555 = vmatpush1.msra.mxu0 %v1505
    %1556 = vmatprep.subr.mxu0 0.0
    %1557 = vmatpush1.msra.mxu0 %v1506
    %1558 = vmatprep.subr.mxu0 0.0
    %1559 = vmatpush1.msra.mxu0 %v1507
    %1560 = vmatprep.subr.mxu0 0.0
    %1561 = vmatpush1.msra.mxu0 %v1508
    %1562 = vmatprep.subr.mxu0 0.0
    %1563 = vmatpush1.msra.mxu0 %v1509
    %1564 = vmatprep.subr.mxu0 0.0
    %1565 = vmatpush1.msra.mxu0 %v1510
    %1566 = vmatprep.subr.mxu0 0.0
    %1567 = vmatpush1.msra.mxu0 %v1511
    %1568 = vmatprep.subr.mxu0 0.0
    %1569 = vmatpush1.msra.mxu0 %v1512
    %1570 = vmatprep.subr.mxu0 0.0
    %1571 = vmatpush1.msra.mxu0 %v1513
    %1572 = vmatprep.subr.mxu0 0.0
    %1573 = vmatpush1.msra.mxu0 %v1514
    %1574 = vmatprep.subr.mxu0 0.0
    %1575 = vmatpush1.msra.mxu0 %v1515
    %1576 = vmatprep.subr.mxu0 0.0
    %1577 = vmatpush1.msra.mxu0 %v1516
    %1578 = vmatprep.subr.mxu0 0.0
    %1579 = vmatpush1.msra.mxu0 %v1517
    %1580 = vmatprep.subr.mxu0 0.0
    %1581 = vmatpush1.msra.mxu0 %v1518
    %1582 = vmatprep.subr.mxu0 0.0
    %1583 = vmatpush1.msra.mxu0 %v1519
    %1584 = vmatprep.subr.mxu0 0.0
    %1585 = vmatpush1.msra.mxu0 %v1520
    %1586 = vmatprep.subr.mxu0 0.0
    %1587 = vmatpush1.msra.mxu0 %v1521
    %1588 = vmatprep.subr.mxu0 0.0
    %1589 = vmatpush1.msra.mxu0 %v1522
    %1590 = vmatprep.subr.mxu0 0.0
    %1591 = vmatpush1.msra.mxu0 %v1523
    %1592 = vmatprep.subr.mxu0 0.0
    %1593 = vmatpush1.msra.mxu0 %v1524
    %1594 = vmatprep.subr.mxu0 0.0
    %1595 = vmatpush1.msra.mxu0 %v1525
    %1596 = vmatprep.subr.mxu0 0.0
    %1597 = vmatpush1.msra.mxu0 %v1526
    %1598 = vmatprep.subr.mxu0 0.0
    %1599 = vmatpush1.msra.mxu0 %v1527
    %1600 = vmatprep.subr.mxu0 0.0
    %1601 = vmatpush1.msra.mxu0 %v1528
    %1602 = vmatprep.subr.mxu0 0.0
    %1603 = vmatpush1.msra.mxu0 %v1529
    %1604 = vmatprep.subr.mxu0 0.0
    %1605 = vmatpush1.msra.mxu0 %v1530
    %1606 = vmatprep.subr.mxu0 0.0
    %1607 = vmatpush1.msra.mxu0 %v1531
    %1608 = vmatprep.subr.mxu0 0.0
    %1609 = vmatpush1.msra.mxu0 %v1532
    %1610 = vmatprep.subr.mxu0 0.0
    %1611 = vmatpush1.msra.mxu0 %v1533
    %1612 = vmatprep.subr.mxu0 0.0
    %1613 = vmatpush1.msra.mxu0 %v1534
    %1614 = vmatprep.subr.mxu0 0.0
    %1615 = vmatpush1.msra.mxu0 %v1535
    %1616 = vmatprep.mubr.f32.mxu0 %v1495
    %1617 = vmatmul.mubr.f32.gmra.mrb[0].mxu0 %v1461
    %v1618 = vpop.f32.mrb[0].mxu0
    %v1619 = vadd.f32 0.0, %v1618
    %v1620 = vpop.f32.mrb[0].mxu0
    %1621 = vmatprep.mubr.f32.mxu0 %v1496
    %1622 = vmatmul.mubr.f32.gmra.mrb[0].mxu0 %v1466
    %v1623 = vpop.f32.mrb[0].mxu0
    %v1624 = vadd.f32 0.0, %v1623
    %v1625 = vpop.f32.mrb[0].mxu0
    %1626 = vmatprep.mubr.f32.mxu0 %v1497
    %1627 = vmatmul.mubr.f32.gmra.mrb[0].mxu0 %v1471
    %v1628 = vpop.f32.mrb[0].mxu0
    %v1629 = vadd.f32 0.0, %v1628
    %v1630 = vpop.f32.mrb[0].mxu0
    %1631 = vmatprep.mubr.f32.mxu0 %v1498
    %1632 = vmatmul.mubr.f32.gmra.mrb[0].mxu0 %v1476
    %v1633 = vpop.f32.mrb[0].mxu0
    %v1634 = vadd.f32 0.0, %v1633
    %v1635 = vpop.f32.mrb[0].mxu0
    %1636 = vdwg.mxu0
    %1637 = vmatprep.subr.mxu0 0.0
    %1638 = vmatpush1.msra.mxu0 %v1536
    %1639 = vmatprep.subr.mxu0 0.0
    %1640 = vmatpush1.msra.mxu0 %v1537
    %1641 = vmatprep.subr.mxu0 0.0
    %1642 = vmatpush1.msra.mxu0 %v1538
    %1643 = vmatprep.subr.mxu0 0.0
    %1644 = vmatpush1.msra.mxu0 %v1539
    %1645 = vmatprep.subr.mxu0 0.0
    %1646 = vmatpush1.msra.mxu0 %v1540
    %1647 = vmatprep.subr.mxu0 0.0
    %1648 = vmatpush1.msra.mxu0 %v1541
    %1649 = vmatprep.subr.mxu0 0.0
    %1650 = vmatpush1.msra.mxu0 %v1542
    %1651 = vmatprep.subr.mxu0 0.0
    %1652 = vmatpush1.msra.mxu0 %v1543
    %1653 = vmatprep.subr.mxu0 0.0
    %1654 = vmatpush1.msra.mxu0 %v1544
    %1655 = vmatprep.subr.mxu0 0.0
    %1656 = vmatpush1.msra.mxu0 %v1545
    %1657 = vmatprep.subr.mxu0 0.0
    %1658 = vmatpush1.msra.mxu0 %v1546
    %1659 = vmatprep.subr.mxu0 0.0
    %1660 = vmatpush1.msra.mxu0 %v1547
    %1661 = vmatprep.subr.mxu0 0.0
    %1662 = vmatpush1.msra.mxu0 %v1548
    %1663 = vmatprep.subr.mxu0 0.0
    %1664 = vmatpush1.msra.mxu0 %v1549
    %1665 = vmatprep.subr.mxu0 0.0
    %1666 = vmatpush1.msra.mxu0 %v1550
    %1667 = vmatprep.subr.mxu0 0.0
    %1668 = vmatpush1.msra.mxu0 %v1551
    %1669 = vmatprep.subr.mxu0 0.0
    %1670 = vmatpush1.msra.mxu0 0.0
    %1671 = vmatprep.subr.mxu0 0.0
    %1672 = vmatpush1.msra.mxu0 0.0
    %1673 = vmatprep.subr.mxu0 0.0
    %1674 = vmatpush1.msra.mxu0 0.0
    %1675 = vmatprep.subr.mxu0 0.0
    %1676 = vmatpush1.msra.mxu0 0.0
    %1677 = vmatprep.subr.mxu0 0.0
    %1678 = vmatpush1.msra.mxu0 0.0
    %1679 = vmatprep.subr.mxu0 0.0
    %1680 = vmatpush1.msra.mxu0 0.0
    %1681 = vmatprep.subr.mxu0 0.0
    %1682 = vmatpush1.msra.mxu0 0.0
    %1683 = vmatprep.subr.mxu0 0.0
    %1684 = vmatpush1.msra.mxu0 0.0
    %1685 = vmatprep.subr.mxu0 0.0
    %1686 = vmatpush1.msra.mxu0 0.0
    %1687 = vmatprep.subr.mxu0 0.0
    %1688 = vmatpush1.msra.mxu0 0.0
    %1689 = vmatprep.subr.mxu0 0.0
    %1690 = vmatpush1.msra.mxu0 0.0
    %1691 = vmatprep.subr.mxu0 0.0
    %1692 = vmatpush1.msra.mxu0 0.0
    %1693 = vmatprep.subr.mxu0 0.0
    %1694 = vmatpush1.msra.mxu0 0.0
    %1695 = vmatprep.subr.mxu0 0.0
    %1696 = vmatpush1.msra.mxu0 0.0
    %1697 = vmatprep.subr.mxu0 0.0
    %1698 = vmatpush1.msra.mxu0 0.0
    %1699 = vmatprep.subr.mxu0 0.0
    %1700 = vmatpush1.msra.mxu0 0.0
    %1701 = vmatprep.mubr.f32.mxu0 0.0
    %1702 = vmatmul.mubr.f32.gmra.mrb[0].mxu0 %v1499
    %v1703 = vpop.f32.mrb[0].mxu0
    %v1704 = vadd.f32 %v1619, %v1703
    %v1705 = vpop.f32.mrb[0].mxu0
    %1706 = vmatprep.mubr.f32.mxu0 0.0
    %1707 = vmatmul.mubr.f32.gmra.mrb[0].mxu0 %v1500
    %v1708 = vpop.f32.mrb[0].mxu0
    %v1709 = vadd.f32 %v1624, %v1708
    %v1710 = vpop.f32.mrb[0].mxu0
    %1711 = vmatprep.mubr.f32.mxu0 0.0
    %1712 = vmatmul.mubr.f32.gmra.mrb[0].mxu0 %v1501
    %v1713 = vpop.f32.mrb[0].mxu0
    %v1714 = vadd.f32 %v1629, %v1713
    %v1715 = vpop.f32.mrb[0].mxu0
    %1716 = vmatprep.mubr.f32.mxu0 0.0
    %1717 = vmatmul.mubr.f32.gmra.mrb[0].mxu0 %v1502
    %v1718 = vpop.f32.mrb[0].mxu0
    %v1719 = vadd.f32 %v1634, %v1718
    %v1720 = vpop.f32.mrb[0].mxu0
    %1721 = vdwg.mxu0
    %v1722 = vlaneseq
    %v1723 = vshrl.u32 %v1722, 7
    %v1724 = vsub.s32 4, %v1723
    %v1725 = vrot.slane %v446, %v1724
    %v1726 = vlaneseq
    %v1727 = vshrl.u32 %v1726, 7
    %v1728 = vsub.s32 4, %v1727
    %v1729 = vrot.slane %v448, %v1728
    %v1730 = vlaneseq
    %v1731 = vshrl.u32 %v1730, 7
    %v1732 = vsub.s32 4, %v1731
    %v1733 = vrot.slane %v737, %v1732
    %v1734 = vlaneseq
    %v1735 = vshrl.u32 %v1734, 7
    %v1736 = vsub.s32 4, %v1735
    %v1737 = vrot.slane %v739, %v1736
    %v1738 = vmul.f32 %v1704, %v1725
    %v1739 = vmul.f32 %v1709, %v1725
    %v1740 = vmul.f32 %v1714, %v1729
    %v1741 = vmul.f32 %v1719, %v1729
    %v1742 = vmul.f32 %v1704, %v1733
    %v1743 = vmul.f32 %v1709, %v1733
    %v1744 = vmul.f32 %v1714, %v1737
    %v1745 = vmul.f32 %v1719, %v1737
    %s1746 = scalar_lea.vmem %s6, 1536
    %v1747 = vld [vmem:[%s1746] sm:$0xff]
    %v1748 = vld [vmem:[%s1746 + $0x8] sm:$0xff]
    %v1749 = vld [vmem:[%s1746 + $0x10] sm:$0xff]
    %v1750 = vld [vmem:[%s1746 + $0x18] sm:$0xff]
    %v1751 = vld [vmem:[%s1746 + $0x20] sm:$0xff]
    %v1752 = vld [vmem:[%s1746 + $0x28] sm:$0xff]
    %v1753 = vld [vmem:[%s1746 + $0x30] sm:$0xff]
    %v1754 = vld [vmem:[%s1746 + $0x38] sm:$0xff]
    %v1755 = vld [vmem:[%s1746 + $0x40] sm:$0xff]
    %v1756 = vld [vmem:[%s1746 + $0x48] sm:$0xff]
    %v1757 = vld [vmem:[%s1746 + $0x50] sm:$0xff]
    %v1758 = vld [vmem:[%s1746 + $0x58] sm:$0xff]
    %v1759 = vld [vmem:[%s1746 + $0x60] sm:$0xff]
    %v1760 = vld [vmem:[%s1746 + $0x68] sm:$0xff]
    %v1761 = vld [vmem:[%s1746 + $0x70] sm:$0xff]
    %v1762 = vld [vmem:[%s1746 + $0x78] sm:$0xff]
    %v1763 = vld [vmem:[%s1746 + $0x80] sm:$0xff]
    %v1764 = vld [vmem:[%s1746 + $0x88] sm:$0xff]
    %v1765 = vld [vmem:[%s1746 + $0x90] sm:$0xff]
    %v1766 = vld [vmem:[%s1746 + $0x98] sm:$0xff]
    %v1767 = vld [vmem:[%s1746 + $0xa0] sm:$0xff]
    %v1768 = vld [vmem:[%s1746 + $0xa8] sm:$0xff]
    %v1769 = vld [vmem:[%s1746 + $0xb0] sm:$0xff]
    %v1770 = vld [vmem:[%s1746 + $0xb8] sm:$0xff]
    %v1771 = vld [vmem:[%s1746 + $0xc0] sm:$0xff]
    %v1772 = vld [vmem:[%s1746 + $0xc8] sm:$0xff]
    %v1773 = vld [vmem:[%s1746 + $0xd0] sm:$0xff]
    %v1774 = vld [vmem:[%s1746 + $0xd8] sm:$0xff]
    %v1775 = vld [vmem:[%s1746 + $0xe0] sm:$0xff]
    %v1776 = vld [vmem:[%s1746 + $0xe8] sm:$0xff]
    %v1777 = vld [vmem:[%s1746 + $0xf0] sm:$0xff]
    %v1778 = vld [vmem:[%s1746 + $0xf8] sm:$0xff]
    %v1779 = vld [vmem:[%s1746 + $0x100] sm:$0xff]
    %v1780 = vld [vmem:[%s1746 + $0x108] sm:$0xff]
    %v1781 = vld [vmem:[%s1746 + $0x110] sm:$0xff]
    %v1782 = vld [vmem:[%s1746 + $0x118] sm:$0xff]
    %v1783 = vld [vmem:[%s1746 + $0x120] sm:$0xff]
    %v1784 = vld [vmem:[%s1746 + $0x128] sm:$0xff]
    %v1785 = vld [vmem:[%s1746 + $0x130] sm:$0xff]
    %v1786 = vld [vmem:[%s1746 + $0x138] sm:$0xff]
    %v1787 = vld [vmem:[%s1746 + $0x140] sm:$0xff]
    %v1788 = vld [vmem:[%s1746 + $0x148] sm:$0xff]
    %v1789 = vld [vmem:[%s1746 + $0x150] sm:$0xff]
    %v1790 = vld [vmem:[%s1746 + $0x158] sm:$0xff]
    %v1791 = vld [vmem:[%s1746 + $0x160] sm:$0xff]
    %v1792 = vld [vmem:[%s1746 + $0x168] sm:$0xff]
    %v1793 = vld [vmem:[%s1746 + $0x170] sm:$0xff]
    %v1794 = vld [vmem:[%s1746 + $0x178] sm:$0xff]
    %1795 = vmatprep.subr.mxu0 0.0
    %1796 = vmatpush1.msra.mxu0 %v1747
    %1797 = vmatprep.subr.mxu0 0.0
    %1798 = vmatpush1.msra.mxu0 %v1748
    %1799 = vmatprep.subr.mxu0 0.0
    %1800 = vmatpush1.msra.mxu0 %v1749
    %1801 = vmatprep.subr.mxu0 0.0
    %1802 = vmatpush1.msra.mxu0 %v1750
    %1803 = vmatprep.subr.mxu0 0.0
    %1804 = vmatpush1.msra.mxu0 %v1751
    %1805 = vmatprep.subr.mxu0 0.0
    %1806 = vmatpush1.msra.mxu0 %v1752
    %1807 = vmatprep.subr.mxu0 0.0
    %1808 = vmatpush1.msra.mxu0 %v1753
    %1809 = vmatprep.subr.mxu0 0.0
    %1810 = vmatpush1.msra.mxu0 %v1754
    %1811 = vmatprep.subr.mxu0 0.0
    %1812 = vmatpush1.msra.mxu0 %v1755
    %1813 = vmatprep.subr.mxu0 0.0
    %1814 = vmatpush1.msra.mxu0 %v1756
    %1815 = vmatprep.subr.mxu0 0.0
    %1816 = vmatpush1.msra.mxu0 %v1757
    %1817 = vmatprep.subr.mxu0 0.0
    %1818 = vmatpush1.msra.mxu0 %v1758
    %1819 = vmatprep.subr.mxu0 0.0
    %1820 = vmatpush1.msra.mxu0 %v1759
    %1821 = vmatprep.subr.mxu0 0.0
    %1822 = vmatpush1.msra.mxu0 %v1760
    %1823 = vmatprep.subr.mxu0 0.0
    %1824 = vmatpush1.msra.mxu0 %v1761
    %1825 = vmatprep.subr.mxu0 0.0
    %1826 = vmatpush1.msra.mxu0 %v1762
    %1827 = vmatprep.subr.mxu0 0.0
    %1828 = vmatpush1.msra.mxu0 %v1763
    %1829 = vmatprep.subr.mxu0 0.0
    %1830 = vmatpush1.msra.mxu0 %v1764
    %1831 = vmatprep.subr.mxu0 0.0
    %1832 = vmatpush1.msra.mxu0 %v1765
    %1833 = vmatprep.subr.mxu0 0.0
    %1834 = vmatpush1.msra.mxu0 %v1766
    %1835 = vmatprep.subr.mxu0 0.0
    %1836 = vmatpush1.msra.mxu0 %v1767
    %1837 = vmatprep.subr.mxu0 0.0
    %1838 = vmatpush1.msra.mxu0 %v1768
    %1839 = vmatprep.subr.mxu0 0.0
    %1840 = vmatpush1.msra.mxu0 %v1769
    %1841 = vmatprep.subr.mxu0 0.0
    %1842 = vmatpush1.msra.mxu0 %v1770
    %1843 = vmatprep.subr.mxu0 0.0
    %1844 = vmatpush1.msra.mxu0 %v1771
    %1845 = vmatprep.subr.mxu0 0.0
    %1846 = vmatpush1.msra.mxu0 %v1772
    %1847 = vmatprep.subr.mxu0 0.0
    %1848 = vmatpush1.msra.mxu0 %v1773
    %1849 = vmatprep.subr.mxu0 0.0
    %1850 = vmatpush1.msra.mxu0 %v1774
    %1851 = vmatprep.subr.mxu0 0.0
    %1852 = vmatpush1.msra.mxu0 %v1775
    %1853 = vmatprep.subr.mxu0 0.0
    %1854 = vmatpush1.msra.mxu0 %v1776
    %1855 = vmatprep.subr.mxu0 0.0
    %1856 = vmatpush1.msra.mxu0 %v1777
    %1857 = vmatprep.subr.mxu0 0.0
    %1858 = vmatpush1.msra.mxu0 %v1778
    %1859 = vmatprep.mubr.f32.mxu0 %v1738
    %1860 = vmatmul.mubr.f32.gmra.mrb[0].mxu0 %v1704
    %v1861 = vpop.f32.mrb[0].mxu0
    %v1862 = vadd.f32 0.0, %v1861
    %v1863 = vpop.f32.mrb[0].mxu0
    %1864 = vmatprep.mubr.f32.mxu0 %v1739
    %1865 = vmatmul.mubr.f32.gmra.mrb[0].mxu0 %v1709
    %v1866 = vpop.f32.mrb[0].mxu0
    %v1867 = vadd.f32 0.0, %v1866
    %v1868 = vpop.f32.mrb[0].mxu0
    %1869 = vmatprep.mubr.f32.mxu0 %v1740
    %1870 = vmatmul.mubr.f32.gmra.mrb[0].mxu0 %v1714
    %v1871 = vpop.f32.mrb[0].mxu0
    %v1872 = vadd.f32 0.0, %v1871
    %v1873 = vpop.f32.mrb[0].mxu0
    %1874 = vmatprep.mubr.f32.mxu0 %v1741
    %1875 = vmatmul.mubr.f32.gmra.mrb[0].mxu0 %v1719
    %v1876 = vpop.f32.mrb[0].mxu0
    %v1877 = vadd.f32 0.0, %v1876
    %v1878 = vpop.f32.mrb[0].mxu0
    %1879 = vdwg.mxu0
    %1880 = vmatprep.subr.mxu0 0.0
    %1881 = vmatpush1.msra.mxu0 %v1779
    %1882 = vmatprep.subr.mxu0 0.0
    %1883 = vmatpush1.msra.mxu0 %v1780
    %1884 = vmatprep.subr.mxu0 0.0
    %1885 = vmatpush1.msra.mxu0 %v1781
    %1886 = vmatprep.subr.mxu0 0.0
    %1887 = vmatpush1.msra.mxu0 %v1782
    %1888 = vmatprep.subr.mxu0 0.0
    %1889 = vmatpush1.msra.mxu0 %v1783
    %1890 = vmatprep.subr.mxu0 0.0
    %1891 = vmatpush1.msra.mxu0 %v1784
    %1892 = vmatprep.subr.mxu0 0.0
    %1893 = vmatpush1.msra.mxu0 %v1785
    %1894 = vmatprep.subr.mxu0 0.0
    %1895 = vmatpush1.msra.mxu0 %v1786
    %1896 = vmatprep.subr.mxu0 0.0
    %1897 = vmatpush1.msra.mxu0 %v1787
    %1898 = vmatprep.subr.mxu0 0.0
    %1899 = vmatpush1.msra.mxu0 %v1788
    %1900 = vmatprep.subr.mxu0 0.0
    %1901 = vmatpush1.msra.mxu0 %v1789
    %1902 = vmatprep.subr.mxu0 0.0
    %1903 = vmatpush1.msra.mxu0 %v1790
    %1904 = vmatprep.subr.mxu0 0.0
    %1905 = vmatpush1.msra.mxu0 %v1791
    %1906 = vmatprep.subr.mxu0 0.0
    %1907 = vmatpush1.msra.mxu0 %v1792
    %1908 = vmatprep.subr.mxu0 0.0
    %1909 = vmatpush1.msra.mxu0 %v1793
    %1910 = vmatprep.subr.mxu0 0.0
    %1911 = vmatpush1.msra.mxu0 %v1794
    %1912 = vmatprep.subr.mxu0 0.0
    %1913 = vmatpush1.msra.mxu0 0.0
    %1914 = vmatprep.subr.mxu0 0.0
    %1915 = vmatpush1.msra.mxu0 0.0
    %1916 = vmatprep.subr.mxu0 0.0
    %1917 = vmatpush1.msra.mxu0 0.0
    %1918 = vmatprep.subr.mxu0 0.0
    %1919 = vmatpush1.msra.mxu0 0.0
    %1920 = vmatprep.subr.mxu0 0.0
    %1921 = vmatpush1.msra.mxu0 0.0
    %1922 = vmatprep.subr.mxu0 0.0
    %1923 = vmatpush1.msra.mxu0 0.0
    %1924 = vmatprep.subr.mxu0 0.0
    %1925 = vmatpush1.msra.mxu0 0.0
    %1926 = vmatprep.subr.mxu0 0.0
    %1927 = vmatpush1.msra.mxu0 0.0
    %1928 = vmatprep.subr.mxu0 0.0
    %1929 = vmatpush1.msra.mxu0 0.0
    %1930 = vmatprep.subr.mxu0 0.0
    %1931 = vmatpush1.msra.mxu0 0.0
    %1932 = vmatprep.subr.mxu0 0.0
    %1933 = vmatpush1.msra.mxu0 0.0
    %1934 = vmatprep.subr.mxu0 0.0
    %1935 = vmatpush1.msra.mxu0 0.0
    %1936 = vmatprep.subr.mxu0 0.0
    %1937 = vmatpush1.msra.mxu0 0.0
    %1938 = vmatprep.subr.mxu0 0.0
    %1939 = vmatpush1.msra.mxu0 0.0
    %1940 = vmatprep.subr.mxu0 0.0
    %1941 = vmatpush1.msra.mxu0 0.0
    %1942 = vmatprep.subr.mxu0 0.0
    %1943 = vmatpush1.msra.mxu0 0.0
    %1944 = vmatprep.mubr.f32.mxu0 0.0
    %1945 = vmatmul.mubr.f32.gmra.mrb[0].mxu0 %v1742
    %v1946 = vpop.f32.mrb[0].mxu0
    %v1947 = vadd.f32 %v1862, %v1946
    %v1948 = vpop.f32.mrb[0].mxu0
    %1949 = vmatprep.mubr.f32.mxu0 0.0
    %1950 = vmatmul.mubr.f32.gmra.mrb[0].mxu0 %v1743
    %v1951 = vpop.f32.mrb[0].mxu0
    %v1952 = vadd.f32 %v1867, %v1951
    %v1953 = vpop.f32.mrb[0].mxu0
    %1954 = vmatprep.mubr.f32.mxu0 0.0
    %1955 = vmatmul.mubr.f32.gmra.mrb[0].mxu0 %v1744
    %v1956 = vpop.f32.mrb[0].mxu0
    %v1957 = vadd.f32 %v1872, %v1956
    %v1958 = vpop.f32.mrb[0].mxu0
    %1959 = vmatprep.mubr.f32.mxu0 0.0
    %1960 = vmatmul.mubr.f32.gmra.mrb[0].mxu0 %v1745
    %v1961 = vpop.f32.mrb[0].mxu0
    %v1962 = vadd.f32 %v1877, %v1961
    %v1963 = vpop.f32.mrb[0].mxu0
    %1964 = vdwg.mxu0
    %v1965 = vlaneseq
    %v1966 = vshrl.u32 %v1965, 7
    %v1967 = vsub.s32 5, %v1966
    %v1968 = vrot.slane %v446, %v1967
    %v1969 = vlaneseq
    %v1970 = vshrl.u32 %v1969, 7
    %v1971 = vsub.s32 5, %v1970
    %v1972 = vrot.slane %v448, %v1971
    %v1973 = vlaneseq
    %v1974 = vshrl.u32 %v1973, 7
    %v1975 = vsub.s32 5, %v1974
    %v1976 = vrot.slane %v737, %v1975
    %v1977 = vlaneseq
    %v1978 = vshrl.u32 %v1977, 7
    %v1979 = vsub.s32 5, %v1978
    %v1980 = vrot.slane %v739, %v1979
    %v1981 = vmul.f32 %v1947, %v1968
    %v1982 = vmul.f32 %v1952, %v1968
    %v1983 = vmul.f32 %v1957, %v1972
    %v1984 = vmul.f32 %v1962, %v1972
    %v1985 = vmul.f32 %v1947, %v1976
    %v1986 = vmul.f32 %v1952, %v1976
    %v1987 = vmul.f32 %v1957, %v1980
    %v1988 = vmul.f32 %v1962, %v1980
    %s1989 = scalar_lea.vmem %s6, 1920
    %v1990 = vld [vmem:[%s1989] sm:$0xff]
    %v1991 = vld [vmem:[%s1989 + $0x8] sm:$0xff]
    %v1992 = vld [vmem:[%s1989 + $0x10] sm:$0xff]
    %v1993 = vld [vmem:[%s1989 + $0x18] sm:$0xff]
    %v1994 = vld [vmem:[%s1989 + $0x20] sm:$0xff]
    %v1995 = vld [vmem:[%s1989 + $0x28] sm:$0xff]
    %v1996 = vld [vmem:[%s1989 + $0x30] sm:$0xff]
    %v1997 = vld [vmem:[%s1989 + $0x38] sm:$0xff]
    %v1998 = vld [vmem:[%s1989 + $0x40] sm:$0xff]
    %v1999 = vld [vmem:[%s1989 + $0x48] sm:$0xff]
    %v2000 = vld [vmem:[%s1989 + $0x50] sm:$0xff]
    %v2001 = vld [vmem:[%s1989 + $0x58] sm:$0xff]
    %v2002 = vld [vmem:[%s1989 + $0x60] sm:$0xff]
    %v2003 = vld [vmem:[%s1989 + $0x68] sm:$0xff]
    %v2004 = vld [vmem:[%s1989 + $0x70] sm:$0xff]
    %v2005 = vld [vmem:[%s1989 + $0x78] sm:$0xff]
    %v2006 = vld [vmem:[%s1989 + $0x80] sm:$0xff]
    %v2007 = vld [vmem:[%s1989 + $0x88] sm:$0xff]
    %v2008 = vld [vmem:[%s1989 + $0x90] sm:$0xff]
    %v2009 = vld [vmem:[%s1989 + $0x98] sm:$0xff]
    %v2010 = vld [vmem:[%s1989 + $0xa0] sm:$0xff]
    %v2011 = vld [vmem:[%s1989 + $0xa8] sm:$0xff]
    %v2012 = vld [vmem:[%s1989 + $0xb0] sm:$0xff]
    %v2013 = vld [vmem:[%s1989 + $0xb8] sm:$0xff]
    %v2014 = vld [vmem:[%s1989 + $0xc0] sm:$0xff]
    %v2015 = vld [vmem:[%s1989 + $0xc8] sm:$0xff]
    %v2016 = vld [vmem:[%s1989 + $0xd0] sm:$0xff]
    %v2017 = vld [vmem:[%s1989 + $0xd8] sm:$0xff]
    %v2018 = vld [vmem:[%s1989 + $0xe0] sm:$0xff]
    %v2019 = vld [vmem:[%s1989 + $0xe8] sm:$0xff]
    %v2020 = vld [vmem:[%s1989 + $0xf0] sm:$0xff]
    %v2021 = vld [vmem:[%s1989 + $0xf8] sm:$0xff]
    %v2022 = vld [vmem:[%s1989 + $0x100] sm:$0xff]
    %v2023 = vld [vmem:[%s1989 + $0x108] sm:$0xff]
    %v2024 = vld [vmem:[%s1989 + $0x110] sm:$0xff]
    %v2025 = vld [vmem:[%s1989 + $0x118] sm:$0xff]
    %v2026 = vld [vmem:[%s1989 + $0x120] sm:$0xff]
    %v2027 = vld [vmem:[%s1989 + $0x128] sm:$0xff]
    %v2028 = vld [vmem:[%s1989 + $0x130] sm:$0xff]
    %v2029 = vld [vmem:[%s1989 + $0x138] sm:$0xff]
    %v2030 = vld [vmem:[%s1989 + $0x140] sm:$0xff]
    %v2031 = vld [vmem:[%s1989 + $0x148] sm:$0xff]
    %v2032 = vld [vmem:[%s1989 + $0x150] sm:$0xff]
    %v2033 = vld [vmem:[%s1989 + $0x158] sm:$0xff]
    %v2034 = vld [vmem:[%s1989 + $0x160] sm:$0xff]
    %v2035 = vld [vmem:[%s1989 + $0x168] sm:$0xff]
    %v2036 = vld [vmem:[%s1989 + $0x170] sm:$0xff]
    %v2037 = vld [vmem:[%s1989 + $0x178] sm:$0xff]
    %2038 = vmatprep.subr.mxu0 0.0
    %2039 = vmatpush1.msra.mxu0 %v1990
    %2040 = vmatprep.subr.mxu0 0.0
    %2041 = vmatpush1.msra.mxu0 %v1991
    %2042 = vmatprep.subr.mxu0 0.0
    %2043 = vmatpush1.msra.mxu0 %v1992
    %2044 = vmatprep.subr.mxu0 0.0
    %2045 = vmatpush1.msra.mxu0 %v1993
    %2046 = vmatprep.subr.mxu0 0.0
    %2047 = vmatpush1.msra.mxu0 %v1994
    %2048 = vmatprep.subr.mxu0 0.0
    %2049 = vmatpush1.msra.mxu0 %v1995
    %2050 = vmatprep.subr.mxu0 0.0
    %2051 = vmatpush1.msra.mxu0 %v1996
    %2052 = vmatprep.subr.mxu0 0.0
    %2053 = vmatpush1.msra.mxu0 %v1997
    %2054 = vmatprep.subr.mxu0 0.0
    %2055 = vmatpush1.msra.mxu0 %v1998
    %2056 = vmatprep.subr.mxu0 0.0
    %2057 = vmatpush1.msra.mxu0 %v1999
    %2058 = vmatprep.subr.mxu0 0.0
    %2059 = vmatpush1.msra.mxu0 %v2000
    %2060 = vmatprep.subr.mxu0 0.0
    %2061 = vmatpush1.msra.mxu0 %v2001
    %2062 = vmatprep.subr.mxu0 0.0
    %2063 = vmatpush1.msra.mxu0 %v2002
    %2064 = vmatprep.subr.mxu0 0.0
    %2065 = vmatpush1.msra.mxu0 %v2003
    %2066 = vmatprep.subr.mxu0 0.0
    %2067 = vmatpush1.msra.mxu0 %v2004
    %2068 = vmatprep.subr.mxu0 0.0
    %2069 = vmatpush1.msra.mxu0 %v2005
    %2070 = vmatprep.subr.mxu0 0.0
    %2071 = vmatpush1.msra.mxu0 %v2006
    %2072 = vmatprep.subr.mxu0 0.0
    %2073 = vmatpush1.msra.mxu0 %v2007
    %2074 = vmatprep.subr.mxu0 0.0
    %2075 = vmatpush1.msra.mxu0 %v2008
    %2076 = vmatprep.subr.mxu0 0.0
    %2077 = vmatpush1.msra.mxu0 %v2009
    %2078 = vmatprep.subr.mxu0 0.0
    %2079 = vmatpush1.msra.mxu0 %v2010
    %2080 = vmatprep.subr.mxu0 0.0
    %2081 = vmatpush1.msra.mxu0 %v2011
    %2082 = vmatprep.subr.mxu0 0.0
    %2083 = vmatpush1.msra.mxu0 %v2012
    %2084 = vmatprep.subr.mxu0 0.0
    %2085 = vmatpush1.msra.mxu0 %v2013
    %2086 = vmatprep.subr.mxu0 0.0
    %2087 = vmatpush1.msra.mxu0 %v2014
    %2088 = vmatprep.subr.mxu0 0.0
    %2089 = vmatpush1.msra.mxu0 %v2015
    %2090 = vmatprep.subr.mxu0 0.0
    %2091 = vmatpush1.msra.mxu0 %v2016
    %2092 = vmatprep.subr.mxu0 0.0
    %2093 = vmatpush1.msra.mxu0 %v2017
    %2094 = vmatprep.subr.mxu0 0.0
    %2095 = vmatpush1.msra.mxu0 %v2018
    %2096 = vmatprep.subr.mxu0 0.0
    %2097 = vmatpush1.msra.mxu0 %v2019
    %2098 = vmatprep.subr.mxu0 0.0
    %2099 = vmatpush1.msra.mxu0 %v2020
    %2100 = vmatprep.subr.mxu0 0.0
    %2101 = vmatpush1.msra.mxu0 %v2021
    %2102 = vmatprep.mubr.f32.mxu0 %v1981
    %2103 = vmatmul.mubr.f32.gmra.mrb[0].mxu0 %v1947
    %v2104 = vpop.f32.mrb[0].mxu0
    %v2105 = vadd.f32 0.0, %v2104
    %v2106 = vpop.f32.mrb[0].mxu0
    %2107 = vmatprep.mubr.f32.mxu0 %v1982
    %2108 = vmatmul.mubr.f32.gmra.mrb[0].mxu0 %v1952
    %v2109 = vpop.f32.mrb[0].mxu0
    %v2110 = vadd.f32 0.0, %v2109
    %v2111 = vpop.f32.mrb[0].mxu0
    %2112 = vmatprep.mubr.f32.mxu0 %v1983
    %2113 = vmatmul.mubr.f32.gmra.mrb[0].mxu0 %v1957
    %v2114 = vpop.f32.mrb[0].mxu0
    %v2115 = vadd.f32 0.0, %v2114
    %v2116 = vpop.f32.mrb[0].mxu0
    %2117 = vmatprep.mubr.f32.mxu0 %v1984
    %2118 = vmatmul.mubr.f32.gmra.mrb[0].mxu0 %v1962
    %v2119 = vpop.f32.mrb[0].mxu0
    %v2120 = vadd.f32 0.0, %v2119
    %v2121 = vpop.f32.mrb[0].mxu0
    %2122 = vdwg.mxu0
    %2123 = vmatprep.subr.mxu0 0.0
    %2124 = vmatpush1.msra.mxu0 %v2022
    %2125 = vmatprep.subr.mxu0 0.0
    %2126 = vmatpush1.msra.mxu0 %v2023
    %2127 = vmatprep.subr.mxu0 0.0
    %2128 = vmatpush1.msra.mxu0 %v2024
    %2129 = vmatprep.subr.mxu0 0.0
    %2130 = vmatpush1.msra.mxu0 %v2025
    %2131 = vmatprep.subr.mxu0 0.0
    %2132 = vmatpush1.msra.mxu0 %v2026
    %2133 = vmatprep.subr.mxu0 0.0
    %2134 = vmatpush1.msra.mxu0 %v2027
    %2135 = vmatprep.subr.mxu0 0.0
    %2136 = vmatpush1.msra.mxu0 %v2028
    %2137 = vmatprep.subr.mxu0 0.0
    %2138 = vmatpush1.msra.mxu0 %v2029
    %2139 = vmatprep.subr.mxu0 0.0
    %2140 = vmatpush1.msra.mxu0 %v2030
    %2141 = vmatprep.subr.mxu0 0.0
    %2142 = vmatpush1.msra.mxu0 %v2031
    %2143 = vmatprep.subr.mxu0 0.0
    %2144 = vmatpush1.msra.mxu0 %v2032
    %2145 = vmatprep.subr.mxu0 0.0
    %2146 = vmatpush1.msra.mxu0 %v2033
    %2147 = vmatprep.subr.mxu0 0.0
    %2148 = vmatpush1.msra.mxu0 %v2034
    %2149 = vmatprep.subr.mxu0 0.0
    %2150 = vmatpush1.msra.mxu0 %v2035
    %2151 = vmatprep.subr.mxu0 0.0
    %2152 = vmatpush1.msra.mxu0 %v2036
    %2153 = vmatprep.subr.mxu0 0.0
    %2154 = vmatpush1.msra.mxu0 %v2037
    %2155 = vmatprep.subr.mxu0 0.0
    %2156 = vmatpush1.msra.mxu0 0.0
    %2157 = vmatprep.subr.mxu0 0.0
    %2158 = vmatpush1.msra.mxu0 0.0
    %2159 = vmatprep.subr.mxu0 0.0
    %2160 = vmatpush1.msra.mxu0 0.0
    %2161 = vmatprep.subr.mxu0 0.0
    %2162 = vmatpush1.msra.mxu0 0.0
    %2163 = vmatprep.subr.mxu0 0.0
    %2164 = vmatpush1.msra.mxu0 0.0
    %2165 = vmatprep.subr.mxu0 0.0
    %2166 = vmatpush1.msra.mxu0 0.0
    %2167 = vmatprep.subr.mxu0 0.0
    %2168 = vmatpush1.msra.mxu0 0.0
    %2169 = vmatprep.subr.mxu0 0.0
    %2170 = vmatpush1.msra.mxu0 0.0
    %2171 = vmatprep.subr.mxu0 0.0
    %2172 = vmatpush1.msra.mxu0 0.0
    %2173 = vmatprep.subr.mxu0 0.0
    %2174 = vmatpush1.msra.mxu0 0.0
    %2175 = vmatprep.subr.mxu0 0.0
    %2176 = vmatpush1.msra.mxu0 0.0
    %2177 = vmatprep.subr.mxu0 0.0
    %2178 = vmatpush1.msra.mxu0 0.0
    %2179 = vmatprep.subr.mxu0 0.0
    %2180 = vmatpush1.msra.mxu0 0.0
    %2181 = vmatprep.subr.mxu0 0.0
    %2182 = vmatpush1.msra.mxu0 0.0
    %2183 = vmatprep.subr.mxu0 0.0
    %2184 = vmatpush1.msra.mxu0 0.0
    %2185 = vmatprep.subr.mxu0 0.0
    %2186 = vmatpush1.msra.mxu0 0.0
    %2187 = vmatprep.mubr.f32.mxu0 0.0
    %2188 = vmatmul.mubr.f32.gmra.mrb[0].mxu0 %v1985
    %v2189 = vpop.f32.mrb[0].mxu0
    %v2190 = vadd.f32 %v2105, %v2189
    %v2191 = vpop.f32.mrb[0].mxu0
    %2192 = vmatprep.mubr.f32.mxu0 0.0
    %2193 = vmatmul.mubr.f32.gmra.mrb[0].mxu0 %v1986
    %v2194 = vpop.f32.mrb[0].mxu0
    %v2195 = vadd.f32 %v2110, %v2194
    %v2196 = vpop.f32.mrb[0].mxu0
    %2197 = vmatprep.mubr.f32.mxu0 0.0
    %2198 = vmatmul.mubr.f32.gmra.mrb[0].mxu0 %v1987
    %v2199 = vpop.f32.mrb[0].mxu0
    %v2200 = vadd.f32 %v2115, %v2199
    %v2201 = vpop.f32.mrb[0].mxu0
    %2202 = vmatprep.mubr.f32.mxu0 0.0
    %2203 = vmatmul.mubr.f32.gmra.mrb[0].mxu0 %v1988
    %v2204 = vpop.f32.mrb[0].mxu0
    %v2205 = vadd.f32 %v2120, %v2204
    %v2206 = vpop.f32.mrb[0].mxu0
    %2207 = vdwg.mxu0
    %v2208 = vlaneseq
    %v2209 = vshrl.u32 %v2208, 7
    %v2210 = vsub.s32 6, %v2209
    %v2211 = vrot.slane %v446, %v2210
    %v2212 = vlaneseq
    %v2213 = vshrl.u32 %v2212, 7
    %v2214 = vsub.s32 6, %v2213
    %v2215 = vrot.slane %v448, %v2214
    %v2216 = vlaneseq
    %v2217 = vshrl.u32 %v2216, 7
    %v2218 = vsub.s32 6, %v2217
    %v2219 = vrot.slane %v737, %v2218
    %v2220 = vlaneseq
    %v2221 = vshrl.u32 %v2220, 7
    %v2222 = vsub.s32 6, %v2221
    %v2223 = vrot.slane %v739, %v2222
    %v2224 = vmul.f32 %v2190, %v2211
    %v2225 = vmul.f32 %v2195, %v2211
    %v2226 = vmul.f32 %v2200, %v2215
    %v2227 = vmul.f32 %v2205, %v2215
    %v2228 = vmul.f32 %v2190, %v2219
    %v2229 = vmul.f32 %v2195, %v2219
    %v2230 = vmul.f32 %v2200, %v2223
    %v2231 = vmul.f32 %v2205, %v2223
    %s2232 = scalar_lea.vmem %s6, 2304
    %v2233 = vld [vmem:[%s2232] sm:$0xff]
    %v2234 = vld [vmem:[%s2232 + $0x8] sm:$0xff]
    %v2235 = vld [vmem:[%s2232 + $0x10] sm:$0xff]
    %v2236 = vld [vmem:[%s2232 + $0x18] sm:$0xff]
    %v2237 = vld [vmem:[%s2232 + $0x20] sm:$0xff]
    %v2238 = vld [vmem:[%s2232 + $0x28] sm:$0xff]
    %v2239 = vld [vmem:[%s2232 + $0x30] sm:$0xff]
    %v2240 = vld [vmem:[%s2232 + $0x38] sm:$0xff]
    %v2241 = vld [vmem:[%s2232 + $0x40] sm:$0xff]
    %v2242 = vld [vmem:[%s2232 + $0x48] sm:$0xff]
    %v2243 = vld [vmem:[%s2232 + $0x50] sm:$0xff]
    %v2244 = vld [vmem:[%s2232 + $0x58] sm:$0xff]
    %v2245 = vld [vmem:[%s2232 + $0x60] sm:$0xff]
    %v2246 = vld [vmem:[%s2232 + $0x68] sm:$0xff]
    %v2247 = vld [vmem:[%s2232 + $0x70] sm:$0xff]
    %v2248 = vld [vmem:[%s2232 + $0x78] sm:$0xff]
    %v2249 = vld [vmem:[%s2232 + $0x80] sm:$0xff]
    %v2250 = vld [vmem:[%s2232 + $0x88] sm:$0xff]
    %v2251 = vld [vmem:[%s2232 + $0x90] sm:$0xff]
    %v2252 = vld [vmem:[%s2232 + $0x98] sm:$0xff]
    %v2253 = vld [vmem:[%s2232 + $0xa0] sm:$0xff]
    %v2254 = vld [vmem:[%s2232 + $0xa8] sm:$0xff]
    %v2255 = vld [vmem:[%s2232 + $0xb0] sm:$0xff]
    %v2256 = vld [vmem:[%s2232 + $0xb8] sm:$0xff]
    %v2257 = vld [vmem:[%s2232 + $0xc0] sm:$0xff]
    %v2258 = vld [vmem:[%s2232 + $0xc8] sm:$0xff]
    %v2259 = vld [vmem:[%s2232 + $0xd0] sm:$0xff]
    %v2260 = vld [vmem:[%s2232 + $0xd8] sm:$0xff]
    %v2261 = vld [vmem:[%s2232 + $0xe0] sm:$0xff]
    %v2262 = vld [vmem:[%s2232 + $0xe8] sm:$0xff]
    %v2263 = vld [vmem:[%s2232 + $0xf0] sm:$0xff]
    %v2264 = vld [vmem:[%s2232 + $0xf8] sm:$0xff]
    %v2265 = vld [vmem:[%s2232 + $0x100] sm:$0xff]
    %v2266 = vld [vmem:[%s2232 + $0x108] sm:$0xff]
    %v2267 = vld [vmem:[%s2232 + $0x110] sm:$0xff]
    %v2268 = vld [vmem:[%s2232 + $0x118] sm:$0xff]
    %v2269 = vld [vmem:[%s2232 + $0x120] sm:$0xff]
    %v2270 = vld [vmem:[%s2232 + $0x128] sm:$0xff]
    %v2271 = vld [vmem:[%s2232 + $0x130] sm:$0xff]
    %v2272 = vld [vmem:[%s2232 + $0x138] sm:$0xff]
    %v2273 = vld [vmem:[%s2232 + $0x140] sm:$0xff]
    %v2274 = vld [vmem:[%s2232 + $0x148] sm:$0xff]
    %v2275 = vld [vmem:[%s2232 + $0x150] sm:$0xff]
    %v2276 = vld [vmem:[%s2232 + $0x158] sm:$0xff]
    %v2277 = vld [vmem:[%s2232 + $0x160] sm:$0xff]
    %v2278 = vld [vmem:[%s2232 + $0x168] sm:$0xff]
    %v2279 = vld [vmem:[%s2232 + $0x170] sm:$0xff]
    %v2280 = vld [vmem:[%s2232 + $0x178] sm:$0xff]
    %2281 = vmatprep.subr.mxu0 0.0
    %2282 = vmatpush1.msra.mxu0 %v2233
    %2283 = vmatprep.subr.mxu0 0.0
    %2284 = vmatpush1.msra.mxu0 %v2234
    %2285 = vmatprep.subr.mxu0 0.0
    %2286 = vmatpush1.msra.mxu0 %v2235
    %2287 = vmatprep.subr.mxu0 0.0
    %2288 = vmatpush1.msra.mxu0 %v2236
    %2289 = vmatprep.subr.mxu0 0.0
    %2290 = vmatpush1.msra.mxu0 %v2237
    %2291 = vmatprep.subr.mxu0 0.0
    %2292 = vmatpush1.msra.mxu0 %v2238
    %2293 = vmatprep.subr.mxu0 0.0
    %2294 = vmatpush1.msra.mxu0 %v2239
    %2295 = vmatprep.subr.mxu0 0.0
    %2296 = vmatpush1.msra.mxu0 %v2240
    %2297 = vmatprep.subr.mxu0 0.0
    %2298 = vmatpush1.msra.mxu0 %v2241
    %2299 = vmatprep.subr.mxu0 0.0
    %2300 = vmatpush1.msra.mxu0 %v2242
    %2301 = vmatprep.subr.mxu0 0.0
    %2302 = vmatpush1.msra.mxu0 %v2243
    %2303 = vmatprep.subr.mxu0 0.0
    %2304 = vmatpush1.msra.mxu0 %v2244
    %2305 = vmatprep.subr.mxu0 0.0
    %2306 = vmatpush1.msra.mxu0 %v2245
    %2307 = vmatprep.subr.mxu0 0.0
    %2308 = vmatpush1.msra.mxu0 %v2246
    %2309 = vmatprep.subr.mxu0 0.0
    %2310 = vmatpush1.msra.mxu0 %v2247
    %2311 = vmatprep.subr.mxu0 0.0
    %2312 = vmatpush1.msra.mxu0 %v2248
    %2313 = vmatprep.subr.mxu0 0.0
    %2314 = vmatpush1.msra.mxu0 %v2249
    %2315 = vmatprep.subr.mxu0 0.0
    %2316 = vmatpush1.msra.mxu0 %v2250
    %2317 = vmatprep.subr.mxu0 0.0
    %2318 = vmatpush1.msra.mxu0 %v2251
    %2319 = vmatprep.subr.mxu0 0.0
    %2320 = vmatpush1.msra.mxu0 %v2252
    %2321 = vmatprep.subr.mxu0 0.0
    %2322 = vmatpush1.msra.mxu0 %v2253
    %2323 = vmatprep.subr.mxu0 0.0
    %2324 = vmatpush1.msra.mxu0 %v2254
    %2325 = vmatprep.subr.mxu0 0.0
    %2326 = vmatpush1.msra.mxu0 %v2255
    %2327 = vmatprep.subr.mxu0 0.0
    %2328 = vmatpush1.msra.mxu0 %v2256
    %2329 = vmatprep.subr.mxu0 0.0
    %2330 = vmatpush1.msra.mxu0 %v2257
    %2331 = vmatprep.subr.mxu0 0.0
    %2332 = vmatpush1.msra.mxu0 %v2258
    %2333 = vmatprep.subr.mxu0 0.0
    %2334 = vmatpush1.msra.mxu0 %v2259
    %2335 = vmatprep.subr.mxu0 0.0
    %2336 = vmatpush1.msra.mxu0 %v2260
    %2337 = vmatprep.subr.mxu0 0.0
    %2338 = vmatpush1.msra.mxu0 %v2261
    %2339 = vmatprep.subr.mxu0 0.0
    %2340 = vmatpush1.msra.mxu0 %v2262
    %2341 = vmatprep.subr.mxu0 0.0
    %2342 = vmatpush1.msra.mxu0 %v2263
    %2343 = vmatprep.subr.mxu0 0.0
    %2344 = vmatpush1.msra.mxu0 %v2264
    %2345 = vmatprep.mubr.f32.mxu0 %v2224
    %2346 = vmatmul.mubr.f32.gmra.mrb[0].mxu0 %v2190
    %v2347 = vpop.f32.mrb[0].mxu0
    %v2348 = vadd.f32 0.0, %v2347
    %v2349 = vpop.f32.mrb[0].mxu0
    %2350 = vmatprep.mubr.f32.mxu0 %v2225
    %2351 = vmatmul.mubr.f32.gmra.mrb[0].mxu0 %v2195
    %v2352 = vpop.f32.mrb[0].mxu0
    %v2353 = vadd.f32 0.0, %v2352
    %v2354 = vpop.f32.mrb[0].mxu0
    %2355 = vmatprep.mubr.f32.mxu0 %v2226
    %2356 = vmatmul.mubr.f32.gmra.mrb[0].mxu0 %v2200
    %v2357 = vpop.f32.mrb[0].mxu0
    %v2358 = vadd.f32 0.0, %v2357
    %v2359 = vpop.f32.mrb[0].mxu0
    %2360 = vmatprep.mubr.f32.mxu0 %v2227
    %2361 = vmatmul.mubr.f32.gmra.mrb[0].mxu0 %v2205
    %v2362 = vpop.f32.mrb[0].mxu0
    %v2363 = vadd.f32 0.0, %v2362
    %v2364 = vpop.f32.mrb[0].mxu0
    %2365 = vdwg.mxu0
    %2366 = vmatprep.subr.mxu0 0.0
    %2367 = vmatpush1.msra.mxu0 %v2265
    %2368 = vmatprep.subr.mxu0 0.0
    %2369 = vmatpush1.msra.mxu0 %v2266
    %2370 = vmatprep.subr.mxu0 0.0
    %2371 = vmatpush1.msra.mxu0 %v2267
    %2372 = vmatprep.subr.mxu0 0.0
    %2373 = vmatpush1.msra.mxu0 %v2268
    %2374 = vmatprep.subr.mxu0 0.0
    %2375 = vmatpush1.msra.mxu0 %v2269
    %2376 = vmatprep.subr.mxu0 0.0
    %2377 = vmatpush1.msra.mxu0 %v2270
    %2378 = vmatprep.subr.mxu0 0.0
    %2379 = vmatpush1.msra.mxu0 %v2271
    %2380 = vmatprep.subr.mxu0 0.0
    %2381 = vmatpush1.msra.mxu0 %v2272
    %2382 = vmatprep.subr.mxu0 0.0
    %2383 = vmatpush1.msra.mxu0 %v2273
    %2384 = vmatprep.subr.mxu0 0.0
    %2385 = vmatpush1.msra.mxu0 %v2274
    %2386 = vmatprep.subr.mxu0 0.0
    %2387 = vmatpush1.msra.mxu0 %v2275
    %2388 = vmatprep.subr.mxu0 0.0
    %2389 = vmatpush1.msra.mxu0 %v2276
    %2390 = vmatprep.subr.mxu0 0.0
    %2391 = vmatpush1.msra.mxu0 %v2277
    %2392 = vmatprep.subr.mxu0 0.0
    %2393 = vmatpush1.msra.mxu0 %v2278
    %2394 = vmatprep.subr.mxu0 0.0
    %2395 = vmatpush1.msra.mxu0 %v2279
    %2396 = vmatprep.subr.mxu0 0.0
    %2397 = vmatpush1.msra.mxu0 %v2280
    %2398 = vmatprep.subr.mxu0 0.0
    %2399 = vmatpush1.msra.mxu0 0.0
    %2400 = vmatprep.subr.mxu0 0.0
    %2401 = vmatpush1.msra.mxu0 0.0
    %2402 = vmatprep.subr.mxu0 0.0
    %2403 = vmatpush1.msra.mxu0 0.0
    %2404 = vmatprep.subr.mxu0 0.0
    %2405 = vmatpush1.msra.mxu0 0.0
    %2406 = vmatprep.subr.mxu0 0.0
    %2407 = vmatpush1.msra.mxu0 0.0
    %2408 = vmatprep.subr.mxu0 0.0
    %2409 = vmatpush1.msra.mxu0 0.0
    %2410 = vmatprep.subr.mxu0 0.0
    %2411 = vmatpush1.msra.mxu0 0.0
    %2412 = vmatprep.subr.mxu0 0.0
    %2413 = vmatpush1.msra.mxu0 0.0
    %2414 = vmatprep.subr.mxu0 0.0
    %2415 = vmatpush1.msra.mxu0 0.0
    %2416 = vmatprep.subr.mxu0 0.0
    %2417 = vmatpush1.msra.mxu0 0.0
    %2418 = vmatprep.subr.mxu0 0.0
    %2419 = vmatpush1.msra.mxu0 0.0
    %2420 = vmatprep.subr.mxu0 0.0
    %2421 = vmatpush1.msra.mxu0 0.0
    %2422 = vmatprep.subr.mxu0 0.0
    %2423 = vmatpush1.msra.mxu0 0.0
    %2424 = vmatprep.subr.mxu0 0.0
    %2425 = vmatpush1.msra.mxu0 0.0
    %2426 = vmatprep.subr.mxu0 0.0
    %2427 = vmatpush1.msra.mxu0 0.0
    %2428 = vmatprep.subr.mxu0 0.0
    %2429 = vmatpush1.msra.mxu0 0.0
    %2430 = vmatprep.mubr.f32.mxu0 0.0
    %2431 = vmatmul.mubr.f32.gmra.mrb[0].mxu0 %v2228
    %v2432 = vpop.f32.mrb[0].mxu0
    %v2433 = vadd.f32 %v2348, %v2432
    %v2434 = vpop.f32.mrb[0].mxu0
    %2435 = vmatprep.mubr.f32.mxu0 0.0
    %2436 = vmatmul.mubr.f32.gmra.mrb[0].mxu0 %v2229
    %v2437 = vpop.f32.mrb[0].mxu0
    %v2438 = vadd.f32 %v2353, %v2437
    %v2439 = vpop.f32.mrb[0].mxu0
    %2440 = vmatprep.mubr.f32.mxu0 0.0
    %2441 = vmatmul.mubr.f32.gmra.mrb[0].mxu0 %v2230
    %v2442 = vpop.f32.mrb[0].mxu0
    %v2443 = vadd.f32 %v2358, %v2442
    %v2444 = vpop.f32.mrb[0].mxu0
    %2445 = vmatprep.mubr.f32.mxu0 0.0
    %2446 = vmatmul.mubr.f32.gmra.mrb[0].mxu0 %v2231
    %v2447 = vpop.f32.mrb[0].mxu0
    %v2448 = vadd.f32 %v2363, %v2447
    %v2449 = vpop.f32.mrb[0].mxu0
    %2450 = vdwg.mxu0
    %v2451 = vlaneseq
    %v2452 = vshrl.u32 %v2451, 7
    %v2453 = vsub.s32 7, %v2452
    %v2454 = vrot.slane %v446, %v2453
    %v2455 = vlaneseq
    %v2456 = vshrl.u32 %v2455, 7
    %v2457 = vsub.s32 7, %v2456
    %v2458 = vrot.slane %v448, %v2457
    %v2459 = vlaneseq
    %v2460 = vshrl.u32 %v2459, 7
    %v2461 = vsub.s32 7, %v2460
    %v2462 = vrot.slane %v737, %v2461
    %v2463 = vlaneseq
    %v2464 = vshrl.u32 %v2463, 7
    %v2465 = vsub.s32 7, %v2464
    %v2466 = vrot.slane %v739, %v2465
    %v2467 = vmul.f32 %v2433, %v2454
    %v2468 = vmul.f32 %v2438, %v2454
    %v2469 = vmul.f32 %v2443, %v2458
    %v2470 = vmul.f32 %v2448, %v2458
    %v2471 = vmul.f32 %v2433, %v2462
    %v2472 = vmul.f32 %v2438, %v2462
    %v2473 = vmul.f32 %v2443, %v2466
    %v2474 = vmul.f32 %v2448, %v2466
    %s2475 = scalar_lea.vmem %s6, 2688
    %v2476 = vld [vmem:[%s2475] sm:$0xff]
    %v2477 = vld [vmem:[%s2475 + $0x8] sm:$0xff]
    %v2478 = vld [vmem:[%s2475 + $0x10] sm:$0xff]
    %v2479 = vld [vmem:[%s2475 + $0x18] sm:$0xff]
    %v2480 = vld [vmem:[%s2475 + $0x20] sm:$0xff]
    %v2481 = vld [vmem:[%s2475 + $0x28] sm:$0xff]
    %v2482 = vld [vmem:[%s2475 + $0x30] sm:$0xff]
    %v2483 = vld [vmem:[%s2475 + $0x38] sm:$0xff]
    %v2484 = vld [vmem:[%s2475 + $0x40] sm:$0xff]
    %v2485 = vld [vmem:[%s2475 + $0x48] sm:$0xff]
    %v2486 = vld [vmem:[%s2475 + $0x50] sm:$0xff]
    %v2487 = vld [vmem:[%s2475 + $0x58] sm:$0xff]
    %v2488 = vld [vmem:[%s2475 + $0x60] sm:$0xff]
    %v2489 = vld [vmem:[%s2475 + $0x68] sm:$0xff]
    %v2490 = vld [vmem:[%s2475 + $0x70] sm:$0xff]
    %v2491 = vld [vmem:[%s2475 + $0x78] sm:$0xff]
    %v2492 = vld [vmem:[%s2475 + $0x80] sm:$0xff]
    %v2493 = vld [vmem:[%s2475 + $0x88] sm:$0xff]
    %v2494 = vld [vmem:[%s2475 + $0x90] sm:$0xff]
    %v2495 = vld [vmem:[%s2475 + $0x98] sm:$0xff]
    %v2496 = vld [vmem:[%s2475 + $0xa0] sm:$0xff]
    %v2497 = vld [vmem:[%s2475 + $0xa8] sm:$0xff]
    %v2498 = vld [vmem:[%s2475 + $0xb0] sm:$0xff]
    %v2499 = vld [vmem:[%s2475 + $0xb8] sm:$0xff]
    %v2500 = vld [vmem:[%s2475 + $0xc0] sm:$0xff]
    %v2501 = vld [vmem:[%s2475 + $0xc8] sm:$0xff]
    %v2502 = vld [vmem:[%s2475 + $0xd0] sm:$0xff]
    %v2503 = vld [vmem:[%s2475 + $0xd8] sm:$0xff]
    %v2504 = vld [vmem:[%s2475 + $0xe0] sm:$0xff]
    %v2505 = vld [vmem:[%s2475 + $0xe8] sm:$0xff]
    %v2506 = vld [vmem:[%s2475 + $0xf0] sm:$0xff]
    %v2507 = vld [vmem:[%s2475 + $0xf8] sm:$0xff]
    %v2508 = vld [vmem:[%s2475 + $0x100] sm:$0xff]
    %v2509 = vld [vmem:[%s2475 + $0x108] sm:$0xff]
    %v2510 = vld [vmem:[%s2475 + $0x110] sm:$0xff]
    %v2511 = vld [vmem:[%s2475 + $0x118] sm:$0xff]
    %v2512 = vld [vmem:[%s2475 + $0x120] sm:$0xff]
    %v2513 = vld [vmem:[%s2475 + $0x128] sm:$0xff]
    %v2514 = vld [vmem:[%s2475 + $0x130] sm:$0xff]
    %v2515 = vld [vmem:[%s2475 + $0x138] sm:$0xff]
    %v2516 = vld [vmem:[%s2475 + $0x140] sm:$0xff]
    %v2517 = vld [vmem:[%s2475 + $0x148] sm:$0xff]
    %v2518 = vld [vmem:[%s2475 + $0x150] sm:$0xff]
    %v2519 = vld [vmem:[%s2475 + $0x158] sm:$0xff]
    %v2520 = vld [vmem:[%s2475 + $0x160] sm:$0xff]
    %v2521 = vld [vmem:[%s2475 + $0x168] sm:$0xff]
    %v2522 = vld [vmem:[%s2475 + $0x170] sm:$0xff]
    %v2523 = vld [vmem:[%s2475 + $0x178] sm:$0xff]
    %2524 = vmatprep.subr.mxu0 0.0
    %2525 = vmatpush1.msra.mxu0 %v2476
    %2526 = vmatprep.subr.mxu0 0.0
    %2527 = vmatpush1.msra.mxu0 %v2477
    %2528 = vmatprep.subr.mxu0 0.0
    %2529 = vmatpush1.msra.mxu0 %v2478
    %2530 = vmatprep.subr.mxu0 0.0
    %2531 = vmatpush1.msra.mxu0 %v2479
    %2532 = vmatprep.subr.mxu0 0.0
    %2533 = vmatpush1.msra.mxu0 %v2480
    %2534 = vmatprep.subr.mxu0 0.0
    %2535 = vmatpush1.msra.mxu0 %v2481
    %2536 = vmatprep.subr.mxu0 0.0
    %2537 = vmatpush1.msra.mxu0 %v2482
    %2538 = vmatprep.subr.mxu0 0.0
    %2539 = vmatpush1.msra.mxu0 %v2483
    %2540 = vmatprep.subr.mxu0 0.0
    %2541 = vmatpush1.msra.mxu0 %v2484
    %2542 = vmatprep.subr.mxu0 0.0
    %2543 = vmatpush1.msra.mxu0 %v2485
    %2544 = vmatprep.subr.mxu0 0.0
    %2545 = vmatpush1.msra.mxu0 %v2486
    %2546 = vmatprep.subr.mxu0 0.0
    %2547 = vmatpush1.msra.mxu0 %v2487
    %2548 = vmatprep.subr.mxu0 0.0
    %2549 = vmatpush1.msra.mxu0 %v2488
    %2550 = vmatprep.subr.mxu0 0.0
    %2551 = vmatpush1.msra.mxu0 %v2489
    %2552 = vmatprep.subr.mxu0 0.0
    %2553 = vmatpush1.msra.mxu0 %v2490
    %2554 = vmatprep.subr.mxu0 0.0
    %2555 = vmatpush1.msra.mxu0 %v2491
    %2556 = vmatprep.subr.mxu0 0.0
    %2557 = vmatpush1.msra.mxu0 %v2492
    %2558 = vmatprep.subr.mxu0 0.0
    %2559 = vmatpush1.msra.mxu0 %v2493
    %2560 = vmatprep.subr.mxu0 0.0
    %2561 = vmatpush1.msra.mxu0 %v2494
    %2562 = vmatprep.subr.mxu0 0.0
    %2563 = vmatpush1.msra.mxu0 %v2495
    %2564 = vmatprep.subr.mxu0 0.0
    %2565 = vmatpush1.msra.mxu0 %v2496
    %2566 = vmatprep.subr.mxu0 0.0
    %2567 = vmatpush1.msra.mxu0 %v2497
    %2568 = vmatprep.subr.mxu0 0.0
    %2569 = vmatpush1.msra.mxu0 %v2498
    %2570 = vmatprep.subr.mxu0 0.0
    %2571 = vmatpush1.msra.mxu0 %v2499
    %2572 = vmatprep.subr.mxu0 0.0
    %2573 = vmatpush1.msra.mxu0 %v2500
    %2574 = vmatprep.subr.mxu0 0.0
    %2575 = vmatpush1.msra.mxu0 %v2501
    %2576 = vmatprep.subr.mxu0 0.0
    %2577 = vmatpush1.msra.mxu0 %v2502
    %2578 = vmatprep.subr.mxu0 0.0
    %2579 = vmatpush1.msra.mxu0 %v2503
    %2580 = vmatprep.subr.mxu0 0.0
    %2581 = vmatpush1.msra.mxu0 %v2504
    %2582 = vmatprep.subr.mxu0 0.0
    %2583 = vmatpush1.msra.mxu0 %v2505
    %2584 = vmatprep.subr.mxu0 0.0
    %2585 = vmatpush1.msra.mxu0 %v2506
    %2586 = vmatprep.subr.mxu0 0.0
    %2587 = vmatpush1.msra.mxu0 %v2507
    %2588 = vmatprep.mubr.f32.mxu0 %v2467
    %2589 = vmatmul.mubr.f32.gmra.mrb[0].mxu0 %v2433
    %v2590 = vpop.f32.mrb[0].mxu0
    %v2591 = vadd.f32 0.0, %v2590
    %v2592 = vpop.f32.mrb[0].mxu0
    %2593 = vmatprep.mubr.f32.mxu0 %v2468
    %2594 = vmatmul.mubr.f32.gmra.mrb[0].mxu0 %v2438
    %v2595 = vpop.f32.mrb[0].mxu0
    %v2596 = vadd.f32 0.0, %v2595
    %v2597 = vpop.f32.mrb[0].mxu0
    %2598 = vmatprep.mubr.f32.mxu0 %v2469
    %2599 = vmatmul.mubr.f32.gmra.mrb[0].mxu0 %v2443
    %v2600 = vpop.f32.mrb[0].mxu0
    %v2601 = vadd.f32 0.0, %v2600
    %v2602 = vpop.f32.mrb[0].mxu0
    %2603 = vmatprep.mubr.f32.mxu0 %v2470
    %2604 = vmatmul.mubr.f32.gmra.mrb[0].mxu0 %v2448
    %v2605 = vpop.f32.mrb[0].mxu0
    %v2606 = vadd.f32 0.0, %v2605
    %v2607 = vpop.f32.mrb[0].mxu0
    %2608 = vdwg.mxu0
    %2609 = vmatprep.subr.mxu0 0.0
    %2610 = vmatpush1.msra.mxu0 %v2508
    %2611 = vmatprep.subr.mxu0 0.0
    %2612 = vmatpush1.msra.mxu0 %v2509
    %2613 = vmatprep.subr.mxu0 0.0
    %2614 = vmatpush1.msra.mxu0 %v2510
    %2615 = vmatprep.subr.mxu0 0.0
    %2616 = vmatpush1.msra.mxu0 %v2511
    %2617 = vmatprep.subr.mxu0 0.0
    %2618 = vmatpush1.msra.mxu0 %v2512
    %2619 = vmatprep.subr.mxu0 0.0
    %2620 = vmatpush1.msra.mxu0 %v2513
    %2621 = vmatprep.subr.mxu0 0.0
    %2622 = vmatpush1.msra.mxu0 %v2514
    %2623 = vmatprep.subr.mxu0 0.0
    %2624 = vmatpush1.msra.mxu0 %v2515
    %2625 = vmatprep.subr.mxu0 0.0
    %2626 = vmatpush1.msra.mxu0 %v2516
    %2627 = vmatprep.subr.mxu0 0.0
    %2628 = vmatpush1.msra.mxu0 %v2517
    %2629 = vmatprep.subr.mxu0 0.0
    %2630 = vmatpush1.msra.mxu0 %v2518
    %2631 = vmatprep.subr.mxu0 0.0
    %2632 = vmatpush1.msra.mxu0 %v2519
    %2633 = vmatprep.subr.mxu0 0.0
    %2634 = vmatpush1.msra.mxu0 %v2520
    %2635 = vmatprep.subr.mxu0 0.0
    %2636 = vmatpush1.msra.mxu0 %v2521
    %2637 = vmatprep.subr.mxu0 0.0
    %2638 = vmatpush1.msra.mxu0 %v2522
    %2639 = vmatprep.subr.mxu0 0.0
    %2640 = vmatpush1.msra.mxu0 %v2523
    %2641 = vmatprep.subr.mxu0 0.0
    %2642 = vmatpush1.msra.mxu0 0.0
    %2643 = vmatprep.subr.mxu0 0.0
    %2644 = vmatpush1.msra.mxu0 0.0
    %2645 = vmatprep.subr.mxu0 0.0
    %2646 = vmatpush1.msra.mxu0 0.0
    %2647 = vmatprep.subr.mxu0 0.0
    %2648 = vmatpush1.msra.mxu0 0.0
    %2649 = vmatprep.subr.mxu0 0.0
    %2650 = vmatpush1.msra.mxu0 0.0
    %2651 = vmatprep.subr.mxu0 0.0
    %2652 = vmatpush1.msra.mxu0 0.0
    %2653 = vmatprep.subr.mxu0 0.0
    %2654 = vmatpush1.msra.mxu0 0.0
    %2655 = vmatprep.subr.mxu0 0.0
    %2656 = vmatpush1.msra.mxu0 0.0
    %2657 = vmatprep.subr.mxu0 0.0
    %2658 = vmatpush1.msra.mxu0 0.0
    %2659 = vmatprep.subr.mxu0 0.0
    %2660 = vmatpush1.msra.mxu0 0.0
    %2661 = vmatprep.subr.mxu0 0.0
    %2662 = vmatpush1.msra.mxu0 0.0
    %2663 = vmatprep.subr.mxu0 0.0
    %2664 = vmatpush1.msra.mxu0 0.0
    %2665 = vmatprep.subr.mxu0 0.0
    %2666 = vmatpush1.msra.mxu0 0.0
    %2667 = vmatprep.subr.mxu0 0.0
    %2668 = vmatpush1.msra.mxu0 0.0
    %2669 = vmatprep.subr.mxu0 0.0
    %2670 = vmatpush1.msra.mxu0 0.0
    %2671 = vmatprep.subr.mxu0 0.0
    %2672 = vmatpush1.msra.mxu0 0.0
    %2673 = vmatprep.mubr.f32.mxu0 0.0
    %2674 = vmatmul.mubr.f32.gmra.mrb[0].mxu0 %v2471
    %v2675 = vpop.f32.mrb[0].mxu0
    %v2676 = vadd.f32 %v2591, %v2675
    %v2677 = vpop.f32.mrb[0].mxu0
    %2678 = vmatprep.mubr.f32.mxu0 0.0
    %2679 = vmatmul.mubr.f32.gmra.mrb[0].mxu0 %v2472
    %v2680 = vpop.f32.mrb[0].mxu0
    %v2681 = vadd.f32 %v2596, %v2680
    %v2682 = vpop.f32.mrb[0].mxu0
    %2683 = vmatprep.mubr.f32.mxu0 0.0
    %2684 = vmatmul.mubr.f32.gmra.mrb[0].mxu0 %v2473
    %v2685 = vpop.f32.mrb[0].mxu0
    %v2686 = vadd.f32 %v2601, %v2685
    %v2687 = vpop.f32.mrb[0].mxu0
    %2688 = vmatprep.mubr.f32.mxu0 0.0
    %2689 = vmatmul.mubr.f32.gmra.mrb[0].mxu0 %v2474
    %v2690 = vpop.f32.mrb[0].mxu0
    %v2691 = vadd.f32 %v2606, %v2690
    %v2692 = vpop.f32.mrb[0].mxu0
    %2693 = vdwg.mxu0
    %v2694 = vlaneseq
    %v2695 = vshrl.u32 %v2694, 7
    %v2696 = vsub.s32 0, %v2695
    %v2697 = vrot.slane %v452, %v2696
    %v2698 = vlaneseq
    %v2699 = vshrl.u32 %v2698, 7
    %v2700 = vsub.s32 0, %v2699
    %v2701 = vrot.slane %v454, %v2700
    %v2702 = vlaneseq
    %v2703 = vshrl.u32 %v2702, 7
    %v2704 = vsub.s32 0, %v2703
    %v2705 = vrot.slane %v743, %v2704
    %v2706 = vlaneseq
    %v2707 = vshrl.u32 %v2706, 7
    %v2708 = vsub.s32 0, %v2707
    %v2709 = vrot.slane %v745, %v2708
    %v2710 = vmul.f32 %v2676, %v2697
    %v2711 = vmul.f32 %v2681, %v2697
    %v2712 = vmul.f32 %v2686, %v2701
    %v2713 = vmul.f32 %v2691, %v2701
    %v2714 = vmul.f32 %v2676, %v2705
    %v2715 = vmul.f32 %v2681, %v2705
    %v2716 = vmul.f32 %v2686, %v2709
    %v2717 = vmul.f32 %v2691, %v2709
    %s2718 = scalar_lea.vmem %s6, 3072
    %v2719 = vld [vmem:[%s2718] sm:$0xff]
    %v2720 = vld [vmem:[%s2718 + $0x8] sm:$0xff]
    %v2721 = vld [vmem:[%s2718 + $0x10] sm:$0xff]
    %v2722 = vld [vmem:[%s2718 + $0x18] sm:$0xff]
    %v2723 = vld [vmem:[%s2718 + $0x20] sm:$0xff]
    %v2724 = vld [vmem:[%s2718 + $0x28] sm:$0xff]
    %v2725 = vld [vmem:[%s2718 + $0x30] sm:$0xff]
    %v2726 = vld [vmem:[%s2718 + $0x38] sm:$0xff]
    %v2727 = vld [vmem:[%s2718 + $0x40] sm:$0xff]
    %v2728 = vld [vmem:[%s2718 + $0x48] sm:$0xff]
    %v2729 = vld [vmem:[%s2718 + $0x50] sm:$0xff]
    %v2730 = vld [vmem:[%s2718 + $0x58] sm:$0xff]
    %v2731 = vld [vmem:[%s2718 + $0x60] sm:$0xff]
    %v2732 = vld [vmem:[%s2718 + $0x68] sm:$0xff]
    %v2733 = vld [vmem:[%s2718 + $0x70] sm:$0xff]
    %v2734 = vld [vmem:[%s2718 + $0x78] sm:$0xff]
    %v2735 = vld [vmem:[%s2718 + $0x80] sm:$0xff]
    %v2736 = vld [vmem:[%s2718 + $0x88] sm:$0xff]
    %v2737 = vld [vmem:[%s2718 + $0x90] sm:$0xff]
    %v2738 = vld [vmem:[%s2718 + $0x98] sm:$0xff]
    %v2739 = vld [vmem:[%s2718 + $0xa0] sm:$0xff]
    %v2740 = vld [vmem:[%s2718 + $0xa8] sm:$0xff]
    %v2741 = vld [vmem:[%s2718 + $0xb0] sm:$0xff]
    %v2742 = vld [vmem:[%s2718 + $0xb8] sm:$0xff]
    %v2743 = vld [vmem:[%s2718 + $0xc0] sm:$0xff]
    %v2744 = vld [vmem:[%s2718 + $0xc8] sm:$0xff]
    %v2745 = vld [vmem:[%s2718 + $0xd0] sm:$0xff]
    %v2746 = vld [vmem:[%s2718 + $0xd8] sm:$0xff]
    %v2747 = vld [vmem:[%s2718 + $0xe0] sm:$0xff]
    %v2748 = vld [vmem:[%s2718 + $0xe8] sm:$0xff]
    %v2749 = vld [vmem:[%s2718 + $0xf0] sm:$0xff]
    %v2750 = vld [vmem:[%s2718 + $0xf8] sm:$0xff]
    %v2751 = vld [vmem:[%s2718 + $0x100] sm:$0xff]
    %v2752 = vld [vmem:[%s2718 + $0x108] sm:$0xff]
    %v2753 = vld [vmem:[%s2718 + $0x110] sm:$0xff]
    %v2754 = vld [vmem:[%s2718 + $0x118] sm:$0xff]
    %v2755 = vld [vmem:[%s2718 + $0x120] sm:$0xff]
    %v2756 = vld [vmem:[%s2718 + $0x128] sm:$0xff]
    %v2757 = vld [vmem:[%s2718 + $0x130] sm:$0xff]
    %v2758 = vld [vmem:[%s2718 + $0x138] sm:$0xff]
    %v2759 = vld [vmem:[%s2718 + $0x140] sm:$0xff]
    %v2760 = vld [vmem:[%s2718 + $0x148] sm:$0xff]
    %v2761 = vld [vmem:[%s2718 + $0x150] sm:$0xff]
    %v2762 = vld [vmem:[%s2718 + $0x158] sm:$0xff]
    %v2763 = vld [vmem:[%s2718 + $0x160] sm:$0xff]
    %v2764 = vld [vmem:[%s2718 + $0x168] sm:$0xff]
    %v2765 = vld [vmem:[%s2718 + $0x170] sm:$0xff]
    %v2766 = vld [vmem:[%s2718 + $0x178] sm:$0xff]
    %2767 = vmatprep.subr.mxu0 0.0
    %2768 = vmatpush1.msra.mxu0 %v2719
    %2769 = vmatprep.subr.mxu0 0.0
    %2770 = vmatpush1.msra.mxu0 %v2720
    %2771 = vmatprep.subr.mxu0 0.0
    %2772 = vmatpush1.msra.mxu0 %v2721
    %2773 = vmatprep.subr.mxu0 0.0
    %2774 = vmatpush1.msra.mxu0 %v2722
    %2775 = vmatprep.subr.mxu0 0.0
    %2776 = vmatpush1.msra.mxu0 %v2723
    %2777 = vmatprep.subr.mxu0 0.0
    %2778 = vmatpush1.msra.mxu0 %v2724
    %2779 = vmatprep.subr.mxu0 0.0
    %2780 = vmatpush1.msra.mxu0 %v2725
    %2781 = vmatprep.subr.mxu0 0.0
    %2782 = vmatpush1.msra.mxu0 %v2726
    %2783 = vmatprep.subr.mxu0 0.0
    %2784 = vmatpush1.msra.mxu0 %v2727
    %2785 = vmatprep.subr.mxu0 0.0
    %2786 = vmatpush1.msra.mxu0 %v2728
    %2787 = vmatprep.subr.mxu0 0.0
    %2788 = vmatpush1.msra.mxu0 %v2729
    %2789 = vmatprep.subr.mxu0 0.0
    %2790 = vmatpush1.msra.mxu0 %v2730
    %2791 = vmatprep.subr.mxu0 0.0
    %2792 = vmatpush1.msra.mxu0 %v2731
    %2793 = vmatprep.subr.mxu0 0.0
    %2794 = vmatpush1.msra.mxu0 %v2732
    %2795 = vmatprep.subr.mxu0 0.0
    %2796 = vmatpush1.msra.mxu0 %v2733
    %2797 = vmatprep.subr.mxu0 0.0
    %2798 = vmatpush1.msra.mxu0 %v2734
    %2799 = vmatprep.subr.mxu0 0.0
    %2800 = vmatpush1.msra.mxu0 %v2735
    %2801 = vmatprep.subr.mxu0 0.0
    %2802 = vmatpush1.msra.mxu0 %v2736
    %2803 = vmatprep.subr.mxu0 0.0
    %2804 = vmatpush1.msra.mxu0 %v2737
    %2805 = vmatprep.subr.mxu0 0.0
    %2806 = vmatpush1.msra.mxu0 %v2738
    %2807 = vmatprep.subr.mxu0 0.0
    %2808 = vmatpush1.msra.mxu0 %v2739
    %2809 = vmatprep.subr.mxu0 0.0
    %2810 = vmatpush1.msra.mxu0 %v2740
    %2811 = vmatprep.subr.mxu0 0.0
    %2812 = vmatpush1.msra.mxu0 %v2741
    %2813 = vmatprep.subr.mxu0 0.0
    %2814 = vmatpush1.msra.mxu0 %v2742
    %2815 = vmatprep.subr.mxu0 0.0
    %2816 = vmatpush1.msra.mxu0 %v2743
    %2817 = vmatprep.subr.mxu0 0.0
    %2818 = vmatpush1.msra.mxu0 %v2744
    %2819 = vmatprep.subr.mxu0 0.0
    %2820 = vmatpush1.msra.mxu0 %v2745
    %2821 = vmatprep.subr.mxu0 0.0
    %2822 = vmatpush1.msra.mxu0 %v2746
    %2823 = vmatprep.subr.mxu0 0.0
    %2824 = vmatpush1.msra.mxu0 %v2747
    %2825 = vmatprep.subr.mxu0 0.0
    %2826 = vmatpush1.msra.mxu0 %v2748
    %2827 = vmatprep.subr.mxu0 0.0
    %2828 = vmatpush1.msra.mxu0 %v2749
    %2829 = vmatprep.subr.mxu0 0.0
    %2830 = vmatpush1.msra.mxu0 %v2750
    %2831 = vmatprep.mubr.f32.mxu0 %v2710
    %2832 = vmatmul.mubr.f32.gmra.mrb[0].mxu0 %v2676
    %v2833 = vpop.f32.mrb[0].mxu0
    %v2834 = vadd.f32 0.0, %v2833
    %v2835 = vpop.f32.mrb[0].mxu0
    %2836 = vmatprep.mubr.f32.mxu0 %v2711
    %2837 = vmatmul.mubr.f32.gmra.mrb[0].mxu0 %v2681
    %v2838 = vpop.f32.mrb[0].mxu0
    %v2839 = vadd.f32 0.0, %v2838
    %v2840 = vpop.f32.mrb[0].mxu0
    %2841 = vmatprep.mubr.f32.mxu0 %v2712
    %2842 = vmatmul.mubr.f32.gmra.mrb[0].mxu0 %v2686
    %v2843 = vpop.f32.mrb[0].mxu0
    %v2844 = vadd.f32 0.0, %v2843
    %v2845 = vpop.f32.mrb[0].mxu0
    %2846 = vmatprep.mubr.f32.mxu0 %v2713
    %2847 = vmatmul.mubr.f32.gmra.mrb[0].mxu0 %v2691
    %v2848 = vpop.f32.mrb[0].mxu0
    %v2849 = vadd.f32 0.0, %v2848
    %v2850 = vpop.f32.mrb[0].mxu0
    %2851 = vdwg.mxu0
    %2852 = vmatprep.subr.mxu0 0.0
    %2853 = vmatpush1.msra.mxu0 %v2751
    %2854 = vmatprep.subr.mxu0 0.0
    %2855 = vmatpush1.msra.mxu0 %v2752
    %2856 = vmatprep.subr.mxu0 0.0
    %2857 = vmatpush1.msra.mxu0 %v2753
    %2858 = vmatprep.subr.mxu0 0.0
    %2859 = vmatpush1.msra.mxu0 %v2754
    %2860 = vmatprep.subr.mxu0 0.0
    %2861 = vmatpush1.msra.mxu0 %v2755
    %2862 = vmatprep.subr.mxu0 0.0
    %2863 = vmatpush1.msra.mxu0 %v2756
    %2864 = vmatprep.subr.mxu0 0.0
    %2865 = vmatpush1.msra.mxu0 %v2757
    %2866 = vmatprep.subr.mxu0 0.0
    %2867 = vmatpush1.msra.mxu0 %v2758
    %2868 = vmatprep.subr.mxu0 0.0
    %2869 = vmatpush1.msra.mxu0 %v2759
    %2870 = vmatprep.subr.mxu0 0.0
    %2871 = vmatpush1.msra.mxu0 %v2760
    %2872 = vmatprep.subr.mxu0 0.0
    %2873 = vmatpush1.msra.mxu0 %v2761
    %2874 = vmatprep.subr.mxu0 0.0
    %2875 = vmatpush1.msra.mxu0 %v2762
    %2876 = vmatprep.subr.mxu0 0.0
    %2877 = vmatpush1.msra.mxu0 %v2763
    %2878 = vmatprep.subr.mxu0 0.0
    %2879 = vmatpush1.msra.mxu0 %v2764
    %2880 = vmatprep.subr.mxu0 0.0
    %2881 = vmatpush1.msra.mxu0 %v2765
    %2882 = vmatprep.subr.mxu0 0.0
    %2883 = vmatpush1.msra.mxu0 %v2766
    %2884 = vmatprep.subr.mxu0 0.0
    %2885 = vmatpush1.msra.mxu0 0.0
    %2886 = vmatprep.subr.mxu0 0.0
    %2887 = vmatpush1.msra.mxu0 0.0
    %2888 = vmatprep.subr.mxu0 0.0
    %2889 = vmatpush1.msra.mxu0 0.0
    %2890 = vmatprep.subr.mxu0 0.0
    %2891 = vmatpush1.msra.mxu0 0.0
    %2892 = vmatprep.subr.mxu0 0.0
    %2893 = vmatpush1.msra.mxu0 0.0
    %2894 = vmatprep.subr.mxu0 0.0
    %2895 = vmatpush1.msra.mxu0 0.0
    %2896 = vmatprep.subr.mxu0 0.0
    %2897 = vmatpush1.msra.mxu0 0.0
    %2898 = vmatprep.subr.mxu0 0.0
    %2899 = vmatpush1.msra.mxu0 0.0
    %2900 = vmatprep.subr.mxu0 0.0
    %2901 = vmatpush1.msra.mxu0 0.0
    %2902 = vmatprep.subr.mxu0 0.0
    %2903 = vmatpush1.msra.mxu0 0.0
    %2904 = vmatprep.subr.mxu0 0.0
    %2905 = vmatpush1.msra.mxu0 0.0
    %2906 = vmatprep.subr.mxu0 0.0
    %2907 = vmatpush1.msra.mxu0 0.0
    %2908 = vmatprep.subr.mxu0 0.0
    %2909 = vmatpush1.msra.mxu0 0.0
    %2910 = vmatprep.subr.mxu0 0.0
    %2911 = vmatpush1.msra.mxu0 0.0
    %2912 = vmatprep.subr.mxu0 0.0
    %2913 = vmatpush1.msra.mxu0 0.0
    %2914 = vmatprep.subr.mxu0 0.0
    %2915 = vmatpush1.msra.mxu0 0.0
    %2916 = vmatprep.mubr.f32.mxu0 0.0
    %2917 = vmatmul.mubr.f32.gmra.mrb[0].mxu0 %v2714
    %v2918 = vpop.f32.mrb[0].mxu0
    %v2919 = vadd.f32 %v2834, %v2918
    %v2920 = vpop.f32.mrb[0].mxu0
    %2921 = vmatprep.mubr.f32.mxu0 0.0
    %2922 = vmatmul.mubr.f32.gmra.mrb[0].mxu0 %v2715
    %v2923 = vpop.f32.mrb[0].mxu0
    %v2924 = vadd.f32 %v2839, %v2923
    %v2925 = vpop.f32.mrb[0].mxu0
    %2926 = vmatprep.mubr.f32.mxu0 0.0
    %2927 = vmatmul.mubr.f32.gmra.mrb[0].mxu0 %v2716
    %v2928 = vpop.f32.mrb[0].mxu0
    %v2929 = vadd.f32 %v2844, %v2928
    %v2930 = vpop.f32.mrb[0].mxu0
    %2931 = vmatprep.mubr.f32.mxu0 0.0
    %2932 = vmatmul.mubr.f32.gmra.mrb[0].mxu0 %v2717
    %v2933 = vpop.f32.mrb[0].mxu0
    %v2934 = vadd.f32 %v2849, %v2933
    %v2935 = vpop.f32.mrb[0].mxu0
    %2936 = vdwg.mxu0
    %v2937 = vlaneseq
    %v2938 = vshrl.u32 %v2937, 7
    %v2939 = vsub.s32 1, %v2938
    %v2940 = vrot.slane %v452, %v2939
    %v2941 = vlaneseq
    %v2942 = vshrl.u32 %v2941, 7
    %v2943 = vsub.s32 1, %v2942
    %v2944 = vrot.slane %v454, %v2943
    %v2945 = vlaneseq
    %v2946 = vshrl.u32 %v2945, 7
    %v2947 = vsub.s32 1, %v2946
    %v2948 = vrot.slane %v743, %v2947
    %v2949 = vlaneseq
    %v2950 = vshrl.u32 %v2949, 7
    %v2951 = vsub.s32 1, %v2950
    %v2952 = vrot.slane %v745, %v2951
    %v2953 = vmul.f32 %v2919, %v2940
    %v2954 = vmul.f32 %v2924, %v2940
    %v2955 = vmul.f32 %v2929, %v2944
    %v2956 = vmul.f32 %v2934, %v2944
    %v2957 = vmul.f32 %v2919, %v2948
    %v2958 = vmul.f32 %v2924, %v2948
    %v2959 = vmul.f32 %v2929, %v2952
    %v2960 = vmul.f32 %v2934, %v2952
    %s2961 = scalar_lea.vmem %s6, 3456
    %v2962 = vld [vmem:[%s2961] sm:$0xff]
    %v2963 = vld [vmem:[%s2961 + $0x8] sm:$0xff]
    %v2964 = vld [vmem:[%s2961 + $0x10] sm:$0xff]
    %v2965 = vld [vmem:[%s2961 + $0x18] sm:$0xff]
    %v2966 = vld [vmem:[%s2961 + $0x20] sm:$0xff]
    %v2967 = vld [vmem:[%s2961 + $0x28] sm:$0xff]
    %v2968 = vld [vmem:[%s2961 + $0x30] sm:$0xff]
    %v2969 = vld [vmem:[%s2961 + $0x38] sm:$0xff]
    %v2970 = vld [vmem:[%s2961 + $0x40] sm:$0xff]
    %v2971 = vld [vmem:[%s2961 + $0x48] sm:$0xff]
    %v2972 = vld [vmem:[%s2961 + $0x50] sm:$0xff]
    %v2973 = vld [vmem:[%s2961 + $0x58] sm:$0xff]
    %v2974 = vld [vmem:[%s2961 + $0x60] sm:$0xff]
    %v2975 = vld [vmem:[%s2961 + $0x68] sm:$0xff]
    %v2976 = vld [vmem:[%s2961 + $0x70] sm:$0xff]
    %v2977 = vld [vmem:[%s2961 + $0x78] sm:$0xff]
    %v2978 = vld [vmem:[%s2961 + $0x80] sm:$0xff]
    %v2979 = vld [vmem:[%s2961 + $0x88] sm:$0xff]
    %v2980 = vld [vmem:[%s2961 + $0x90] sm:$0xff]
    %v2981 = vld [vmem:[%s2961 + $0x98] sm:$0xff]
    %v2982 = vld [vmem:[%s2961 + $0xa0] sm:$0xff]
    %v2983 = vld [vmem:[%s2961 + $0xa8] sm:$0xff]
    %v2984 = vld [vmem:[%s2961 + $0xb0] sm:$0xff]
    %v2985 = vld [vmem:[%s2961 + $0xb8] sm:$0xff]
    %v2986 = vld [vmem:[%s2961 + $0xc0] sm:$0xff]
    %v2987 = vld [vmem:[%s2961 + $0xc8] sm:$0xff]
    %v2988 = vld [vmem:[%s2961 + $0xd0] sm:$0xff]
    %v2989 = vld [vmem:[%s2961 + $0xd8] sm:$0xff]
    %v2990 = vld [vmem:[%s2961 + $0xe0] sm:$0xff]
    %v2991 = vld [vmem:[%s2961 + $0xe8] sm:$0xff]
    %v2992 = vld [vmem:[%s2961 + $0xf0] sm:$0xff]
    %v2993 = vld [vmem:[%s2961 + $0xf8] sm:$0xff]
    %v2994 = vld [vmem:[%s2961 + $0x100] sm:$0xff]
    %v2995 = vld [vmem:[%s2961 + $0x108] sm:$0xff]
    %v2996 = vld [vmem:[%s2961 + $0x110] sm:$0xff]
    %v2997 = vld [vmem:[%s2961 + $0x118] sm:$0xff]
    %v2998 = vld [vmem:[%s2961 + $0x120] sm:$0xff]
    %v2999 = vld [vmem:[%s2961 + $0x128] sm:$0xff]
    %v3000 = vld [vmem:[%s2961 + $0x130] sm:$0xff]
    %v3001 = vld [vmem:[%s2961 + $0x138] sm:$0xff]
    %v3002 = vld [vmem:[%s2961 + $0x140] sm:$0xff]
    %v3003 = vld [vmem:[%s2961 + $0x148] sm:$0xff]
    %v3004 = vld [vmem:[%s2961 + $0x150] sm:$0xff]
    %v3005 = vld [vmem:[%s2961 + $0x158] sm:$0xff]
    %v3006 = vld [vmem:[%s2961 + $0x160] sm:$0xff]
    %v3007 = vld [vmem:[%s2961 + $0x168] sm:$0xff]
    %v3008 = vld [vmem:[%s2961 + $0x170] sm:$0xff]
    %v3009 = vld [vmem:[%s2961 + $0x178] sm:$0xff]
    %3010 = vmatprep.subr.mxu0 0.0
    %3011 = vmatpush1.msra.mxu0 %v2962
    %3012 = vmatprep.subr.mxu0 0.0
    %3013 = vmatpush1.msra.mxu0 %v2963
    %3014 = vmatprep.subr.mxu0 0.0
    %3015 = vmatpush1.msra.mxu0 %v2964
    %3016 = vmatprep.subr.mxu0 0.0
    %3017 = vmatpush1.msra.mxu0 %v2965
    %3018 = vmatprep.subr.mxu0 0.0
    %3019 = vmatpush1.msra.mxu0 %v2966
    %3020 = vmatprep.subr.mxu0 0.0
    %3021 = vmatpush1.msra.mxu0 %v2967
    %3022 = vmatprep.subr.mxu0 0.0
    %3023 = vmatpush1.msra.mxu0 %v2968
    %3024 = vmatprep.subr.mxu0 0.0
    %3025 = vmatpush1.msra.mxu0 %v2969
    %3026 = vmatprep.subr.mxu0 0.0
    %3027 = vmatpush1.msra.mxu0 %v2970
    %3028 = vmatprep.subr.mxu0 0.0
    %3029 = vmatpush1.msra.mxu0 %v2971
    %3030 = vmatprep.subr.mxu0 0.0
    %3031 = vmatpush1.msra.mxu0 %v2972
    %3032 = vmatprep.subr.mxu0 0.0
    %3033 = vmatpush1.msra.mxu0 %v2973
    %3034 = vmatprep.subr.mxu0 0.0
    %3035 = vmatpush1.msra.mxu0 %v2974
    %3036 = vmatprep.subr.mxu0 0.0
    %3037 = vmatpush1.msra.mxu0 %v2975
    %3038 = vmatprep.subr.mxu0 0.0
    %3039 = vmatpush1.msra.mxu0 %v2976
    %3040 = vmatprep.subr.mxu0 0.0
    %3041 = vmatpush1.msra.mxu0 %v2977
    %3042 = vmatprep.subr.mxu0 0.0
    %3043 = vmatpush1.msra.mxu0 %v2978
    %3044 = vmatprep.subr.mxu0 0.0
    %3045 = vmatpush1.msra.mxu0 %v2979
    %3046 = vmatprep.subr.mxu0 0.0
    %3047 = vmatpush1.msra.mxu0 %v2980
    %3048 = vmatprep.subr.mxu0 0.0
    %3049 = vmatpush1.msra.mxu0 %v2981
    %3050 = vmatprep.subr.mxu0 0.0
    %3051 = vmatpush1.msra.mxu0 %v2982
    %3052 = vmatprep.subr.mxu0 0.0
    %3053 = vmatpush1.msra.mxu0 %v2983
    %3054 = vmatprep.subr.mxu0 0.0
    %3055 = vmatpush1.msra.mxu0 %v2984
    %3056 = vmatprep.subr.mxu0 0.0
    %3057 = vmatpush1.msra.mxu0 %v2985
    %3058 = vmatprep.subr.mxu0 0.0
    %3059 = vmatpush1.msra.mxu0 %v2986
    %3060 = vmatprep.subr.mxu0 0.0
    %3061 = vmatpush1.msra.mxu0 %v2987
    %3062 = vmatprep.subr.mxu0 0.0
    %3063 = vmatpush1.msra.mxu0 %v2988
    %3064 = vmatprep.subr.mxu0 0.0
    %3065 = vmatpush1.msra.mxu0 %v2989
    %3066 = vmatprep.subr.mxu0 0.0
    %3067 = vmatpush1.msra.mxu0 %v2990
    %3068 = vmatprep.subr.mxu0 0.0
    %3069 = vmatpush1.msra.mxu0 %v2991
    %3070 = vmatprep.subr.mxu0 0.0
    %3071 = vmatpush1.msra.mxu0 %v2992
    %3072 = vmatprep.subr.mxu0 0.0
    %3073 = vmatpush1.msra.mxu0 %v2993
    %3074 = vmatprep.mubr.f32.mxu0 %v2953
    %3075 = vmatmul.mubr.f32.gmra.mrb[0].mxu0 %v2919
    %v3076 = vpop.f32.mrb[0].mxu0
    %v3077 = vadd.f32 0.0, %v3076
    %v3078 = vpop.f32.mrb[0].mxu0
    %3079 = vmatprep.mubr.f32.mxu0 %v2954
    %3080 = vmatmul.mubr.f32.gmra.mrb[0].mxu0 %v2924
    %v3081 = vpop.f32.mrb[0].mxu0
    %v3082 = vadd.f32 0.0, %v3081
    %v3083 = vpop.f32.mrb[0].mxu0
    %3084 = vmatprep.mubr.f32.mxu0 %v2955
    %3085 = vmatmul.mubr.f32.gmra.mrb[0].mxu0 %v2929
    %v3086 = vpop.f32.mrb[0].mxu0
    %v3087 = vadd.f32 0.0, %v3086
    %v3088 = vpop.f32.mrb[0].mxu0
    %3089 = vmatprep.mubr.f32.mxu0 %v2956
    %3090 = vmatmul.mubr.f32.gmra.mrb[0].mxu0 %v2934
    %v3091 = vpop.f32.mrb[0].mxu0
    %v3092 = vadd.f32 0.0, %v3091
    %v3093 = vpop.f32.mrb[0].mxu0
    %3094 = vdwg.mxu0
    %3095 = vmatprep.subr.mxu0 0.0
    %3096 = vmatpush1.msra.mxu0 %v2994
    %3097 = vmatprep.subr.mxu0 0.0
    %3098 = vmatpush1.msra.mxu0 %v2995
    %3099 = vmatprep.subr.mxu0 0.0
    %3100 = vmatpush1.msra.mxu0 %v2996
    %3101 = vmatprep.subr.mxu0 0.0
    %3102 = vmatpush1.msra.mxu0 %v2997
    %3103 = vmatprep.subr.mxu0 0.0
    %3104 = vmatpush1.msra.mxu0 %v2998
    %3105 = vmatprep.subr.mxu0 0.0
    %3106 = vmatpush1.msra.mxu0 %v2999
    %3107 = vmatprep.subr.mxu0 0.0
    %3108 = vmatpush1.msra.mxu0 %v3000
    %3109 = vmatprep.subr.mxu0 0.0
    %3110 = vmatpush1.msra.mxu0 %v3001
    %3111 = vmatprep.subr.mxu0 0.0
    %3112 = vmatpush1.msra.mxu0 %v3002
    %3113 = vmatprep.subr.mxu0 0.0
    %3114 = vmatpush1.msra.mxu0 %v3003
    %3115 = vmatprep.subr.mxu0 0.0
    %3116 = vmatpush1.msra.mxu0 %v3004
    %3117 = vmatprep.subr.mxu0 0.0
    %3118 = vmatpush1.msra.mxu0 %v3005
    %3119 = vmatprep.subr.mxu0 0.0
    %3120 = vmatpush1.msra.mxu0 %v3006
    %3121 = vmatprep.subr.mxu0 0.0
    %3122 = vmatpush1.msra.mxu0 %v3007
    %3123 = vmatprep.subr.mxu0 0.0
    %3124 = vmatpush1.msra.mxu0 %v3008
    %3125 = vmatprep.subr.mxu0 0.0
    %3126 = vmatpush1.msra.mxu0 %v3009
    %3127 = vmatprep.subr.mxu0 0.0
    %3128 = vmatpush1.msra.mxu0 0.0
    %3129 = vmatprep.subr.mxu0 0.0
    %3130 = vmatpush1.msra.mxu0 0.0
    %3131 = vmatprep.subr.mxu0 0.0
    %3132 = vmatpush1.msra.mxu0 0.0
    %3133 = vmatprep.subr.mxu0 0.0
    %3134 = vmatpush1.msra.mxu0 0.0
    %3135 = vmatprep.subr.mxu0 0.0
    %3136 = vmatpush1.msra.mxu0 0.0
    %3137 = vmatprep.subr.mxu0 0.0
    %3138 = vmatpush1.msra.mxu0 0.0
    %3139 = vmatprep.subr.mxu0 0.0
    %3140 = vmatpush1.msra.mxu0 0.0
    %3141 = vmatprep.subr.mxu0 0.0
    %3142 = vmatpush1.msra.mxu0 0.0
    %3143 = vmatprep.subr.mxu0 0.0
    %3144 = vmatpush1.msra.mxu0 0.0
    %3145 = vmatprep.subr.mxu0 0.0
    %3146 = vmatpush1.msra.mxu0 0.0
    %3147 = vmatprep.subr.mxu0 0.0
    %3148 = vmatpush1.msra.mxu0 0.0
    %3149 = vmatprep.subr.mxu0 0.0
    %3150 = vmatpush1.msra.mxu0 0.0
    %3151 = vmatprep.subr.mxu0 0.0
    %3152 = vmatpush1.msra.mxu0 0.0
    %3153 = vmatprep.subr.mxu0 0.0
    %3154 = vmatpush1.msra.mxu0 0.0
    %3155 = vmatprep.subr.mxu0 0.0
    %3156 = vmatpush1.msra.mxu0 0.0
    %3157 = vmatprep.subr.mxu0 0.0
    %3158 = vmatpush1.msra.mxu0 0.0
    %3159 = vmatprep.mubr.f32.mxu0 0.0
    %3160 = vmatmul.mubr.f32.gmra.mrb[0].mxu0 %v2957
    %v3161 = vpop.f32.mrb[0].mxu0
    %v3162 = vadd.f32 %v3077, %v3161
    %v3163 = vpop.f32.mrb[0].mxu0
    %3164 = vmatprep.mubr.f32.mxu0 0.0
    %3165 = vmatmul.mubr.f32.gmra.mrb[0].mxu0 %v2958
    %v3166 = vpop.f32.mrb[0].mxu0
    %v3167 = vadd.f32 %v3082, %v3166
    %v3168 = vpop.f32.mrb[0].mxu0
    %3169 = vmatprep.mubr.f32.mxu0 0.0
    %3170 = vmatmul.mubr.f32.gmra.mrb[0].mxu0 %v2959
    %v3171 = vpop.f32.mrb[0].mxu0
    %v3172 = vadd.f32 %v3087, %v3171
    %v3173 = vpop.f32.mrb[0].mxu0
    %3174 = vmatprep.mubr.f32.mxu0 0.0
    %3175 = vmatmul.mubr.f32.gmra.mrb[0].mxu0 %v2960
    %v3176 = vpop.f32.mrb[0].mxu0
    %v3177 = vadd.f32 %v3092, %v3176
    %v3178 = vpop.f32.mrb[0].mxu0
    %3179 = vdwg.mxu0
    %v3180 = vlaneseq
    %v3181 = vshrl.u32 %v3180, 7
    %v3182 = vsub.s32 2, %v3181
    %v3183 = vrot.slane %v452, %v3182
    %v3184 = vlaneseq
    %v3185 = vshrl.u32 %v3184, 7
    %v3186 = vsub.s32 2, %v3185
    %v3187 = vrot.slane %v454, %v3186
    %v3188 = vlaneseq
    %v3189 = vshrl.u32 %v3188, 7
    %v3190 = vsub.s32 2, %v3189
    %v3191 = vrot.slane %v743, %v3190
    %v3192 = vlaneseq
    %v3193 = vshrl.u32 %v3192, 7
    %v3194 = vsub.s32 2, %v3193
    %v3195 = vrot.slane %v745, %v3194
    %v3196 = vmul.f32 %v3162, %v3183
    %v3197 = vmul.f32 %v3167, %v3183
    %v3198 = vmul.f32 %v3172, %v3187
    %v3199 = vmul.f32 %v3177, %v3187
    %v3200 = vmul.f32 %v3162, %v3191
    %v3201 = vmul.f32 %v3167, %v3191
    %v3202 = vmul.f32 %v3172, %v3195
    %v3203 = vmul.f32 %v3177, %v3195
    %s3204 = scalar_lea.vmem %s6, 3840
    %v3205 = vld [vmem:[%s3204] sm:$0xff]
    %v3206 = vld [vmem:[%s3204 + $0x8] sm:$0xff]
    %v3207 = vld [vmem:[%s3204 + $0x10] sm:$0xff]
    %v3208 = vld [vmem:[%s3204 + $0x18] sm:$0xff]
    %v3209 = vld [vmem:[%s3204 + $0x20] sm:$0xff]
    %v3210 = vld [vmem:[%s3204 + $0x28] sm:$0xff]
    %v3211 = vld [vmem:[%s3204 + $0x30] sm:$0xff]
    %v3212 = vld [vmem:[%s3204 + $0x38] sm:$0xff]
    %v3213 = vld [vmem:[%s3204 + $0x40] sm:$0xff]
    %v3214 = vld [vmem:[%s3204 + $0x48] sm:$0xff]
    %v3215 = vld [vmem:[%s3204 + $0x50] sm:$0xff]
    %v3216 = vld [vmem:[%s3204 + $0x58] sm:$0xff]
    %v3217 = vld [vmem:[%s3204 + $0x60] sm:$0xff]
    %v3218 = vld [vmem:[%s3204 + $0x68] sm:$0xff]
    %v3219 = vld [vmem:[%s3204 + $0x70] sm:$0xff]
    %v3220 = vld [vmem:[%s3204 + $0x78] sm:$0xff]
    %v3221 = vld [vmem:[%s3204 + $0x80] sm:$0xff]
    %v3222 = vld [vmem:[%s3204 + $0x88] sm:$0xff]
    %v3223 = vld [vmem:[%s3204 + $0x90] sm:$0xff]
    %v3224 = vld [vmem:[%s3204 + $0x98] sm:$0xff]
    %v3225 = vld [vmem:[%s3204 + $0xa0] sm:$0xff]
    %v3226 = vld [vmem:[%s3204 + $0xa8] sm:$0xff]
    %v3227 = vld [vmem:[%s3204 + $0xb0] sm:$0xff]
    %v3228 = vld [vmem:[%s3204 + $0xb8] sm:$0xff]
    %v3229 = vld [vmem:[%s3204 + $0xc0] sm:$0xff]
    %v3230 = vld [vmem:[%s3204 + $0xc8] sm:$0xff]
    %v3231 = vld [vmem:[%s3204 + $0xd0] sm:$0xff]
    %v3232 = vld [vmem:[%s3204 + $0xd8] sm:$0xff]
    %v3233 = vld [vmem:[%s3204 + $0xe0] sm:$0xff]
    %v3234 = vld [vmem:[%s3204 + $0xe8] sm:$0xff]
    %v3235 = vld [vmem:[%s3204 + $0xf0] sm:$0xff]
    %v3236 = vld [vmem:[%s3204 + $0xf8] sm:$0xff]
    %v3237 = vld [vmem:[%s3204 + $0x100] sm:$0xff]
    %v3238 = vld [vmem:[%s3204 + $0x108] sm:$0xff]
    %v3239 = vld [vmem:[%s3204 + $0x110] sm:$0xff]
    %v3240 = vld [vmem:[%s3204 + $0x118] sm:$0xff]
    %v3241 = vld [vmem:[%s3204 + $0x120] sm:$0xff]
    %v3242 = vld [vmem:[%s3204 + $0x128] sm:$0xff]
    %v3243 = vld [vmem:[%s3204 + $0x130] sm:$0xff]
    %v3244 = vld [vmem:[%s3204 + $0x138] sm:$0xff]
    %v3245 = vld [vmem:[%s3204 + $0x140] sm:$0xff]
    %v3246 = vld [vmem:[%s3204 + $0x148] sm:$0xff]
    %v3247 = vld [vmem:[%s3204 + $0x150] sm:$0xff]
    %v3248 = vld [vmem:[%s3204 + $0x158] sm:$0xff]
    %v3249 = vld [vmem:[%s3204 + $0x160] sm:$0xff]
    %v3250 = vld [vmem:[%s3204 + $0x168] sm:$0xff]
    %v3251 = vld [vmem:[%s3204 + $0x170] sm:$0xff]
    %v3252 = vld [vmem:[%s3204 + $0x178] sm:$0xff]
    %3253 = vmatprep.subr.mxu0 0.0
    %3254 = vmatpush1.msra.mxu0 %v3205
    %3255 = vmatprep.subr.mxu0 0.0
    %3256 = vmatpush1.msra.mxu0 %v3206
    %3257 = vmatprep.subr.mxu0 0.0
    %3258 = vmatpush1.msra.mxu0 %v3207
    %3259 = vmatprep.subr.mxu0 0.0
    %3260 = vmatpush1.msra.mxu0 %v3208
    %3261 = vmatprep.subr.mxu0 0.0
    %3262 = vmatpush1.msra.mxu0 %v3209
    %3263 = vmatprep.subr.mxu0 0.0
    %3264 = vmatpush1.msra.mxu0 %v3210
    %3265 = vmatprep.subr.mxu0 0.0
    %3266 = vmatpush1.msra.mxu0 %v3211
    %3267 = vmatprep.subr.mxu0 0.0
    %3268 = vmatpush1.msra.mxu0 %v3212
    %3269 = vmatprep.subr.mxu0 0.0
    %3270 = vmatpush1.msra.mxu0 %v3213
    %3271 = vmatprep.subr.mxu0 0.0
    %3272 = vmatpush1.msra.mxu0 %v3214
    %3273 = vmatprep.subr.mxu0 0.0
    %3274 = vmatpush1.msra.mxu0 %v3215
    %3275 = vmatprep.subr.mxu0 0.0
    %3276 = vmatpush1.msra.mxu0 %v3216
    %3277 = vmatprep.subr.mxu0 0.0
    %3278 = vmatpush1.msra.mxu0 %v3217
    %3279 = vmatprep.subr.mxu0 0.0
    %3280 = vmatpush1.msra.mxu0 %v3218
    %3281 = vmatprep.subr.mxu0 0.0
    %3282 = vmatpush1.msra.mxu0 %v3219
    %3283 = vmatprep.subr.mxu0 0.0
    %3284 = vmatpush1.msra.mxu0 %v3220
    %3285 = vmatprep.subr.mxu0 0.0
    %3286 = vmatpush1.msra.mxu0 %v3221
    %3287 = vmatprep.subr.mxu0 0.0
    %3288 = vmatpush1.msra.mxu0 %v3222
    %3289 = vmatprep.subr.mxu0 0.0
    %3290 = vmatpush1.msra.mxu0 %v3223
    %3291 = vmatprep.subr.mxu0 0.0
    %3292 = vmatpush1.msra.mxu0 %v3224
    %3293 = vmatprep.subr.mxu0 0.0
    %3294 = vmatpush1.msra.mxu0 %v3225
    %3295 = vmatprep.subr.mxu0 0.0
    %3296 = vmatpush1.msra.mxu0 %v3226
    %3297 = vmatprep.subr.mxu0 0.0
    %3298 = vmatpush1.msra.mxu0 %v3227
    %3299 = vmatprep.subr.mxu0 0.0
    %3300 = vmatpush1.msra.mxu0 %v3228
    %3301 = vmatprep.subr.mxu0 0.0
    %3302 = vmatpush1.msra.mxu0 %v3229
    %3303 = vmatprep.subr.mxu0 0.0
    %3304 = vmatpush1.msra.mxu0 %v3230
    %3305 = vmatprep.subr.mxu0 0.0
    %3306 = vmatpush1.msra.mxu0 %v3231
    %3307 = vmatprep.subr.mxu0 0.0
    %3308 = vmatpush1.msra.mxu0 %v3232
    %3309 = vmatprep.subr.mxu0 0.0
    %3310 = vmatpush1.msra.mxu0 %v3233
    %3311 = vmatprep.subr.mxu0 0.0
    %3312 = vmatpush1.msra.mxu0 %v3234
    %3313 = vmatprep.subr.mxu0 0.0
    %3314 = vmatpush1.msra.mxu0 %v3235
    %3315 = vmatprep.subr.mxu0 0.0
    %3316 = vmatpush1.msra.mxu0 %v3236
    %3317 = vmatprep.mubr.f32.mxu0 %v3196
    %3318 = vmatmul.mubr.f32.gmra.mrb[0].mxu0 %v3162
    %v3319 = vpop.f32.mrb[0].mxu0
    %v3320 = vadd.f32 0.0, %v3319
    %v3321 = vpop.f32.mrb[0].mxu0
    %3322 = vmatprep.mubr.f32.mxu0 %v3197
    %3323 = vmatmul.mubr.f32.gmra.mrb[0].mxu0 %v3167
    %v3324 = vpop.f32.mrb[0].mxu0
    %v3325 = vadd.f32 0.0, %v3324
    %v3326 = vpop.f32.mrb[0].mxu0
    %3327 = vmatprep.mubr.f32.mxu0 %v3198
    %3328 = vmatmul.mubr.f32.gmra.mrb[0].mxu0 %v3172
    %v3329 = vpop.f32.mrb[0].mxu0
    %v3330 = vadd.f32 0.0, %v3329
    %v3331 = vpop.f32.mrb[0].mxu0
    %3332 = vmatprep.mubr.f32.mxu0 %v3199
    %3333 = vmatmul.mubr.f32.gmra.mrb[0].mxu0 %v3177
    %v3334 = vpop.f32.mrb[0].mxu0
    %v3335 = vadd.f32 0.0, %v3334
    %v3336 = vpop.f32.mrb[0].mxu0
    %3337 = vdwg.mxu0
    %3338 = vmatprep.subr.mxu0 0.0
    %3339 = vmatpush1.msra.mxu0 %v3237
    %3340 = vmatprep.subr.mxu0 0.0
    %3341 = vmatpush1.msra.mxu0 %v3238
    %3342 = vmatprep.subr.mxu0 0.0
    %3343 = vmatpush1.msra.mxu0 %v3239
    %3344 = vmatprep.subr.mxu0 0.0
    %3345 = vmatpush1.msra.mxu0 %v3240
    %3346 = vmatprep.subr.mxu0 0.0
    %3347 = vmatpush1.msra.mxu0 %v3241
    %3348 = vmatprep.subr.mxu0 0.0
    %3349 = vmatpush1.msra.mxu0 %v3242
    %3350 = vmatprep.subr.mxu0 0.0
    %3351 = vmatpush1.msra.mxu0 %v3243
    %3352 = vmatprep.subr.mxu0 0.0
    %3353 = vmatpush1.msra.mxu0 %v3244
    %3354 = vmatprep.subr.mxu0 0.0
    %3355 = vmatpush1.msra.mxu0 %v3245
    %3356 = vmatprep.subr.mxu0 0.0
    %3357 = vmatpush1.msra.mxu0 %v3246
    %3358 = vmatprep.subr.mxu0 0.0
    %3359 = vmatpush1.msra.mxu0 %v3247
    %3360 = vmatprep.subr.mxu0 0.0
    %3361 = vmatpush1.msra.mxu0 %v3248
    %3362 = vmatprep.subr.mxu0 0.0
    %3363 = vmatpush1.msra.mxu0 %v3249
    %3364 = vmatprep.subr.mxu0 0.0
    %3365 = vmatpush1.msra.mxu0 %v3250
    %3366 = vmatprep.subr.mxu0 0.0
    %3367 = vmatpush1.msra.mxu0 %v3251
    %3368 = vmatprep.subr.mxu0 0.0
    %3369 = vmatpush1.msra.mxu0 %v3252
    %3370 = vmatprep.subr.mxu0 0.0
    %3371 = vmatpush1.msra.mxu0 0.0
    %3372 = vmatprep.subr.mxu0 0.0
    %3373 = vmatpush1.msra.mxu0 0.0
    %3374 = vmatprep.subr.mxu0 0.0
    %3375 = vmatpush1.msra.mxu0 0.0
    %3376 = vmatprep.subr.mxu0 0.0
    %3377 = vmatpush1.msra.mxu0 0.0
    %3378 = vmatprep.subr.mxu0 0.0
    %3379 = vmatpush1.msra.mxu0 0.0
    %3380 = vmatprep.subr.mxu0 0.0
    %3381 = vmatpush1.msra.mxu0 0.0
    %3382 = vmatprep.subr.mxu0 0.0
    %3383 = vmatpush1.msra.mxu0 0.0
    %3384 = vmatprep.subr.mxu0 0.0
    %3385 = vmatpush1.msra.mxu0 0.0
    %3386 = vmatprep.subr.mxu0 0.0
    %3387 = vmatpush1.msra.mxu0 0.0
    %3388 = vmatprep.subr.mxu0 0.0
    %3389 = vmatpush1.msra.mxu0 0.0
    %3390 = vmatprep.subr.mxu0 0.0
    %3391 = vmatpush1.msra.mxu0 0.0
    %3392 = vmatprep.subr.mxu0 0.0
    %3393 = vmatpush1.msra.mxu0 0.0
    %3394 = vmatprep.subr.mxu0 0.0
    %3395 = vmatpush1.msra.mxu0 0.0
    %3396 = vmatprep.subr.mxu0 0.0
    %3397 = vmatpush1.msra.mxu0 0.0
    %3398 = vmatprep.subr.mxu0 0.0
    %3399 = vmatpush1.msra.mxu0 0.0
    %3400 = vmatprep.subr.mxu0 0.0
    %3401 = vmatpush1.msra.mxu0 0.0
    %3402 = vmatprep.mubr.f32.mxu0 0.0
    %3403 = vmatmul.mubr.f32.gmra.mrb[0].mxu0 %v3200
    %v3404 = vpop.f32.mrb[0].mxu0
    %v3405 = vadd.f32 %v3320, %v3404
    %v3406 = vpop.f32.mrb[0].mxu0
    %3407 = vmatprep.mubr.f32.mxu0 0.0
    %3408 = vmatmul.mubr.f32.gmra.mrb[0].mxu0 %v3201
    %v3409 = vpop.f32.mrb[0].mxu0
    %v3410 = vadd.f32 %v3325, %v3409
    %v3411 = vpop.f32.mrb[0].mxu0
    %3412 = vmatprep.mubr.f32.mxu0 0.0
    %3413 = vmatmul.mubr.f32.gmra.mrb[0].mxu0 %v3202
    %v3414 = vpop.f32.mrb[0].mxu0
    %v3415 = vadd.f32 %v3330, %v3414
    %v3416 = vpop.f32.mrb[0].mxu0
    %3417 = vmatprep.mubr.f32.mxu0 0.0
    %3418 = vmatmul.mubr.f32.gmra.mrb[0].mxu0 %v3203
    %v3419 = vpop.f32.mrb[0].mxu0
    %v3420 = vadd.f32 %v3335, %v3419
    %v3421 = vpop.f32.mrb[0].mxu0
    %3422 = vdwg.mxu0
    %v3423 = vlaneseq
    %v3424 = vshrl.u32 %v3423, 7
    %v3425 = vsub.s32 3, %v3424
    %v3426 = vrot.slane %v452, %v3425
    %v3427 = vlaneseq
    %v3428 = vshrl.u32 %v3427, 7
    %v3429 = vsub.s32 3, %v3428
    %v3430 = vrot.slane %v454, %v3429
    %v3431 = vlaneseq
    %v3432 = vshrl.u32 %v3431, 7
    %v3433 = vsub.s32 3, %v3432
    %v3434 = vrot.slane %v743, %v3433
    %v3435 = vlaneseq
    %v3436 = vshrl.u32 %v3435, 7
    %v3437 = vsub.s32 3, %v3436
    %v3438 = vrot.slane %v745, %v3437
    %v3439 = vmul.f32 %v3405, %v3426
    %v3440 = vmul.f32 %v3410, %v3426
    %v3441 = vmul.f32 %v3415, %v3430
    %v3442 = vmul.f32 %v3420, %v3430
    %v3443 = vmul.f32 %v3405, %v3434
    %v3444 = vmul.f32 %v3410, %v3434
    %v3445 = vmul.f32 %v3415, %v3438
    %v3446 = vmul.f32 %v3420, %v3438
    %s3447 = scalar_lea.vmem %s6, 4224
    %v3448 = vld [vmem:[%s3447] sm:$0xff]
    %v3449 = vld [vmem:[%s3447 + $0x8] sm:$0xff]
    %v3450 = vld [vmem:[%s3447 + $0x10] sm:$0xff]
    %v3451 = vld [vmem:[%s3447 + $0x18] sm:$0xff]
    %v3452 = vld [vmem:[%s3447 + $0x20] sm:$0xff]
    %v3453 = vld [vmem:[%s3447 + $0x28] sm:$0xff]
    %v3454 = vld [vmem:[%s3447 + $0x30] sm:$0xff]
    %v3455 = vld [vmem:[%s3447 + $0x38] sm:$0xff]
    %v3456 = vld [vmem:[%s3447 + $0x40] sm:$0xff]
    %v3457 = vld [vmem:[%s3447 + $0x48] sm:$0xff]
    %v3458 = vld [vmem:[%s3447 + $0x50] sm:$0xff]
    %v3459 = vld [vmem:[%s3447 + $0x58] sm:$0xff]
    %v3460 = vld [vmem:[%s3447 + $0x60] sm:$0xff]
    %v3461 = vld [vmem:[%s3447 + $0x68] sm:$0xff]
    %v3462 = vld [vmem:[%s3447 + $0x70] sm:$0xff]
    %v3463 = vld [vmem:[%s3447 + $0x78] sm:$0xff]
    %v3464 = vld [vmem:[%s3447 + $0x80] sm:$0xff]
    %v3465 = vld [vmem:[%s3447 + $0x88] sm:$0xff]
    %v3466 = vld [vmem:[%s3447 + $0x90] sm:$0xff]
    %v3467 = vld [vmem:[%s3447 + $0x98] sm:$0xff]
    %v3468 = vld [vmem:[%s3447 + $0xa0] sm:$0xff]
    %v3469 = vld [vmem:[%s3447 + $0xa8] sm:$0xff]
    %v3470 = vld [vmem:[%s3447 + $0xb0] sm:$0xff]
    %v3471 = vld [vmem:[%s3447 + $0xb8] sm:$0xff]
    %v3472 = vld [vmem:[%s3447 + $0xc0] sm:$0xff]
    %v3473 = vld [vmem:[%s3447 + $0xc8] sm:$0xff]
    %v3474 = vld [vmem:[%s3447 + $0xd0] sm:$0xff]
    %v3475 = vld [vmem:[%s3447 + $0xd8] sm:$0xff]
    %v3476 = vld [vmem:[%s3447 + $0xe0] sm:$0xff]
    %v3477 = vld [vmem:[%s3447 + $0xe8] sm:$0xff]
    %v3478 = vld [vmem:[%s3447 + $0xf0] sm:$0xff]
    %v3479 = vld [vmem:[%s3447 + $0xf8] sm:$0xff]
    %v3480 = vld [vmem:[%s3447 + $0x100] sm:$0xff]
    %v3481 = vld [vmem:[%s3447 + $0x108] sm:$0xff]
    %v3482 = vld [vmem:[%s3447 + $0x110] sm:$0xff]
    %v3483 = vld [vmem:[%s3447 + $0x118] sm:$0xff]
    %v3484 = vld [vmem:[%s3447 + $0x120] sm:$0xff]
    %v3485 = vld [vmem:[%s3447 + $0x128] sm:$0xff]
    %v3486 = vld [vmem:[%s3447 + $0x130] sm:$0xff]
    %v3487 = vld [vmem:[%s3447 + $0x138] sm:$0xff]
    %v3488 = vld [vmem:[%s3447 + $0x140] sm:$0xff]
    %v3489 = vld [vmem:[%s3447 + $0x148] sm:$0xff]
    %v3490 = vld [vmem:[%s3447 + $0x150] sm:$0xff]
    %v3491 = vld [vmem:[%s3447 + $0x158] sm:$0xff]
    %v3492 = vld [vmem:[%s3447 + $0x160] sm:$0xff]
    %v3493 = vld [vmem:[%s3447 + $0x168] sm:$0xff]
    %v3494 = vld [vmem:[%s3447 + $0x170] sm:$0xff]
    %v3495 = vld [vmem:[%s3447 + $0x178] sm:$0xff]
    %3496 = vmatprep.subr.mxu0 0.0
    %3497 = vmatpush1.msra.mxu0 %v3448
    %3498 = vmatprep.subr.mxu0 0.0
    %3499 = vmatpush1.msra.mxu0 %v3449
    %3500 = vmatprep.subr.mxu0 0.0
    %3501 = vmatpush1.msra.mxu0 %v3450
    %3502 = vmatprep.subr.mxu0 0.0
    %3503 = vmatpush1.msra.mxu0 %v3451
    %3504 = vmatprep.subr.mxu0 0.0
    %3505 = vmatpush1.msra.mxu0 %v3452
    %3506 = vmatprep.subr.mxu0 0.0
    %3507 = vmatpush1.msra.mxu0 %v3453
    %3508 = vmatprep.subr.mxu0 0.0
    %3509 = vmatpush1.msra.mxu0 %v3454
    %3510 = vmatprep.subr.mxu0 0.0
    %3511 = vmatpush1.msra.mxu0 %v3455
    %3512 = vmatprep.subr.mxu0 0.0
    %3513 = vmatpush1.msra.mxu0 %v3456
    %3514 = vmatprep.subr.mxu0 0.0
    %3515 = vmatpush1.msra.mxu0 %v3457
    %3516 = vmatprep.subr.mxu0 0.0
    %3517 = vmatpush1.msra.mxu0 %v3458
    %3518 = vmatprep.subr.mxu0 0.0
    %3519 = vmatpush1.msra.mxu0 %v3459
    %3520 = vmatprep.subr.mxu0 0.0
    %3521 = vmatpush1.msra.mxu0 %v3460
    %3522 = vmatprep.subr.mxu0 0.0
    %3523 = vmatpush1.msra.mxu0 %v3461
    %3524 = vmatprep.subr.mxu0 0.0
    %3525 = vmatpush1.msra.mxu0 %v3462
    %3526 = vmatprep.subr.mxu0 0.0
    %3527 = vmatpush1.msra.mxu0 %v3463
    %3528 = vmatprep.subr.mxu0 0.0
    %3529 = vmatpush1.msra.mxu0 %v3464
    %3530 = vmatprep.subr.mxu0 0.0
    %3531 = vmatpush1.msra.mxu0 %v3465
    %3532 = vmatprep.subr.mxu0 0.0
    %3533 = vmatpush1.msra.mxu0 %v3466
    %3534 = vmatprep.subr.mxu0 0.0
    %3535 = vmatpush1.msra.mxu0 %v3467
    %3536 = vmatprep.subr.mxu0 0.0
    %3537 = vmatpush1.msra.mxu0 %v3468
    %3538 = vmatprep.subr.mxu0 0.0
    %3539 = vmatpush1.msra.mxu0 %v3469
    %3540 = vmatprep.subr.mxu0 0.0
    %3541 = vmatpush1.msra.mxu0 %v3470
    %3542 = vmatprep.subr.mxu0 0.0
    %3543 = vmatpush1.msra.mxu0 %v3471
    %3544 = vmatprep.subr.mxu0 0.0
    %3545 = vmatpush1.msra.mxu0 %v3472
    %3546 = vmatprep.subr.mxu0 0.0
    %3547 = vmatpush1.msra.mxu0 %v3473
    %3548 = vmatprep.subr.mxu0 0.0
    %3549 = vmatpush1.msra.mxu0 %v3474
    %3550 = vmatprep.subr.mxu0 0.0
    %3551 = vmatpush1.msra.mxu0 %v3475
    %3552 = vmatprep.subr.mxu0 0.0
    %3553 = vmatpush1.msra.mxu0 %v3476
    %3554 = vmatprep.subr.mxu0 0.0
    %3555 = vmatpush1.msra.mxu0 %v3477
    %3556 = vmatprep.subr.mxu0 0.0
    %3557 = vmatpush1.msra.mxu0 %v3478
    %3558 = vmatprep.subr.mxu0 0.0
    %3559 = vmatpush1.msra.mxu0 %v3479
    %3560 = vmatprep.mubr.f32.mxu0 %v3439
    %3561 = vmatmul.mubr.f32.gmra.mrb[0].mxu0 %v3405
    %v3562 = vpop.f32.mrb[0].mxu0
    %v3563 = vadd.f32 0.0, %v3562
    %v3564 = vpop.f32.mrb[0].mxu0
    %3565 = vmatprep.mubr.f32.mxu0 %v3440
    %3566 = vmatmul.mubr.f32.gmra.mrb[0].mxu0 %v3410
    %v3567 = vpop.f32.mrb[0].mxu0
    %v3568 = vadd.f32 0.0, %v3567
    %v3569 = vpop.f32.mrb[0].mxu0
    %3570 = vmatprep.mubr.f32.mxu0 %v3441
    %3571 = vmatmul.mubr.f32.gmra.mrb[0].mxu0 %v3415
    %v3572 = vpop.f32.mrb[0].mxu0
    %v3573 = vadd.f32 0.0, %v3572
    %v3574 = vpop.f32.mrb[0].mxu0
    %3575 = vmatprep.mubr.f32.mxu0 %v3442
    %3576 = vmatmul.mubr.f32.gmra.mrb[0].mxu0 %v3420
    %v3577 = vpop.f32.mrb[0].mxu0
    %v3578 = vadd.f32 0.0, %v3577
    %v3579 = vpop.f32.mrb[0].mxu0
    %3580 = vdwg.mxu0
    %3581 = vmatprep.subr.mxu0 0.0
    %3582 = vmatpush1.msra.mxu0 %v3480
    %3583 = vmatprep.subr.mxu0 0.0
    %3584 = vmatpush1.msra.mxu0 %v3481
    %3585 = vmatprep.subr.mxu0 0.0
    %3586 = vmatpush1.msra.mxu0 %v3482
    %3587 = vmatprep.subr.mxu0 0.0
    %3588 = vmatpush1.msra.mxu0 %v3483
    %3589 = vmatprep.subr.mxu0 0.0
    %3590 = vmatpush1.msra.mxu0 %v3484
    %3591 = vmatprep.subr.mxu0 0.0
    %3592 = vmatpush1.msra.mxu0 %v3485
    %3593 = vmatprep.subr.mxu0 0.0
    %3594 = vmatpush1.msra.mxu0 %v3486
    %3595 = vmatprep.subr.mxu0 0.0
    %3596 = vmatpush1.msra.mxu0 %v3487
    %3597 = vmatprep.subr.mxu0 0.0
    %3598 = vmatpush1.msra.mxu0 %v3488
    %3599 = vmatprep.subr.mxu0 0.0
    %3600 = vmatpush1.msra.mxu0 %v3489
    %3601 = vmatprep.subr.mxu0 0.0
    %3602 = vmatpush1.msra.mxu0 %v3490
    %3603 = vmatprep.subr.mxu0 0.0
    %3604 = vmatpush1.msra.mxu0 %v3491
    %3605 = vmatprep.subr.mxu0 0.0
    %3606 = vmatpush1.msra.mxu0 %v3492
    %3607 = vmatprep.subr.mxu0 0.0
    %3608 = vmatpush1.msra.mxu0 %v3493
    %3609 = vmatprep.subr.mxu0 0.0
    %3610 = vmatpush1.msra.mxu0 %v3494
    %3611 = vmatprep.subr.mxu0 0.0
    %3612 = vmatpush1.msra.mxu0 %v3495
    %3613 = vmatprep.subr.mxu0 0.0
    %3614 = vmatpush1.msra.mxu0 0.0
    %3615 = vmatprep.subr.mxu0 0.0
    %3616 = vmatpush1.msra.mxu0 0.0
    %3617 = vmatprep.subr.mxu0 0.0
    %3618 = vmatpush1.msra.mxu0 0.0
    %3619 = vmatprep.subr.mxu0 0.0
    %3620 = vmatpush1.msra.mxu0 0.0
    %3621 = vmatprep.subr.mxu0 0.0
    %3622 = vmatpush1.msra.mxu0 0.0
    %3623 = vmatprep.subr.mxu0 0.0
    %3624 = vmatpush1.msra.mxu0 0.0
    %3625 = vmatprep.subr.mxu0 0.0
    %3626 = vmatpush1.msra.mxu0 0.0
    %3627 = vmatprep.subr.mxu0 0.0
    %3628 = vmatpush1.msra.mxu0 0.0
    %3629 = vmatprep.subr.mxu0 0.0
    %3630 = vmatpush1.msra.mxu0 0.0
    %3631 = vmatprep.subr.mxu0 0.0
    %3632 = vmatpush1.msra.mxu0 0.0
    %3633 = vmatprep.subr.mxu0 0.0
    %3634 = vmatpush1.msra.mxu0 0.0
    %3635 = vmatprep.subr.mxu0 0.0
    %3636 = vmatpush1.msra.mxu0 0.0
    %3637 = vmatprep.subr.mxu0 0.0
    %3638 = vmatpush1.msra.mxu0 0.0
    %3639 = vmatprep.subr.mxu0 0.0
    %3640 = vmatpush1.msra.mxu0 0.0
    %3641 = vmatprep.subr.mxu0 0.0
    %3642 = vmatpush1.msra.mxu0 0.0
    %3643 = vmatprep.subr.mxu0 0.0
    %3644 = vmatpush1.msra.mxu0 0.0
    %3645 = vmatprep.mubr.f32.mxu0 0.0
    %3646 = vmatmul.mubr.f32.gmra.mrb[0].mxu0 %v3443
    %v3647 = vpop.f32.mrb[0].mxu0
    %v3648 = vadd.f32 %v3563, %v3647
    %v3649 = vpop.f32.mrb[0].mxu0
    %3650 = vmatprep.mubr.f32.mxu0 0.0
    %3651 = vmatmul.mubr.f32.gmra.mrb[0].mxu0 %v3444
    %v3652 = vpop.f32.mrb[0].mxu0
    %v3653 = vadd.f32 %v3568, %v3652
    %v3654 = vpop.f32.mrb[0].mxu0
    %3655 = vmatprep.mubr.f32.mxu0 0.0
    %3656 = vmatmul.mubr.f32.gmra.mrb[0].mxu0 %v3445
    %v3657 = vpop.f32.mrb[0].mxu0
    %v3658 = vadd.f32 %v3573, %v3657
    %v3659 = vpop.f32.mrb[0].mxu0
    %3660 = vmatprep.mubr.f32.mxu0 0.0
    %3661 = vmatmul.mubr.f32.gmra.mrb[0].mxu0 %v3446
    %v3662 = vpop.f32.mrb[0].mxu0
    %v3663 = vadd.f32 %v3578, %v3662
    %v3664 = vpop.f32.mrb[0].mxu0
    %3665 = vdwg.mxu0
    %v3666 = vld [vmem:[%s7] sm:$0xff]
    %v3667 = vld [vmem:[%s7 + $0x8] sm:$0xff]
    %v3668 = vld [vmem:[%s7 + $0x10] sm:$0xff]
    %v3669 = vld [vmem:[%s7 + $0x18] sm:$0xff]
    %v3670 = vld [vmem:[%s7 + $0x20] sm:$0xff]
    %v3671 = vld [vmem:[%s7 + $0x28] sm:$0xff]
    %v3672 = vld [vmem:[%s7 + $0x30] sm:$0xff]
    %v3673 = vld [vmem:[%s7 + $0x38] sm:$0xff]
    %v3674 = vld [vmem:[%s7 + $0x40] sm:$0xff]
    %v3675 = vld [vmem:[%s7 + $0x48] sm:$0xff]
    %v3676 = vld [vmem:[%s7 + $0x50] sm:$0xff]
    %v3677 = vld [vmem:[%s7 + $0x58] sm:$0xff]
    %v3678 = vld [vmem:[%s7 + $0x60] sm:$0xff]
    %v3679 = vld [vmem:[%s7 + $0x68] sm:$0xff]
    %v3680 = vld [vmem:[%s7 + $0x70] sm:$0xff]
    %v3681 = vld [vmem:[%s7 + $0x78] sm:$0xff]
    %3682 = vmatprep.subr.mxu0 0.0
    %3683 = vmatpush1.msra.mxu0 %v3666
    %3684 = vmatprep.subr.mxu0 0.0
    %3685 = vmatpush1.msra.mxu0 %v3667
    %3686 = vmatprep.subr.mxu0 0.0
    %3687 = vmatpush1.msra.mxu0 %v3668
    %3688 = vmatprep.subr.mxu0 0.0
    %3689 = vmatpush1.msra.mxu0 %v3669
    %3690 = vmatprep.subr.mxu0 0.0
    %3691 = vmatpush1.msra.mxu0 %v3670
    %3692 = vmatprep.subr.mxu0 0.0
    %3693 = vmatpush1.msra.mxu0 %v3671
    %3694 = vmatprep.subr.mxu0 0.0
    %3695 = vmatpush1.msra.mxu0 %v3672
    %3696 = vmatprep.subr.mxu0 0.0
    %3697 = vmatpush1.msra.mxu0 %v3673
    %3698 = vmatprep.subr.mxu0 0.0
    %3699 = vmatpush1.msra.mxu0 %v3674
    %3700 = vmatprep.subr.mxu0 0.0
    %3701 = vmatpush1.msra.mxu0 %v3675
    %3702 = vmatprep.subr.mxu0 0.0
    %3703 = vmatpush1.msra.mxu0 %v3676
    %3704 = vmatprep.subr.mxu0 0.0
    %3705 = vmatpush1.msra.mxu0 %v3677
    %3706 = vmatprep.subr.mxu0 0.0
    %3707 = vmatpush1.msra.mxu0 %v3678
    %3708 = vmatprep.subr.mxu0 0.0
    %3709 = vmatpush1.msra.mxu0 %v3679
    %3710 = vmatprep.subr.mxu0 0.0
    %3711 = vmatpush1.msra.mxu0 %v3680
    %3712 = vmatprep.subr.mxu0 0.0
    %3713 = vmatpush1.msra.mxu0 %v3681
    %3714 = vmatprep.subr.mxu0 0.0
    %3715 = vmatpush1.msra.mxu0 0.0
    %3716 = vmatprep.subr.mxu0 0.0
    %3717 = vmatpush1.msra.mxu0 0.0
    %3718 = vmatprep.subr.mxu0 0.0
    %3719 = vmatpush1.msra.mxu0 0.0
    %3720 = vmatprep.subr.mxu0 0.0
    %3721 = vmatpush1.msra.mxu0 0.0
    %3722 = vmatprep.subr.mxu0 0.0
    %3723 = vmatpush1.msra.mxu0 0.0
    %3724 = vmatprep.subr.mxu0 0.0
    %3725 = vmatpush1.msra.mxu0 0.0
    %3726 = vmatprep.subr.mxu0 0.0
    %3727 = vmatpush1.msra.mxu0 0.0
    %3728 = vmatprep.subr.mxu0 0.0
    %3729 = vmatpush1.msra.mxu0 0.0
    %3730 = vmatprep.subr.mxu0 0.0
    %3731 = vmatpush1.msra.mxu0 0.0
    %3732 = vmatprep.subr.mxu0 0.0
    %3733 = vmatpush1.msra.mxu0 0.0
    %3734 = vmatprep.subr.mxu0 0.0
    %3735 = vmatpush1.msra.mxu0 0.0
    %3736 = vmatprep.subr.mxu0 0.0
    %3737 = vmatpush1.msra.mxu0 0.0
    %3738 = vmatprep.subr.mxu0 0.0
    %3739 = vmatpush1.msra.mxu0 0.0
    %3740 = vmatprep.subr.mxu0 0.0
    %3741 = vmatpush1.msra.mxu0 0.0
    %3742 = vmatprep.subr.mxu0 0.0
    %3743 = vmatpush1.msra.mxu0 0.0
    %3744 = vmatprep.subr.mxu0 0.0
    %3745 = vmatpush1.msra.mxu0 0.0
    %3746 = vmatprep.mubr.f32.mxu0 0.0
    %3747 = vmatmul.mubr.f32.gmra.mrb[0].mxu0 %v3648
    %v3748 = vpop.f32.mrb[0].mxu0
    %v3749 = vadd.f32 0.0, %v3748
    %v3750 = vpop.f32.mrb[0].mxu0
    %3751 = vmatprep.mubr.f32.mxu0 0.0
    %3752 = vmatmul.mubr.f32.gmra.mrb[0].mxu0 %v3653
    %v3753 = vpop.f32.mrb[0].mxu0
    %v3754 = vadd.f32 0.0, %v3753
    %v3755 = vpop.f32.mrb[0].mxu0
    %3756 = vmatprep.mubr.f32.mxu0 0.0
    %3757 = vmatmul.mubr.f32.gmra.mrb[0].mxu0 %v3658
    %v3758 = vpop.f32.mrb[0].mxu0
    %v3759 = vadd.f32 0.0, %v3758
    %v3760 = vpop.f32.mrb[0].mxu0
    %3761 = vmatprep.mubr.f32.mxu0 0.0
    %3762 = vmatmul.mubr.f32.gmra.mrb[0].mxu0 %v3663
    %v3763 = vpop.f32.mrb[0].mxu0
    %v3764 = vadd.f32 0.0, %v3763
    %v3765 = vpop.f32.mrb[0].mxu0
    %3766 = vdwg.mxu0
    %v3767 = vlaneseq
    %v3768 = vand.u32 %v3767, 127
    %vm3769 = vcmp.eq.s32.totalorder %v3768, 0
    %v3770 = vsel %vm3769, 1, 0
    %v3771 = vcvt.s32.f32 %v3770
    %s3772 = sld [smem:[#allocation2]]
    %v3773 = vstv %s3772
    %v3774 = vmul.f32 %v3773, %v3771
    %s3775 = sld [smem:[#allocation2 + $0x1]]
    %v3776 = vstv %s3775
    %v3777 = vmul.f32 %v3776, %v3749
    %v3778 = vadd.f32 %v3774, %v3777
    %v3780 = vsel %vm79, %v3749, 0
    %v3783 = vsel %vm79, %v3754, 0
    %3785 = vmatprep.subr.mxu0 0.0
    %3786 = vmatpush1.msra.mxu0 %v3749
    %3787 = vmatprep.subr.mxu0 0.0
    %3788 = vmatpush1.msra.mxu0 %v3754
    %3789 = vmatprep.subr.mxu0 0.0
    %3790 = vmatpush1.msra.mxu0 0.0
    %3791 = vmatprep.subr.mxu0 0.0
    %3792 = vmatpush1.msra.mxu0 0.0
    %3793 = vmatprep.subr.mxu0 0.0
    %3794 = vmatpush1.msra.mxu0 0.0
    %3795 = vmatprep.subr.mxu0 0.0
    %3796 = vmatpush1.msra.mxu0 0.0
    %3797 = vmatprep.subr.mxu0 0.0
    %3798 = vmatpush1.msra.mxu0 0.0
    %3799 = vmatprep.subr.mxu0 0.0
    %3800 = vmatpush1.msra.mxu0 0.0
    %3801 = vmatprep.subr.mxu0 0.0
    %3802 = vmatpush1.msra.mxu0 0.0
    %3803 = vmatprep.subr.mxu0 0.0
    %3804 = vmatpush1.msra.mxu0 0.0
    %3805 = vmatprep.subr.mxu0 0.0
    %3806 = vmatpush1.msra.mxu0 0.0
    %3807 = vmatprep.subr.mxu0 0.0
    %3808 = vmatpush1.msra.mxu0 0.0
    %3809 = vmatprep.subr.mxu0 0.0
    %3810 = vmatpush1.msra.mxu0 0.0
    %3811 = vmatprep.subr.mxu0 0.0
    %3812 = vmatpush1.msra.mxu0 0.0
    %3813 = vmatprep.subr.mxu0 0.0
    %3814 = vmatpush1.msra.mxu0 0.0
    %3815 = vmatprep.subr.mxu0 0.0
    %3816 = vmatpush1.msra.mxu0 0.0
    %3817 = vmatprep.subr.mxu0 0.0
    %3818 = vmatpush1.msra.mxu0 0.0
    %3819 = vmatprep.subr.mxu0 0.0
    %3820 = vmatpush1.msra.mxu0 0.0
    %3821 = vmatprep.subr.mxu0 0.0
    %3822 = vmatpush1.msra.mxu0 0.0
    %3823 = vmatprep.subr.mxu0 0.0
    %3824 = vmatpush1.msra.mxu0 0.0
    %3825 = vmatprep.subr.mxu0 0.0
    %3826 = vmatpush1.msra.mxu0 0.0
    %3827 = vmatprep.subr.mxu0 0.0
    %3828 = vmatpush1.msra.mxu0 0.0
    %3829 = vmatprep.subr.mxu0 0.0
    %3830 = vmatpush1.msra.mxu0 0.0
    %3831 = vmatprep.subr.mxu0 0.0
    %3832 = vmatpush1.msra.mxu0 0.0
    %3833 = vmatprep.subr.mxu0 0.0
    %3834 = vmatpush1.msra.mxu0 0.0
    %3835 = vmatprep.subr.mxu0 0.0
    %3836 = vmatpush1.msra.mxu0 0.0
    %3837 = vmatprep.subr.mxu0 0.0
    %3838 = vmatpush1.msra.mxu0 0.0
    %3839 = vmatprep.subr.mxu0 0.0
    %3840 = vmatpush1.msra.mxu0 0.0
    %3841 = vmatprep.subr.mxu0 0.0
    %3842 = vmatpush1.msra.mxu0 0.0
    %3843 = vmatprep.subr.mxu0 0.0
    %3844 = vmatpush1.msra.mxu0 0.0
    %3845 = vmatprep.subr.mxu0 0.0
    %3846 = vmatpush1.msra.mxu0 0.0
    %3847 = vmatprep.subr.mxu0 0.0
    %3848 = vmatpush1.msra.mxu0 0.0
    %3849 = vmatprep.mubr.f32.mxu0 0.0
    %3850 = vmatmul.mubr.f32.gmra.mrb[0].mxu0 %v3780
    %v3851 = vpop.f32.mrb[0].mxu0
    %v3852 = vadd.f32 0.0, %v3851
    %v3853 = vpop.f32.mrb[0].mxu0
    %3854 = vmatprep.mubr.f32.mxu0 0.0
    %3855 = vmatmul.mubr.f32.gmra.mrb[0].mxu0 %v3783
    %v3856 = vpop.f32.mrb[0].mxu0
    %v3857 = vadd.f32 0.0, %v3856
    %v3858 = vpop.f32.mrb[0].mxu0
    %3859 = vdwg.mxu0
    %s3860 = sld [smem:[#allocation2 + $0x2]]
    %v3861 = vstv %s3860
    %v3862 = vmul.f32 %v3861, %v3852
    %v3863 = vadd.f32 %v3778, %v3862
    %v3865 = vsel %vm79, %v3852, 0
    %v3868 = vsel %vm79, %v3857, 0
    %3870 = vmatprep.subr.mxu0 0.0
    %3871 = vmatpush1.msra.mxu0 %v3749
    %3872 = vmatprep.subr.mxu0 0.0
    %3873 = vmatpush1.msra.mxu0 %v3754
    %3874 = vmatprep.subr.mxu0 0.0
    %3875 = vmatpush1.msra.mxu0 0.0
    %3876 = vmatprep.subr.mxu0 0.0
    %3877 = vmatpush1.msra.mxu0 0.0
    %3878 = vmatprep.subr.mxu0 0.0
    %3879 = vmatpush1.msra.mxu0 0.0
    %3880 = vmatprep.subr.mxu0 0.0
    %3881 = vmatpush1.msra.mxu0 0.0
    %3882 = vmatprep.subr.mxu0 0.0
    %3883 = vmatpush1.msra.mxu0 0.0
    %3884 = vmatprep.subr.mxu0 0.0
    %3885 = vmatpush1.msra.mxu0 0.0
    %3886 = vmatprep.subr.mxu0 0.0
    %3887 = vmatpush1.msra.mxu0 0.0
    %3888 = vmatprep.subr.mxu0 0.0
    %3889 = vmatpush1.msra.mxu0 0.0
    %3890 = vmatprep.subr.mxu0 0.0
    %3891 = vmatpush1.msra.mxu0 0.0
    %3892 = vmatprep.subr.mxu0 0.0
    %3893 = vmatpush1.msra.mxu0 0.0
    %3894 = vmatprep.subr.mxu0 0.0
    %3895 = vmatpush1.msra.mxu0 0.0
    %3896 = vmatprep.subr.mxu0 0.0
    %3897 = vmatpush1.msra.mxu0 0.0
    %3898 = vmatprep.subr.mxu0 0.0
    %3899 = vmatpush1.msra.mxu0 0.0
    %3900 = vmatprep.subr.mxu0 0.0
    %3901 = vmatpush1.msra.mxu0 0.0
    %3902 = vmatprep.subr.mxu0 0.0
    %3903 = vmatpush1.msra.mxu0 0.0
    %3904 = vmatprep.subr.mxu0 0.0
    %3905 = vmatpush1.msra.mxu0 0.0
    %3906 = vmatprep.subr.mxu0 0.0
    %3907 = vmatpush1.msra.mxu0 0.0
    %3908 = vmatprep.subr.mxu0 0.0
    %3909 = vmatpush1.msra.mxu0 0.0
    %3910 = vmatprep.subr.mxu0 0.0
    %3911 = vmatpush1.msra.mxu0 0.0
    %3912 = vmatprep.subr.mxu0 0.0
    %3913 = vmatpush1.msra.mxu0 0.0
    %3914 = vmatprep.subr.mxu0 0.0
    %3915 = vmatpush1.msra.mxu0 0.0
    %3916 = vmatprep.subr.mxu0 0.0
    %3917 = vmatpush1.msra.mxu0 0.0
    %3918 = vmatprep.subr.mxu0 0.0
    %3919 = vmatpush1.msra.mxu0 0.0
    %3920 = vmatprep.subr.mxu0 0.0
    %3921 = vmatpush1.msra.mxu0 0.0
    %3922 = vmatprep.subr.mxu0 0.0
    %3923 = vmatpush1.msra.mxu0 0.0
    %3924 = vmatprep.subr.mxu0 0.0
    %3925 = vmatpush1.msra.mxu0 0.0
    %3926 = vmatprep.subr.mxu0 0.0
    %3927 = vmatpush1.msra.mxu0 0.0
    %3928 = vmatprep.subr.mxu0 0.0
    %3929 = vmatpush1.msra.mxu0 0.0
    %3930 = vmatprep.subr.mxu0 0.0
    %3931 = vmatpush1.msra.mxu0 0.0
    %3932 = vmatprep.subr.mxu0 0.0
    %3933 = vmatpush1.msra.mxu0 0.0
    %3934 = vmatprep.mubr.f32.mxu0 0.0
    %3935 = vmatmul.mubr.f32.gmra.mrb[0].mxu0 %v3865
    %v3936 = vpop.f32.mrb[0].mxu0
    %v3937 = vadd.f32 0.0, %v3936
    %v3938 = vpop.f32.mrb[0].mxu0
    %3939 = vmatprep.mubr.f32.mxu0 0.0
    %3940 = vmatmul.mubr.f32.gmra.mrb[0].mxu0 %v3868
    %v3941 = vpop.f32.mrb[0].mxu0
    %v3942 = vpop.f32.mrb[0].mxu0
    %3943 = vdwg.mxu0
    %s3944 = sld [smem:[#allocation2 + $0x3]]
    %v3945 = vstv %s3944
    %v3946 = vmul.f32 %v3945, %v3937
    %v3947 = vadd.f32 %v3863, %v3946
    %v3948 = vmul.f32 %v3947, %v3947
    %vm3949 = vcmask 122880
    %v3950 = vsel %vm3949, %v3948, 0.0
    %3951 = vadd.xlane.f32.xlu0 %v3950
    %v3952 = vpop.xlane.xlu0 %3951
    %v3953 = vrot.slane %v3952, 4
    %v3954 = vadd.f32 %v3952, %v3953
    %v3955 = vrot.slane %v3954, 2
    %v3956 = vadd.f32 %v3954, %v3955
    %v3957 = vrot.slane %v3956, 1
    %v3958 = vadd.f32 %v3956, %v3957
    %s3959 = vtos %v3958
    %v3960 = vstv %s3959
    %v3961 = vrsqrt.pop %v3960
    %v3962 = vmul.f32 %v3960, %v3961
    %vm3963 = vcmp.eq.f32.partialorder %v3960, inf
    %v3964 = vsel %vm3963, %v3960, %v3962
    %vm3965 = vcmp.eq.f32.partialorder %v3960, 0.0
    %v3966 = vand.u32 %v3960, 2147483648
    %v3967 = vsel %vm3965, %v3966, %v3964
    %v3968 = vmax.f32 %v3967, 1e-12
    %v3969 = vrcp.pop %v3968
    %v3970 = vmul.f32 1.0, %v3969
    %v3971 = vmul.f32 %v3947, %v3970
    %v3972 = vmul.f32 %v3776, %v3759
    %v3973 = vadd.f32 %v3774, %v3972
    %v3975 = vsel %vm79, %v3759, 0
    %v3978 = vsel %vm79, %v3764, 0
    %3980 = vmatprep.subr.mxu0 0.0
    %3981 = vmatpush1.msra.mxu0 %v3759
    %3982 = vmatprep.subr.mxu0 0.0
    %3983 = vmatpush1.msra.mxu0 %v3764
    %3984 = vmatprep.subr.mxu0 0.0
    %3985 = vmatpush1.msra.mxu0 0.0
    %3986 = vmatprep.subr.mxu0 0.0
    %3987 = vmatpush1.msra.mxu0 0.0
    %3988 = vmatprep.subr.mxu0 0.0
    %3989 = vmatpush1.msra.mxu0 0.0
    %3990 = vmatprep.subr.mxu0 0.0
    %3991 = vmatpush1.msra.mxu0 0.0
    %3992 = vmatprep.subr.mxu0 0.0
    %3993 = vmatpush1.msra.mxu0 0.0
    %3994 = vmatprep.subr.mxu0 0.0
    %3995 = vmatpush1.msra.mxu0 0.0
    %3996 = vmatprep.subr.mxu0 0.0
    %3997 = vmatpush1.msra.mxu0 0.0
    %3998 = vmatprep.subr.mxu0 0.0
    %3999 = vmatpush1.msra.mxu0 0.0
    %4000 = vmatprep.subr.mxu0 0.0
    %4001 = vmatpush1.msra.mxu0 0.0
    %4002 = vmatprep.subr.mxu0 0.0
    %4003 = vmatpush1.msra.mxu0 0.0
    %4004 = vmatprep.subr.mxu0 0.0
    %4005 = vmatpush1.msra.mxu0 0.0
    %4006 = vmatprep.subr.mxu0 0.0
    %4007 = vmatpush1.msra.mxu0 0.0
    %4008 = vmatprep.subr.mxu0 0.0
    %4009 = vmatpush1.msra.mxu0 0.0
    %4010 = vmatprep.subr.mxu0 0.0
    %4011 = vmatpush1.msra.mxu0 0.0
    %4012 = vmatprep.subr.mxu0 0.0
    %4013 = vmatpush1.msra.mxu0 0.0
    %4014 = vmatprep.subr.mxu0 0.0
    %4015 = vmatpush1.msra.mxu0 0.0
    %4016 = vmatprep.subr.mxu0 0.0
    %4017 = vmatpush1.msra.mxu0 0.0
    %4018 = vmatprep.subr.mxu0 0.0
    %4019 = vmatpush1.msra.mxu0 0.0
    %4020 = vmatprep.subr.mxu0 0.0
    %4021 = vmatpush1.msra.mxu0 0.0
    %4022 = vmatprep.subr.mxu0 0.0
    %4023 = vmatpush1.msra.mxu0 0.0
    %4024 = vmatprep.subr.mxu0 0.0
    %4025 = vmatpush1.msra.mxu0 0.0
    %4026 = vmatprep.subr.mxu0 0.0
    %4027 = vmatpush1.msra.mxu0 0.0
    %4028 = vmatprep.subr.mxu0 0.0
    %4029 = vmatpush1.msra.mxu0 0.0
    %4030 = vmatprep.subr.mxu0 0.0
    %4031 = vmatpush1.msra.mxu0 0.0
    %4032 = vmatprep.subr.mxu0 0.0
    %4033 = vmatpush1.msra.mxu0 0.0
    %4034 = vmatprep.subr.mxu0 0.0
    %4035 = vmatpush1.msra.mxu0 0.0
    %4036 = vmatprep.subr.mxu0 0.0
    %4037 = vmatpush1.msra.mxu0 0.0
    %4038 = vmatprep.subr.mxu0 0.0
    %4039 = vmatpush1.msra.mxu0 0.0
    %4040 = vmatprep.subr.mxu0 0.0
    %4041 = vmatpush1.msra.mxu0 0.0
    %4042 = vmatprep.subr.mxu0 0.0
    %4043 = vmatpush1.msra.mxu0 0.0
    %4044 = vmatprep.mubr.f32.mxu0 0.0
    %4045 = vmatmul.mubr.f32.gmra.mrb[0].mxu0 %v3975
    %v4046 = vpop.f32.mrb[0].mxu0
    %v4047 = vadd.f32 0.0, %v4046
    %v4048 = vpop.f32.mrb[0].mxu0
    %4049 = vmatprep.mubr.f32.mxu0 0.0
    %4050 = vmatmul.mubr.f32.gmra.mrb[0].mxu0 %v3978
    %v4051 = vpop.f32.mrb[0].mxu0
    %v4052 = vadd.f32 0.0, %v4051
    %v4053 = vpop.f32.mrb[0].mxu0
    %4054 = vdwg.mxu0
    %v4055 = vmul.f32 %v3861, %v4047
    %v4056 = vadd.f32 %v3973, %v4055
    %v4058 = vsel %vm79, %v4047, 0
    %v4061 = vsel %vm79, %v4052, 0
    %4063 = vmatprep.subr.mxu0 0.0
    %4064 = vmatpush1.msra.mxu0 %v3759
    %4065 = vmatprep.subr.mxu0 0.0
    %4066 = vmatpush1.msra.mxu0 %v3764
    %4067 = vmatprep.subr.mxu0 0.0
    %4068 = vmatpush1.msra.mxu0 0.0
    %4069 = vmatprep.subr.mxu0 0.0
    %4070 = vmatpush1.msra.mxu0 0.0
    %4071 = vmatprep.subr.mxu0 0.0
    %4072 = vmatpush1.msra.mxu0 0.0
    %4073 = vmatprep.subr.mxu0 0.0
    %4074 = vmatpush1.msra.mxu0 0.0
    %4075 = vmatprep.subr.mxu0 0.0
    %4076 = vmatpush1.msra.mxu0 0.0
    %4077 = vmatprep.subr.mxu0 0.0
    %4078 = vmatpush1.msra.mxu0 0.0
    %4079 = vmatprep.subr.mxu0 0.0
    %4080 = vmatpush1.msra.mxu0 0.0
    %4081 = vmatprep.subr.mxu0 0.0
    %4082 = vmatpush1.msra.mxu0 0.0
    %4083 = vmatprep.subr.mxu0 0.0
    %4084 = vmatpush1.msra.mxu0 0.0
    %4085 = vmatprep.subr.mxu0 0.0
    %4086 = vmatpush1.msra.mxu0 0.0
    %4087 = vmatprep.subr.mxu0 0.0
    %4088 = vmatpush1.msra.mxu0 0.0
    %4089 = vmatprep.subr.mxu0 0.0
    %4090 = vmatpush1.msra.mxu0 0.0
    %4091 = vmatprep.subr.mxu0 0.0
    %4092 = vmatpush1.msra.mxu0 0.0
    %4093 = vmatprep.subr.mxu0 0.0
    %4094 = vmatpush1.msra.mxu0 0.0
    %4095 = vmatprep.subr.mxu0 0.0
    %4096 = vmatpush1.msra.mxu0 0.0
    %4097 = vmatprep.subr.mxu0 0.0
    %4098 = vmatpush1.msra.mxu0 0.0
    %4099 = vmatprep.subr.mxu0 0.0
    %4100 = vmatpush1.msra.mxu0 0.0
    %4101 = vmatprep.subr.mxu0 0.0
    %4102 = vmatpush1.msra.mxu0 0.0
    %4103 = vmatprep.subr.mxu0 0.0
    %4104 = vmatpush1.msra.mxu0 0.0
    %4105 = vmatprep.subr.mxu0 0.0
    %4106 = vmatpush1.msra.mxu0 0.0
    %4107 = vmatprep.subr.mxu0 0.0
    %4108 = vmatpush1.msra.mxu0 0.0
    %4109 = vmatprep.subr.mxu0 0.0
    %4110 = vmatpush1.msra.mxu0 0.0
    %4111 = vmatprep.subr.mxu0 0.0
    %4112 = vmatpush1.msra.mxu0 0.0
    %4113 = vmatprep.subr.mxu0 0.0
    %4114 = vmatpush1.msra.mxu0 0.0
    %4115 = vmatprep.subr.mxu0 0.0
    %4116 = vmatpush1.msra.mxu0 0.0
    %4117 = vmatprep.subr.mxu0 0.0
    %4118 = vmatpush1.msra.mxu0 0.0
    %4119 = vmatprep.subr.mxu0 0.0
    %4120 = vmatpush1.msra.mxu0 0.0
    %4121 = vmatprep.subr.mxu0 0.0
    %4122 = vmatpush1.msra.mxu0 0.0
    %4123 = vmatprep.subr.mxu0 0.0
    %4124 = vmatpush1.msra.mxu0 0.0
    %4125 = vmatprep.subr.mxu0 0.0
    %4126 = vmatpush1.msra.mxu0 0.0
    %4127 = vmatprep.mubr.f32.mxu0 0.0
    %4128 = vmatmul.mubr.f32.gmra.mrb[0].mxu0 %v4058
    %v4129 = vpop.f32.mrb[0].mxu0
    %v4130 = vadd.f32 0.0, %v4129
    %v4131 = vpop.f32.mrb[0].mxu0
    %4132 = vmatprep.mubr.f32.mxu0 0.0
    %4133 = vmatmul.mubr.f32.gmra.mrb[0].mxu0 %v4061
    %v4134 = vpop.f32.mrb[0].mxu0
    %v4135 = vpop.f32.mrb[0].mxu0
    %4136 = vdwg.mxu0
    %v4137 = vmul.f32 %v3945, %v4130
    %v4138 = vadd.f32 %v4056, %v4137
    %v4139 = vmul.f32 %v4138, %v4138
    %v4140 = vsel %vm3949, %v4139, 0.0
    %4141 = vadd.xlane.f32.xlu0 %v4140
    %v4142 = vpop.xlane.xlu0 %4141
    %v4143 = vrot.slane %v4142, 4
    %v4144 = vadd.f32 %v4142, %v4143
    %v4145 = vrot.slane %v4144, 2
    %v4146 = vadd.f32 %v4144, %v4145
    %v4147 = vrot.slane %v4146, 1
    %v4148 = vadd.f32 %v4146, %v4147
    %s4149 = vtos %v4148
    %v4150 = vstv %s4149
    %v4151 = vrsqrt.pop %v4150
    %v4152 = vmul.f32 %v4150, %v4151
    %vm4153 = vcmp.eq.f32.partialorder %v4150, inf
    %v4154 = vsel %vm4153, %v4150, %v4152
    %vm4155 = vcmp.eq.f32.partialorder %v4150, 0.0
    %v4156 = vand.u32 %v4150, 2147483648
    %v4157 = vsel %vm4155, %v4156, %v4154
    %v4158 = vmax.f32 %v4157, 1e-12
    %v4159 = vrcp.pop %v4158
    %v4160 = vmul.f32 1.0, %v4159
    %v4161 = vmul.f32 %v4138, %v4160
    %v4163 = vrot.slane %v4161, 7
    %vm4165 = vcmask 1040384
    %v4166 = vsel %vm4165, %v3971, %v4163
    %v4167 = vsel %vm4165, %v3967, %v4157
    %v4168 = vld [vmem:[%s8] sm:$0xff]
    %v4169 = vld [vmem:[%s8 + $0x8] sm:$0xff]
    %v4170 = vld [vmem:[%s8 + $0x10] sm:$0xff]
    %v4171 = vld [vmem:[%s8 + $0x18] sm:$0xff]
    %v4173 = vsel %vm79, %v4166, 0
    %4175 = vmatprep.subr.mxu0 %v4169
    %4176 = vmatpush1.msra.mxu0 %v4168
    %4177 = vmatprep.subr.mxu0 %v4171
    %4178 = vmatpush1.msra.mxu0 %v4170
    %4179 = vmatprep.subr.mxu0 0.0
    %4180 = vmatpush1.msra.mxu0 0.0
    %4181 = vmatprep.subr.mxu0 0.0
    %4182 = vmatpush1.msra.mxu0 0.0
    %4183 = vmatprep.subr.mxu0 0.0
    %4184 = vmatpush1.msra.mxu0 0.0
    %4185 = vmatprep.subr.mxu0 0.0
    %4186 = vmatpush1.msra.mxu0 0.0
    %4187 = vmatprep.subr.mxu0 0.0
    %4188 = vmatpush1.msra.mxu0 0.0
    %4189 = vmatprep.subr.mxu0 0.0
    %4190 = vmatpush1.msra.mxu0 0.0
    %4191 = vmatprep.subr.mxu0 0.0
    %4192 = vmatpush1.msra.mxu0 0.0
    %4193 = vmatprep.subr.mxu0 0.0
    %4194 = vmatpush1.msra.mxu0 0.0
    %4195 = vmatprep.subr.mxu0 0.0
    %4196 = vmatpush1.msra.mxu0 0.0
    %4197 = vmatprep.subr.mxu0 0.0
    %4198 = vmatpush1.msra.mxu0 0.0
    %4199 = vmatprep.subr.mxu0 0.0
    %4200 = vmatpush1.msra.mxu0 0.0
    %4201 = vmatprep.subr.mxu0 0.0
    %4202 = vmatpush1.msra.mxu0 0.0
    %4203 = vmatprep.subr.mxu0 0.0
    %4204 = vmatpush1.msra.mxu0 0.0
    %4205 = vmatprep.subr.mxu0 0.0
    %4206 = vmatpush1.msra.mxu0 0.0
    %4207 = vmatprep.subr.mxu0 0.0
    %4208 = vmatpush1.msra.mxu0 0.0
    %4209 = vmatprep.subr.mxu0 0.0
    %4210 = vmatpush1.msra.mxu0 0.0
    %4211 = vmatprep.subr.mxu0 0.0
    %4212 = vmatpush1.msra.mxu0 0.0
    %4213 = vmatprep.subr.mxu0 0.0
    %4214 = vmatpush1.msra.mxu0 0.0
    %4215 = vmatprep.subr.mxu0 0.0
    %4216 = vmatpush1.msra.mxu0 0.0
    %4217 = vmatprep.subr.mxu0 0.0
    %4218 = vmatpush1.msra.mxu0 0.0
    %4219 = vmatprep.subr.mxu0 0.0
    %4220 = vmatpush1.msra.mxu0 0.0
    %4221 = vmatprep.subr.mxu0 0.0
    %4222 = vmatpush1.msra.mxu0 0.0
    %4223 = vmatprep.subr.mxu0 0.0
    %4224 = vmatpush1.msra.mxu0 0.0
    %4225 = vmatprep.subr.mxu0 0.0
    %4226 = vmatpush1.msra.mxu0 0.0
    %4227 = vmatprep.subr.mxu0 0.0
    %4228 = vmatpush1.msra.mxu0 0.0
    %4229 = vmatprep.subr.mxu0 0.0
    %4230 = vmatpush1.msra.mxu0 0.0
    %4231 = vmatprep.subr.mxu0 0.0
    %4232 = vmatpush1.msra.mxu0 0.0
    %4233 = vmatprep.subr.mxu0 0.0
    %4234 = vmatpush1.msra.mxu0 0.0
    %4235 = vmatprep.subr.mxu0 0.0
    %4236 = vmatpush1.msra.mxu0 0.0
    %4237 = vmatprep.subr.mxu0 0.0
    %4238 = vmatpush1.msra.mxu0 0.0
    %4239 = vmatprep.mubr.f32.mxu0 0.0
    %4240 = vmatmul.mubr.f32.gmra.mrb[0].mxu0 %v4173
    %v4241 = vpop.f32.mrb[0].mxu0
    %v4242 = vadd.f32 0.0, %v4241
    %v4243 = vpop.f32.mrb[0].mxu0
    %v4244 = vadd.f32 0.0, %v4243
    %4245 = vdwg.mxu0
    %v4246 = vld [vmem:[%s9] sm:$0xff]
    %v4247 = vld [vmem:[%s9 + $0x8] sm:$0xff]
    %v4248 = vld [vmem:[%s9 + $0x10] sm:$0xff]
    %v4249 = vld [vmem:[%s9 + $0x18] sm:$0xff]
    %4250 = vmatprep.subr.mxu0 %v4247
    %4251 = vmatpush1.msra.mxu0 %v4246
    %4252 = vmatprep.subr.mxu0 %v4249
    %4253 = vmatpush1.msra.mxu0 %v4248
    %4254 = vmatprep.subr.mxu0 0.0
    %4255 = vmatpush1.msra.mxu0 0.0
    %4256 = vmatprep.subr.mxu0 0.0
    %4257 = vmatpush1.msra.mxu0 0.0
    %4258 = vmatprep.subr.mxu0 0.0
    %4259 = vmatpush1.msra.mxu0 0.0
    %4260 = vmatprep.subr.mxu0 0.0
    %4261 = vmatpush1.msra.mxu0 0.0
    %4262 = vmatprep.subr.mxu0 0.0
    %4263 = vmatpush1.msra.mxu0 0.0
    %4264 = vmatprep.subr.mxu0 0.0
    %4265 = vmatpush1.msra.mxu0 0.0
    %4266 = vmatprep.subr.mxu0 0.0
    %4267 = vmatpush1.msra.mxu0 0.0
    %4268 = vmatprep.subr.mxu0 0.0
    %4269 = vmatpush1.msra.mxu0 0.0
    %4270 = vmatprep.subr.mxu0 0.0
    %4271 = vmatpush1.msra.mxu0 0.0
    %4272 = vmatprep.subr.mxu0 0.0
    %4273 = vmatpush1.msra.mxu0 0.0
    %4274 = vmatprep.subr.mxu0 0.0
    %4275 = vmatpush1.msra.mxu0 0.0
    %4276 = vmatprep.subr.mxu0 0.0
    %4277 = vmatpush1.msra.mxu0 0.0
    %4278 = vmatprep.subr.mxu0 0.0
    %4279 = vmatpush1.msra.mxu0 0.0
    %4280 = vmatprep.subr.mxu0 0.0
    %4281 = vmatpush1.msra.mxu0 0.0
    %4282 = vmatprep.subr.mxu0 0.0
    %4283 = vmatpush1.msra.mxu0 0.0
    %4284 = vmatprep.subr.mxu0 0.0
    %4285 = vmatpush1.msra.mxu0 0.0
    %4286 = vmatprep.subr.mxu0 0.0
    %4287 = vmatpush1.msra.mxu0 0.0
    %4288 = vmatprep.subr.mxu0 0.0
    %4289 = vmatpush1.msra.mxu0 0.0
    %4290 = vmatprep.subr.mxu0 0.0
    %4291 = vmatpush1.msra.mxu0 0.0
    %4292 = vmatprep.subr.mxu0 0.0
    %4293 = vmatpush1.msra.mxu0 0.0
    %4294 = vmatprep.subr.mxu0 0.0
    %4295 = vmatpush1.msra.mxu0 0.0
    %4296 = vmatprep.subr.mxu0 0.0
    %4297 = vmatpush1.msra.mxu0 0.0
    %4298 = vmatprep.subr.mxu0 0.0
    %4299 = vmatpush1.msra.mxu0 0.0
    %4300 = vmatprep.subr.mxu0 0.0
    %4301 = vmatpush1.msra.mxu0 0.0
    %4302 = vmatprep.subr.mxu0 0.0
    %4303 = vmatpush1.msra.mxu0 0.0
    %4304 = vmatprep.subr.mxu0 0.0
    %4305 = vmatpush1.msra.mxu0 0.0
    %4306 = vmatprep.subr.mxu0 0.0
    %4307 = vmatpush1.msra.mxu0 0.0
    %4308 = vmatprep.subr.mxu0 0.0
    %4309 = vmatpush1.msra.mxu0 0.0
    %4310 = vmatprep.subr.mxu0 0.0
    %4311 = vmatpush1.msra.mxu0 0.0
    %4312 = vmatprep.subr.mxu0 0.0
    %4313 = vmatpush1.msra.mxu0 0.0
    %4314 = vmatprep.mubr.f32.mxu0 0.0
    %4315 = vmatmul.mubr.f32.gmra.mrb[0].mxu0 %v4173
    %v4316 = vpop.f32.mrb[0].mxu0
    %v4317 = vadd.f32 0.0, %v4316
    %v4318 = vpop.f32.mrb[0].mxu0
    %v4319 = vadd.f32 0.0, %v4318
    %4320 = vdwg.mxu0
    %v4321 = vmul.f32 %v4242, %v4317
    %v4322 = vmul.f32 %v4244, %v4319
    %v4323 = vld [vmem:[%s10] sm:$0xff]
    %v4324 = vld [vmem:[%s10 + $0x8] sm:$0xff]
    %v4325 = vld [vmem:[%s10 + $0x10] sm:$0xff]
    %v4326 = vld [vmem:[%s10 + $0x18] sm:$0xff]
    %v4327 = vld [vmem:[%s10 + $0x20] sm:$0xff]
    %v4328 = vld [vmem:[%s10 + $0x28] sm:$0xff]
    %v4329 = vld [vmem:[%s10 + $0x30] sm:$0xff]
    %v4330 = vld [vmem:[%s10 + $0x38] sm:$0xff]
    %v4331 = vld [vmem:[%s10 + $0x40] sm:$0xff]
    %v4332 = vld [vmem:[%s10 + $0x48] sm:$0xff]
    %v4333 = vld [vmem:[%s10 + $0x50] sm:$0xff]
    %v4334 = vld [vmem:[%s10 + $0x58] sm:$0xff]
    %v4335 = vld [vmem:[%s10 + $0x60] sm:$0xff]
    %v4336 = vld [vmem:[%s10 + $0x68] sm:$0xff]
    %v4337 = vld [vmem:[%s10 + $0x70] sm:$0xff]
    %v4338 = vld [vmem:[%s10 + $0x78] sm:$0xff]
    %v4339 = vld [vmem:[%s10 + $0x80] sm:$0xff]
    %v4340 = vld [vmem:[%s10 + $0x88] sm:$0xff]
    %v4341 = vld [vmem:[%s10 + $0x90] sm:$0xff]
    %v4342 = vld [vmem:[%s10 + $0x98] sm:$0xff]
    %v4343 = vld [vmem:[%s10 + $0xa0] sm:$0xff]
    %v4344 = vld [vmem:[%s10 + $0xa8] sm:$0xff]
    %v4345 = vld [vmem:[%s10 + $0xb0] sm:$0xff]
    %v4346 = vld [vmem:[%s10 + $0xb8] sm:$0xff]
    %v4347 = vld [vmem:[%s10 + $0xc0] sm:$0xff]
    %v4348 = vld [vmem:[%s10 + $0xc8] sm:$0xff]
    %v4349 = vld [vmem:[%s10 + $0xd0] sm:$0xff]
    %v4350 = vld [vmem:[%s10 + $0xd8] sm:$0xff]
    %v4351 = vld [vmem:[%s10 + $0xe0] sm:$0xff]
    %v4352 = vld [vmem:[%s10 + $0xe8] sm:$0xff]
    %v4353 = vld [vmem:[%s10 + $0xf0] sm:$0xff]
    %v4354 = vld [vmem:[%s10 + $0xf8] sm:$0xff]
    %4355 = vmatprep.subr.mxu0 0.0
    %4356 = vmatpush1.msra.mxu0 %v4323
    %4357 = vmatprep.subr.mxu0 0.0
    %4358 = vmatpush1.msra.mxu0 %v4324
    %4359 = vmatprep.subr.mxu0 0.0
    %4360 = vmatpush1.msra.mxu0 %v4325
    %4361 = vmatprep.subr.mxu0 0.0
    %4362 = vmatpush1.msra.mxu0 %v4326
    %4363 = vmatprep.subr.mxu0 0.0
    %4364 = vmatpush1.msra.mxu0 %v4327
    %4365 = vmatprep.subr.mxu0 0.0
    %4366 = vmatpush1.msra.mxu0 %v4328
    %4367 = vmatprep.subr.mxu0 0.0
    %4368 = vmatpush1.msra.mxu0 %v4329
    %4369 = vmatprep.subr.mxu0 0.0
    %4370 = vmatpush1.msra.mxu0 %v4330
    %4371 = vmatprep.subr.mxu0 0.0
    %4372 = vmatpush1.msra.mxu0 %v4331
    %4373 = vmatprep.subr.mxu0 0.0
    %4374 = vmatpush1.msra.mxu0 %v4332
    %4375 = vmatprep.subr.mxu0 0.0
    %4376 = vmatpush1.msra.mxu0 %v4333
    %4377 = vmatprep.subr.mxu0 0.0
    %4378 = vmatpush1.msra.mxu0 %v4334
    %4379 = vmatprep.subr.mxu0 0.0
    %4380 = vmatpush1.msra.mxu0 %v4335
    %4381 = vmatprep.subr.mxu0 0.0
    %4382 = vmatpush1.msra.mxu0 %v4336
    %4383 = vmatprep.subr.mxu0 0.0
    %4384 = vmatpush1.msra.mxu0 %v4337
    %4385 = vmatprep.subr.mxu0 0.0
    %4386 = vmatpush1.msra.mxu0 %v4338
    %4387 = vmatprep.subr.mxu0 0.0
    %4388 = vmatpush1.msra.mxu0 %v4339
    %4389 = vmatprep.subr.mxu0 0.0
    %4390 = vmatpush1.msra.mxu0 %v4340
    %4391 = vmatprep.subr.mxu0 0.0
    %4392 = vmatpush1.msra.mxu0 %v4341
    %4393 = vmatprep.subr.mxu0 0.0
    %4394 = vmatpush1.msra.mxu0 %v4342
    %4395 = vmatprep.subr.mxu0 0.0
    %4396 = vmatpush1.msra.mxu0 %v4343
    %4397 = vmatprep.subr.mxu0 0.0
    %4398 = vmatpush1.msra.mxu0 %v4344
    %4399 = vmatprep.subr.mxu0 0.0
    %4400 = vmatpush1.msra.mxu0 %v4345
    %4401 = vmatprep.subr.mxu0 0.0
    %4402 = vmatpush1.msra.mxu0 %v4346
    %4403 = vmatprep.subr.mxu0 0.0
    %4404 = vmatpush1.msra.mxu0 %v4347
    %4405 = vmatprep.subr.mxu0 0.0
    %4406 = vmatpush1.msra.mxu0 %v4348
    %4407 = vmatprep.subr.mxu0 0.0
    %4408 = vmatpush1.msra.mxu0 %v4349
    %4409 = vmatprep.subr.mxu0 0.0
    %4410 = vmatpush1.msra.mxu0 %v4350
    %4411 = vmatprep.subr.mxu0 0.0
    %4412 = vmatpush1.msra.mxu0 %v4351
    %4413 = vmatprep.subr.mxu0 0.0
    %4414 = vmatpush1.msra.mxu0 %v4352
    %4415 = vmatprep.subr.mxu0 0.0
    %4416 = vmatpush1.msra.mxu0 %v4353
    %4417 = vmatprep.subr.mxu0 0.0
    %4418 = vmatpush1.msra.mxu0 %v4354
    %4419 = vmatprep.mubr.f32.mxu0 %v4322
    %4420 = vmatmul.mubr.f32.gmra.mrb[0].mxu0 %v4321
    %v4421 = vpop.f32.mrb[0].mxu0
    %v4422 = vadd.f32 0.0, %v4421
    %v4423 = vpop.f32.mrb[0].mxu0
    %4424 = vdwg.mxu0
    %v4425 = vld [vmem:[%s11] sm:$0xff]
    %v4426 = vld [vmem:[%s11 + $0x8] sm:$0x1]
    %v4427 = vld [vmem:[%s12] sm:$0x1]
    %v4429 = vlaneseq
    %v4430 = vshrl.u32 %v4429, 7
    %v4431 = vsub.s32 0, %v4430
    %v4432 = vrot.slane %v4427, %v4431
    %vm4434 = vcmask 72704
    %v4436 = vsel %vm4434, %v4422, 0
    %v4439 = vsel %vm4165, %v4426, 0
    %4441 = vmatprep.subr.mxu0 0.0
    %4442 = vmatpush1.msra.mxu0 %v4425
    %4443 = vmatprep.subr.mxu0 0.0
    %4444 = vmatpush1.msra.mxu0 %v4439
    %4445 = vmatprep.subr.mxu0 0.0
    %4446 = vmatpush1.msra.mxu0 0.0
    %4447 = vmatprep.subr.mxu0 0.0
    %4448 = vmatpush1.msra.mxu0 0.0
    %4449 = vmatprep.subr.mxu0 0.0
    %4450 = vmatpush1.msra.mxu0 0.0
    %4451 = vmatprep.subr.mxu0 0.0
    %4452 = vmatpush1.msra.mxu0 0.0
    %4453 = vmatprep.subr.mxu0 0.0
    %4454 = vmatpush1.msra.mxu0 0.0
    %4455 = vmatprep.subr.mxu0 0.0
    %4456 = vmatpush1.msra.mxu0 0.0
    %4457 = vmatprep.subr.mxu0 0.0
    %4458 = vmatpush1.msra.mxu0 0.0
    %4459 = vmatprep.subr.mxu0 0.0
    %4460 = vmatpush1.msra.mxu0 0.0
    %4461 = vmatprep.subr.mxu0 0.0
    %4462 = vmatpush1.msra.mxu0 0.0
    %4463 = vmatprep.subr.mxu0 0.0
    %4464 = vmatpush1.msra.mxu0 0.0
    %4465 = vmatprep.subr.mxu0 0.0
    %4466 = vmatpush1.msra.mxu0 0.0
    %4467 = vmatprep.subr.mxu0 0.0
    %4468 = vmatpush1.msra.mxu0 0.0
    %4469 = vmatprep.subr.mxu0 0.0
    %4470 = vmatpush1.msra.mxu0 0.0
    %4471 = vmatprep.subr.mxu0 0.0
    %4472 = vmatpush1.msra.mxu0 0.0
    %4473 = vmatprep.subr.mxu0 0.0
    %4474 = vmatpush1.msra.mxu0 0.0
    %4475 = vmatprep.subr.mxu0 0.0
    %4476 = vmatpush1.msra.mxu0 0.0
    %4477 = vmatprep.subr.mxu0 0.0
    %4478 = vmatpush1.msra.mxu0 0.0
    %4479 = vmatprep.subr.mxu0 0.0
    %4480 = vmatpush1.msra.mxu0 0.0
    %4481 = vmatprep.subr.mxu0 0.0
    %4482 = vmatpush1.msra.mxu0 0.0
    %4483 = vmatprep.subr.mxu0 0.0
    %4484 = vmatpush1.msra.mxu0 0.0
    %4485 = vmatprep.subr.mxu0 0.0
    %4486 = vmatpush1.msra.mxu0 0.0
    %4487 = vmatprep.subr.mxu0 0.0
    %4488 = vmatpush1.msra.mxu0 0.0
    %4489 = vmatprep.subr.mxu0 0.0
    %4490 = vmatpush1.msra.mxu0 0.0
    %4491 = vmatprep.subr.mxu0 0.0
    %4492 = vmatpush1.msra.mxu0 0.0
    %4493 = vmatprep.subr.mxu0 0.0
    %4494 = vmatpush1.msra.mxu0 0.0
    %4495 = vmatprep.subr.mxu0 0.0
    %4496 = vmatpush1.msra.mxu0 0.0
    %4497 = vmatprep.subr.mxu0 0.0
    %4498 = vmatpush1.msra.mxu0 0.0
    %4499 = vmatprep.subr.mxu0 0.0
    %4500 = vmatpush1.msra.mxu0 0.0
    %4501 = vmatprep.subr.mxu0 0.0
    %4502 = vmatpush1.msra.mxu0 0.0
    %4503 = vmatprep.subr.mxu0 0.0
    %4504 = vmatpush1.msra.mxu0 0.0
    %4505 = vmatprep.mubr.f32.mxu0 0.0
    %4506 = vmatmul.mubr.f32.gmra.mrb[0].mxu0 %v4436
    %v4507 = vpop.f32.mrb[0].mxu0
    %v4508 = vadd.f32 %v4432, %v4507
    %v4509 = vpop.f32.mrb[0].mxu0
    %4510 = vdwg.mxu0
    %v4511 = vmax.f32 %v4508, 0.0
    %v4512 = vld [vmem:[%s13] sm:$0xff]
    %v4513 = vld [vmem:[%s13 + $0x8] sm:$0xff]
    %v4514 = vld [vmem:[%s14] sm:$0x1]
    %v4516 = vlaneseq
    %v4517 = vshrl.u32 %v4516, 7
    %v4518 = vsub.s32 0, %v4517
    %v4519 = vrot.slane %v4514, %v4518
    %v4522 = vsel %vm79, %v4511, 0
    %4524 = vmatprep.subr.mxu0 0.0
    %4525 = vmatpush1.msra.mxu0 %v4512
    %4526 = vmatprep.subr.mxu0 0.0
    %4527 = vmatpush1.msra.mxu0 %v4513
    %4528 = vmatprep.subr.mxu0 0.0
    %4529 = vmatpush1.msra.mxu0 0.0
    %4530 = vmatprep.subr.mxu0 0.0
    %4531 = vmatpush1.msra.mxu0 0.0
    %4532 = vmatprep.subr.mxu0 0.0
    %4533 = vmatpush1.msra.mxu0 0.0
    %4534 = vmatprep.subr.mxu0 0.0
    %4535 = vmatpush1.msra.mxu0 0.0
    %4536 = vmatprep.subr.mxu0 0.0
    %4537 = vmatpush1.msra.mxu0 0.0
    %4538 = vmatprep.subr.mxu0 0.0
    %4539 = vmatpush1.msra.mxu0 0.0
    %4540 = vmatprep.subr.mxu0 0.0
    %4541 = vmatpush1.msra.mxu0 0.0
    %4542 = vmatprep.subr.mxu0 0.0
    %4543 = vmatpush1.msra.mxu0 0.0
    %4544 = vmatprep.subr.mxu0 0.0
    %4545 = vmatpush1.msra.mxu0 0.0
    %4546 = vmatprep.subr.mxu0 0.0
    %4547 = vmatpush1.msra.mxu0 0.0
    %4548 = vmatprep.subr.mxu0 0.0
    %4549 = vmatpush1.msra.mxu0 0.0
    %4550 = vmatprep.subr.mxu0 0.0
    %4551 = vmatpush1.msra.mxu0 0.0
    %4552 = vmatprep.subr.mxu0 0.0
    %4553 = vmatpush1.msra.mxu0 0.0
    %4554 = vmatprep.subr.mxu0 0.0
    %4555 = vmatpush1.msra.mxu0 0.0
    %4556 = vmatprep.subr.mxu0 0.0
    %4557 = vmatpush1.msra.mxu0 0.0
    %4558 = vmatprep.subr.mxu0 0.0
    %4559 = vmatpush1.msra.mxu0 0.0
    %4560 = vmatprep.subr.mxu0 0.0
    %4561 = vmatpush1.msra.mxu0 0.0
    %4562 = vmatprep.subr.mxu0 0.0
    %4563 = vmatpush1.msra.mxu0 0.0
    %4564 = vmatprep.subr.mxu0 0.0
    %4565 = vmatpush1.msra.mxu0 0.0
    %4566 = vmatprep.subr.mxu0 0.0
    %4567 = vmatpush1.msra.mxu0 0.0
    %4568 = vmatprep.subr.mxu0 0.0
    %4569 = vmatpush1.msra.mxu0 0.0
    %4570 = vmatprep.subr.mxu0 0.0
    %4571 = vmatpush1.msra.mxu0 0.0
    %4572 = vmatprep.subr.mxu0 0.0
    %4573 = vmatpush1.msra.mxu0 0.0
    %4574 = vmatprep.subr.mxu0 0.0
    %4575 = vmatpush1.msra.mxu0 0.0
    %4576 = vmatprep.subr.mxu0 0.0
    %4577 = vmatpush1.msra.mxu0 0.0
    %4578 = vmatprep.subr.mxu0 0.0
    %4579 = vmatpush1.msra.mxu0 0.0
    %4580 = vmatprep.subr.mxu0 0.0
    %4581 = vmatpush1.msra.mxu0 0.0
    %4582 = vmatprep.subr.mxu0 0.0
    %4583 = vmatpush1.msra.mxu0 0.0
    %4584 = vmatprep.subr.mxu0 0.0
    %4585 = vmatpush1.msra.mxu0 0.0
    %4586 = vmatprep.subr.mxu0 0.0
    %4587 = vmatpush1.msra.mxu0 0.0
    %4588 = vmatprep.mubr.f32.mxu0 0.0
    %4589 = vmatmul.mubr.f32.gmra.mrb[0].mxu0 %v4522
    %v4590 = vpop.f32.mrb[0].mxu0
    %v4591 = vadd.f32 %v4519, %v4590
    %v4592 = vpop.f32.mrb[0].mxu0
    %4593 = vdwg.mxu0
    %vm4594 = vcmp.eq.s32.totalorder %v3768, 32
    %v4595 = vsel %vm4594, 1, 0
    %v4596 = vcvt.s32.f32 %v4595
    %4598 = vset.pattern.permute.xlu0 0
    %4599 = vperm.xlu0 %4598, %v4167
    %v4600 = vpop.permute.xlu0 %4599
    %v4602 = vmul.f32 %v4600, %v4596
    %v4603 = vadd.f32 %v4591, %v4602
    %4604 = vst [vmem:[%s15] sm:$0x3] %v4603
    // Predicated region
    $region66: #{quixer_forward.1} parent=1 // pred_check
      _
    $region67: #{quixer_forward.1} parent=1 // pred_check_branch
      %4606 = sbr.rel (0) target = $region69
    $region68: #{quixer_forward.1} parent=1 // pred_region
      _
    $region69: #{quixer_forward.1} parent=1 // pred_fallthru
      _
    // Predicated region
    $region70: #{quixer_forward.1} parent=1 // pred_check
      _
    $region71: #{quixer_forward.1} parent=1 // pred_check_branch
      %4608 = sbr.rel (0) target = $region73
    $region72: #{quixer_forward.1} parent=1 // pred_region
      _
    $region73: #{quixer_forward.1} parent=1 // pred_fallthru
      _
    %4609 = vsyncpa [#allocation3], 1

</llo_original>
